<compile_context>
chip_gen: v7x
topology: tpu7x:2x2x1
jax: 0.10.0
libtpu: 0.0.40
codegen_flags: <defaults>
</compile_context>

<pallas_src>
import functools

import jax
import jax.numpy as jnp
from jax import lax
from jax.experimental import pallas as pl
from jax.experimental.pallas import tpu as pltpu


_OUT_LANES = 128
_LOSS_NAMES = ("mse", "triplet", "id", "variance", "invariance", "covariance")
_NEG = float(jnp.finfo(jnp.float32).min) / 2.0


# ----------------------------------------------------------------------------
# Fused kernel
# ----------------------------------------------------------------------------
def _fused_criterion_kernel(rp_ref, rt_ref,
                            ae_ref, pe_ref, ne_ref,
                            al_ref, plg_ref, nl_ref,
                            aid_ref, pidc_ref, nidc_ref, pidr_ref, nidr_ref,
                            w1_ref, b1_ref, w2_ref, b2_ref,
                            o_ref,
                            mse_sc, m_sc, l_sc, zt_sc,
                            *, rec_dim, rec_tiled, scale, focal_gamma, vicreg_gamma):
    f32 = jnp.float32
    c = pl.program_id(0)
    nc = pl.num_programs(0)
    B = ae_ref.shape[0]
    tc = al_ref.shape[1]

    # ----------------------- init (first class tile) -----------------------
    @pl.when(c == 0)
    def _init():
        mse_sc[...] = jnp.zeros(mse_sc.shape, f32)
        m_sc[...] = jnp.full(m_sc.shape, -jnp.inf, f32)
        l_sc[...] = jnp.zeros(l_sc.shape, f32)
        zt_sc[...] = jnp.zeros(zt_sc.shape, f32)
        o_ref[...] = jnp.zeros((1, _OUT_LANES), f32)

    # --------------- recommender MSE (accumulated over tiles) ---------------
    if rec_tiled:
        d = rp_ref[...].astype(f32) - rt_ref[...].astype(f32)
        mse_sc[...] += jnp.sum(d * d, keepdims=True)
    else:
        @pl.when(c == 0)
        def _mse_once():
            d = rp_ref[...].astype(f32) - rt_ref[...].astype(f32)
            mse_sc[...] = jnp.sum(d * d, keepdims=True)

    # -------- focal-CE partials: online log-sum-exp over class tiles --------
    c_off = c * tc
    groups = ((al_ref, aid_ref), (plg_ref, pidc_ref), (nl_ref, nidc_ref))
    for g, (z_ref, id_ref) in enumerate(groups):
        z = z_ref[...].astype(f32)                                  # (B, tc)
        col = lax.broadcasted_iota(jnp.int32, z.shape, 1) + c_off
        onehot = col == id_ref[...]                                 # (B, tc)
        zt_sc[g] += jnp.sum(jnp.where(onehot, z, 0.0), axis=1, keepdims=True)
        m_old = m_sc[g]
        m_new = jnp.maximum(m_old, jnp.max(z, axis=1, keepdims=True))
        l_sc[g] = (l_sc[g] * jnp.exp(m_old - m_new)
                   + jnp.sum(jnp.exp(z - m_new), axis=1, keepdims=True))
        m_sc[g] = m_new

    # --------------- last tile: finish all six losses & store ---------------
    @pl.when(c == nc - 1)
    def _finalize():
        mse = mse_sc[...] / float(B * rec_dim)                      # (1, 1)

        # focal id loss (exact LSE form; gamma 0/1/2 specialised, no jnp.power)
        id_sum = jnp.zeros((1, 1), f32)
        for g in range(3):
            lse = m_sc[g] + jnp.log(l_sc[g])
            zt = zt_sc[g]
            ce = lse - zt
            if focal_gamma == 0.0:
                w = ce
            else:
                p_t = jnp.exp(zt - lse)
                om = jnp.maximum(1.0 - p_t, 1e-12)
                if focal_gamma == 1.0:
                    fw = om
                elif focal_gamma == 2.0:
                    fw = om * om
                else:
                    fw = jnp.power(om, focal_gamma)
                w = fw * ce
            id_sum = id_sum + jnp.sum(w, keepdims=True)
        id_loss = id_sum / float(3 * B)

        # triplet (InfoNCE over the [positive ; negative] gallery)
        a = ae_ref[...].astype(f32)
        p = pe_ref[...].astype(f32)
        n = ne_ref[...].astype(f32)

        def l2n(x):
            return x * lax.rsqrt(jnp.maximum(jnp.sum(x * x, axis=1, keepdims=True), 1e-16))

        dn = (((1,), (1,)), ((), ()))            # contract last dims, no batch
        a_n, p_n, n_n = l2n(a), l2n(p), l2n(n)
        sims_p = lax.dot_general(a_n, p_n, dn, preferred_element_type=f32) * scale  # (B, B)
        sims_n = lax.dot_general(a_n, n_n, dn, preferred_element_type=f32) * scale  # (B, B)

        row = lax.broadcasted_iota(jnp.int32, (B, B), 0)
        colb = lax.broadcasted_iota(jnp.int32, (B, B), 1)
        diag = row == colb
        aid = aid_ref[...]                                          # (B, 1)
        mp = jnp.where((aid != pidr_ref[...]) | diag, sims_p, _NEG)
        mn = jnp.where(aid != nidr_ref[...], sims_n, _NEG)
        m_row = jnp.maximum(jnp.max(mp, axis=1, keepdims=True),
                            jnp.max(mn, axis=1, keepdims=True))
        sum_e = (jnp.sum(jnp.exp(mp - m_row), axis=1, keepdims=True)
                 + jnp.sum(jnp.exp(mn - m_row), axis=1, keepdims=True))
        lse_t = m_row + jnp.log(sum_e)
        s_tgt = jnp.sum(jnp.where(diag, sims_p, 0.0), axis=1, keepdims=True)
        triplet = jnp.sum(lse_t - s_tgt, keepdims=True) / float(B)

        # expander MLP + VICReg terms
        w1 = w1_ref[...].astype(f32)
        b1 = b1_ref[...].astype(f32)
        w2 = w2_ref[...].astype(f32)
        b2 = b2_ref[...].astype(f32)

        def expand(e):
            h = jnp.maximum(jnp.dot(e, w1, preferred_element_type=f32) + b1, 0.0)
            return jnp.dot(h, w2, preferred_element_type=f32) + b2

        xa, xp, xn = expand(a), expand(p), expand(n)                # (B, E) each
        E = xa.shape[1]
        denom = float(max(B - 1, 1))

        def group_stats(xg):
            xc = xg - jnp.mean(xg, axis=0, keepdims=True)
            var = jnp.sum(xc * xc, axis=0, keepdims=True) / denom   # (1, E)
            std = jnp.sqrt(var + 1e-4)
            v = jnp.sum(jnp.maximum(vicreg_gamma - std, 0.0), keepdims=True) / float(E)
            # ||Xc^T Xc||_F == ||Xc Xc^T||_F: use the (B, B) Gram (B << E) and
            # subtract the diagonal (== var) analytically instead of masking (E, E).
            gram = lax.dot_general(xc, xc, dn, preferred_element_type=f32)   # (B, B)
            cov_fro = jnp.sum(gram * gram, keepdims=True) / (denom * denom)
            cl = (cov_fro - jnp.sum(var * var, keepdims=True)) / float(E)
            return v, cl

        va, ca = group_stats(xa)
        vp, cp = group_stats(xp)
        vn, cn = group_stats(xn)
        variance = (va + vp + vn) / 3.0
        covariance = (ca + cp + cn) / 3.0
        dd = xa - xp
        invariance = jnp.sum(dd * dd, keepdims=True) / float(B * E)

        # one lane-dense unmasked store
        lane = lax.broadcasted_iota(jnp.int32, (1, _OUT_LANES), 1)
        out = jnp.zeros((1, _OUT_LANES), f32)
        for idx, v in enumerate((mse, triplet, id_loss, variance, invariance, covariance)):
            out = jnp.where(lane == idx, v, out)
        o_ref[...] = out


# ----------------------------------------------------------------------------
# Pallas wrapper — one launch for the whole criterion
# ----------------------------------------------------------------------------
def _choose_class_tile(C):
    for t in (1024, 512, 256, 128):
        if C % t == 0:
            return t
    return C        # fallback: class dim resident in one step


def fused_losses(rec_pred, rec_tgt,
                 a_emb, p_emb, n_emb,
                 a_logits, p_logits, n_logits,
                 a_ids, p_ids, n_ids,
                 w1, b1, w2, b2,
                 *, scale, focal_gamma, vicreg_gamma, class_tile=None):
    B, _ = a_emb.shape
    C = a_logits.shape[1]
    R = rec_pred.shape[1]
    tc = class_tile if class_tile is not None else _choose_class_tile(C)
    assert C % tc == 0 and (tc == C or tc % 128 == 0), (C, tc)
    num_tiles = C // tc
    rec_tiled = (R == C)       # recommender tensors share the class-tile axis when shapes match

    i32 = jnp.int32
    aid_c = a_ids.reshape(B, 1).astype(i32)
    pid_c = p_ids.reshape(B, 1).astype(i32)
    nid_c = n_ids.reshape(B, 1).astype(i32)
    pid_r = p_ids.reshape(1, B).astype(i32)
    nid_r = n_ids.reshape(1, B).astype(i32)

    def resident(shape):
        nd = len(shape)
        return pl.BlockSpec(shape, lambda c, _n=nd: (0,) * _n)

    def class_tiled(rows):
        return pl.BlockSpec((rows, tc), lambda c: (0, c))

    rec_spec = class_tiled(B) if rec_tiled else resident(rec_pred.shape)

    kernel = functools.partial(
        _fused_criterion_kernel,
        rec_dim=R, rec_tiled=rec_tiled, scale=float(scale),
        focal_gamma=float(focal_gamma), vicreg_gamma=float(vicreg_gamma))

    out = pl.pallas_call(
        kernel,
        grid=(num_tiles,),
        out_shape=jax.ShapeDtypeStruct((1, _OUT_LANES), jnp.float32),
        in_specs=[
            rec_spec, rec_spec,
            resident(a_emb.shape), resident(p_emb.shape), resident(n_emb.shape),
            class_tiled(B), class_tiled(B), class_tiled(B),
            resident((B, 1)), resident((B, 1)), resident((B, 1)),
            resident((1, B)), resident((1, B)),
            resident(w1.shape), resident(b1.shape),
            resident(w2.shape), resident(b2.shape),
        ],
        out_specs=pl.BlockSpec((1, _OUT_LANES), lambda c: (0, 0)),
        scratch_shapes=[
            pltpu.VMEM((1, 1), jnp.float32),      # MSE partial sum
            pltpu.VMEM((3, B, 1), jnp.float32),   # running row max (per group)
            pltpu.VMEM((3, B, 1), jnp.float32),   # running sum-exp (per group)
            pltpu.VMEM((3, B, 1), jnp.float32),   # target logit (per group)
        ],
        compiler_params=pltpu.CompilerParams(
            dimension_semantics=("arbitrary",),   # class axis is a reduction
            vmem_limit_bytes=48 * 1024 * 1024),
    )(rec_pred, rec_tgt,
      a_emb, p_emb, n_emb,
      a_logits, p_logits, n_logits,
      aid_c, pid_c, nid_c, pid_r, nid_r,
      w1, b1, w2, b2)
    return out[0]      # (128,) lane-dense vector; lanes 0..5 hold the losses


# ----------------------------------------------------------------------------
# CollaborativeCriterion (JAX/Pallas port of the Criterion subclass)
# ----------------------------------------------------------------------------
class CollaborativeCriterionPallas:
    def __init__(self, expander_params, loss_weights=None, triplet_margin=1.0,
                 triplet_scale=20.0, focal_gamma=0.0, vicreg_gamma=1.0,
                 class_tile=None):
        self.expander_params = tuple(expander_params)     # (W1, b1, W2, b2)
        self.loss_weights = dict(loss_weights or {})
        self.triplet_margin = triplet_margin               # TODO(synk): unused by the reference forward (InfoNCE-style triplet)
        self.triplet_scale = float(triplet_scale)
        self.focal_gamma = float(focal_gamma)
        self.vicreg_gamma = float(vicreg_gamma)
        self.class_tile = class_tile
        self._forward = jax.jit(self._forward_impl)

    def _forward_impl(self, rec_predictions, rec_targets, anchor, positive, negative):
        a_emb, a_logits, a_ids = anchor
        p_emb, p_logits, p_ids = positive
        n_emb, n_logits, n_ids = negative
        w1, b1, w2, b2 = self.expander_params

        vec = fused_losses(
            rec_predictions, rec_targets,
            a_emb, p_emb, n_emb,
            a_logits, p_logits, n_logits,
            a_ids, p_ids, n_ids,
            w1, b1, w2, b2,
            scale=self.triplet_scale, focal_gamma=self.focal_gamma,
            vicreg_gamma=self.vicreg_gamma, class_tile=self.class_tile)

        losses = {name: vec[i] for i, name in enumerate(_LOSS_NAMES)}
        nan_flag = jnp.any(jnp.isnan(vec[: len(_LOSS_NAMES)]))   # one on-device flag
        losses["overall"] = sum(losses[k] * self.loss_weights.get(k, 1) for k in _LOSS_NAMES)
        return losses, nan_flag

    def __call__(self, rec_predictions, rec_targets, anchor, positive, negative):
        losses, nan_flag = self._forward(rec_predictions, rec_targets,
                                         anchor, positive, negative)
        # One host sync per call (mirrors Criterion._check_for_nans).
        if bool(nan_flag):
            nan_losses = [k for k in _LOSS_NAMES if bool(jnp.isnan(losses[k]))]
            raise ValueError(f"NaNs detected in losses: {nan_losses}")
        return losses


# ----------------------------------------------------------------------------
# main
# ----------------------------------------------------------------------------
if __name__ == "__main__":
    key = jax.random.PRNGKey(0)
    B, D, C, E = 8, 32, 256, 128   # batch, embed dim, num id classes, expander dim

    ks = jax.random.split(key, 12)
    rec_pred = jax.random.normal(ks[0], (B, C), jnp.float32)
    rec_tgt = jax.random.normal(ks[1], (B, C), jnp.float32)

    a_emb = jax.random.normal(ks[2], (B, D), jnp.float32)
    p_emb = a_emb + 0.1 * jax.random.normal(ks[3], (B, D), jnp.float32)
    n_emb = jax.random.normal(ks[4], (B, D), jnp.float32)

    a_logits = jax.random.normal(ks[5], (B, C), jnp.float32)
    p_logits = jax.random.normal(ks[6], (B, C), jnp.float32)
    n_logits = jax.random.normal(ks[7], (B, C), jnp.float32)

    a_ids = jax.random.randint(ks[8], (B,), 0, C, jnp.int32)
    p_ids = a_ids
    n_ids = jax.random.randint(ks[9], (B,), 0, C, jnp.int32)

    # Deterministic synthetic expander weights (MultiLayerPerceptron: D -> E -> E).
    w1 = 0.1 * jax.random.normal(ks[10], (D, E), jnp.float32)
    b1 = jnp.zeros((1, E), jnp.float32)
    w2 = 0.1 * jax.random.normal(ks[11], (E, E), jnp.float32)
    b2 = jnp.zeros((1, E), jnp.float32)

    # class_tile=128 -> grid=(2,), exercising the pipelined online-LSE path.
    criterion = CollaborativeCriterionPallas(expander_params=(w1, b1, w2, b2),
                                             class_tile=128)
    losses = criterion(rec_pred, rec_tgt,
                       (a_emb, a_logits, a_ids),
                       (p_emb, p_logits, p_ids),
                       (n_emb, n_logits, n_ids))
    jax.block_until_ready(losses["overall"])
    print("KERNEL_OK")
</pallas_src>

<mosaic_0001>
module attributes {stable_mosaic.version = 11 : i64} {
  func.func @_fused_criterion_kernel(%arg0: i32, %arg1: memref<8x128xf32, #tpu.memory_space<vmem>>, %arg2: memref<8x128xf32, #tpu.memory_space<vmem>>, %arg3: memref<8x32xf32, #tpu.memory_space<vmem>>, %arg4: memref<8x32xf32, #tpu.memory_space<vmem>>, %arg5: memref<8x32xf32, #tpu.memory_space<vmem>>, %arg6: memref<8x128xf32, #tpu.memory_space<vmem>>, %arg7: memref<8x128xf32, #tpu.memory_space<vmem>>, %arg8: memref<8x128xf32, #tpu.memory_space<vmem>>, %arg9: memref<8x1xi32, #tpu.memory_space<vmem>>, %arg10: memref<8x1xi32, #tpu.memory_space<vmem>>, %arg11: memref<8x1xi32, #tpu.memory_space<vmem>>, %arg12: memref<1x8xi32, #tpu.memory_space<vmem>>, %arg13: memref<1x8xi32, #tpu.memory_space<vmem>>, %arg14: memref<32x128xf32, #tpu.memory_space<vmem>>, %arg15: memref<1x128xf32, #tpu.memory_space<vmem>>, %arg16: memref<128x128xf32, #tpu.memory_space<vmem>>, %arg17: memref<1x128xf32, #tpu.memory_space<vmem>>, %arg18: memref<1x128xf32, #tpu.memory_space<vmem>>, %arg19: memref<1x1xf32, #tpu.memory_space<vmem>>, %arg20: memref<3x8x1xf32, #tpu.memory_space<vmem>>, %arg21: memref<3x8x1xf32, #tpu.memory_space<vmem>>, %arg22: memref<3x8x1xf32, #tpu.memory_space<vmem>>) attributes {dimension_semantics = [#tpu.dimension_semantics<arbitrary>], iteration_bounds = array<i64: 2>, scalar_prefetch = 0 : i64, scratch_operands = 4 : i64, tpu.core_type = #tpu.core_type<tc>, window_params = [{transform_indices = @transform_0, window_bounds = array<i64: 8, 128>}, {transform_indices = @transform_1, window_bounds = array<i64: 8, 128>}, {pipeline_mode = #tpu.pipeline_mode<synchronous>, transform_indices = @transform_2, window_bounds = array<i64: 8, 32>}, {pipeline_mode = #tpu.pipeline_mode<synchronous>, transform_indices = @transform_3, window_bounds = array<i64: 8, 32>}, {pipeline_mode = #tpu.pipeline_mode<synchronous>, transform_indices = @transform_4, window_bounds = array<i64: 8, 32>}, {transform_indices = @transform_5, window_bounds = array<i64: 8, 128>}, {transform_indices = @transform_6, window_bounds = array<i64: 8, 128>}, {transform_indices = @transform_7, window_bounds = array<i64: 8, 128>}, {pipeline_mode = #tpu.pipeline_mode<synchronous>, transform_indices = @transform_8, window_bounds = array<i64: 8, 1>}, {pipeline_mode = #tpu.pipeline_mode<synchronous>, transform_indices = @transform_9, window_bounds = array<i64: 8, 1>}, {pipeline_mode = #tpu.pipeline_mode<synchronous>, transform_indices = @transform_10, window_bounds = array<i64: 8, 1>}, {pipeline_mode = #tpu.pipeline_mode<synchronous>, transform_indices = @transform_11, window_bounds = array<i64: 1, 8>}, {pipeline_mode = #tpu.pipeline_mode<synchronous>, transform_indices = @transform_12, window_bounds = array<i64: 1, 8>}, {pipeline_mode = #tpu.pipeline_mode<synchronous>, transform_indices = @transform_13, window_bounds = array<i64: 32, 128>}, {pipeline_mode = #tpu.pipeline_mode<synchronous>, transform_indices = @transform_14, window_bounds = array<i64: 1, 128>}, {pipeline_mode = #tpu.pipeline_mode<synchronous>, transform_indices = @transform_15, window_bounds = array<i64: 128, 128>}, {pipeline_mode = #tpu.pipeline_mode<synchronous>, transform_indices = @transform_16, window_bounds = array<i64: 1, 128>}, {pipeline_mode = #tpu.pipeline_mode<synchronous>, transform_indices = @transform_17, window_bounds = array<i64: 1, 128>}]} {
    %c0_i32 = arith.constant 0 : i32
    %0 = arith.cmpi eq, %arg0, %c0_i32 : i32
    %1 = arith.extui %0 : i1 to i32
    %c0_i32_0 = arith.constant 0 : i32
    %2 = arith.cmpi ne, %1, %c0_i32_0 : i32
    scf.if %2 {
      %cst_85 = arith.constant 0.000000e+00 : f32
      %136 = vector.broadcast %cst_85 : f32 to vector<1x1xf32>
      %c0_86 = arith.constant 0 : index
      %c0_87 = arith.constant 0 : index
      %137 = vector.load %arg19[%c0_86, %c0_87] : memref<1x1xf32, #tpu.memory_space<vmem>>, vector<1x1xf32>
      tpu.vector_store %arg19[%c0_86, %c0_87], %136 {strides = array<i32>} : memref<1x1xf32, #tpu.memory_space<vmem>>, vector<1x1xf32>,
      %cst_88 = arith.constant 0xFF800000 : f32
      %138 = vector.broadcast %cst_88 : f32 to vector<3x8x1xf32>
      %c0_89 = arith.constant 0 : index
      %c0_90 = arith.constant 0 : index
      %c0_91 = arith.constant 0 : index
      %139 = vector.load %arg20[%c0_89, %c0_90, %c0_91] : memref<3x8x1xf32, #tpu.memory_space<vmem>>, vector<3x8x1xf32>
      tpu.vector_store %arg20[%c0_89, %c0_90, %c0_91], %138 {strides = array<i32>} : memref<3x8x1xf32, #tpu.memory_space<vmem>>, vector<3x8x1xf32>,
      %cst_92 = arith.constant 0.000000e+00 : f32
      %140 = vector.broadcast %cst_92 : f32 to vector<3x8x1xf32>
      %c0_93 = arith.constant 0 : index
      %c0_94 = arith.constant 0 : index
      %c0_95 = arith.constant 0 : index
      %141 = vector.load %arg21[%c0_93, %c0_94, %c0_95] : memref<3x8x1xf32, #tpu.memory_space<vmem>>, vector<3x8x1xf32>
      tpu.vector_store %arg21[%c0_93, %c0_94, %c0_95], %140 {strides = array<i32>} : memref<3x8x1xf32, #tpu.memory_space<vmem>>, vector<3x8x1xf32>,
      %cst_96 = arith.constant 0.000000e+00 : f32
      %142 = vector.broadcast %cst_96 : f32 to vector<3x8x1xf32>
      %c0_97 = arith.constant 0 : index
      %c0_98 = arith.constant 0 : index
      %c0_99 = arith.constant 0 : index
      %143 = vector.load %arg22[%c0_97, %c0_98, %c0_99] : memref<3x8x1xf32, #tpu.memory_space<vmem>>, vector<3x8x1xf32>
      tpu.vector_store %arg22[%c0_97, %c0_98, %c0_99], %142 {strides = array<i32>} : memref<3x8x1xf32, #tpu.memory_space<vmem>>, vector<3x8x1xf32>,
      %cst_100 = arith.constant 0.000000e+00 : f32
      %144 = vector.broadcast %cst_100 : f32 to vector<1x128xf32>
      %c0_101 = arith.constant 0 : index
      %c0_102 = arith.constant 0 : index
      %145 = vector.load %arg18[%c0_101, %c0_102] : memref<1x128xf32, #tpu.memory_space<vmem>>, vector<1x128xf32>
      tpu.vector_store %arg18[%c0_101, %c0_102], %144 {strides = array<i32>} : memref<1x128xf32, #tpu.memory_space<vmem>>, vector<1x128xf32>,
    } else {
    }
    %c0 = arith.constant 0 : index
    %c0_1 = arith.constant 0 : index
    %3 = vector.load %arg1[%c0, %c0_1] : memref<8x128xf32, #tpu.memory_space<vmem>>, vector<8x128xf32>
    %c0_2 = arith.constant 0 : index
    %c0_3 = arith.constant 0 : index
    %4 = vector.load %arg2[%c0_2, %c0_3] : memref<8x128xf32, #tpu.memory_space<vmem>>, vector<8x128xf32>
    %5 = arith.subf %3, %4 : vector<8x128xf32>
    %c0_4 = arith.constant 0 : index
    %c0_5 = arith.constant 0 : index
    %6 = vector.load %arg19[%c0_4, %c0_5] : memref<1x1xf32, #tpu.memory_space<vmem>>, vector<1x1xf32>
    %7 = arith.mulf %5, %5 : vector<8x128xf32>
    %8 = vector.shape_cast %7 : vector<8x128xf32> to vector<1x8x128xf32>
    %cst = arith.constant dense<0.000000e+00> : vector<1xf32>
    %9 = vector.multi_reduction <add>, %8, %cst [1, 2] : vector<1x8x128xf32> to vector<1xf32>
    %10 = vector.shape_cast %9 : vector<1xf32> to vector<1x1x1xf32>
    %11 = vector.extract %10[0, 0, 0] : f32 from vector<1x1x1xf32>
    %12 = vector.broadcast %11 : f32 to vector<1x1xf32>
    %13 = arith.addf %6, %12 : vector<1x1xf32>
    %c0_6 = arith.constant 0 : index
    %c0_7 = arith.constant 0 : index
    %14 = vector.load %arg19[%c0_6, %c0_7] : memref<1x1xf32, #tpu.memory_space<vmem>>, vector<1x1xf32>
    tpu.vector_store %arg19[%c0_6, %c0_7], %13 {strides = array<i32>} : memref<1x1xf32, #tpu.memory_space<vmem>>, vector<1x1xf32>,
    %c128_i32 = arith.constant 128 : i32
    %15 = arith.muli %arg0, %c128_i32 : i32
    %c0_8 = arith.constant 0 : index
    %c0_9 = arith.constant 0 : index
    %16 = vector.load %arg6[%c0_8, %c0_9] : memref<8x128xf32, #tpu.memory_space<vmem>>, vector<8x128xf32>
    %17 = tpu.iota {dimensions = array<i32: 1>} : vector<8x128xi32>
    %18 = vector.broadcast %15 : i32 to vector<8x128xi32>
    %19 = arith.addi %17, %18 : vector<8x128xi32>
    %c0_10 = arith.constant 0 : index
    %c0_11 = arith.constant 0 : index
    %20 = vector.load %arg9[%c0_10, %c0_11] : memref<8x1xi32, #tpu.memory_space<vmem>>, vector<8x1xi32>
    %21 = vector.broadcast %20 : vector<8x1xi32> to vector<8x128xi32>
    %22 = arith.cmpi eq, %19, %21 : vector<8x128xi32>
    %c0_12 = arith.constant 0 : index
    %c0_13 = arith.constant 0 : index
    %c0_14 = arith.constant 0 : index
    %23 = vector.load %arg22[%c0_12, %c0_13, %c0_14] : memref<3x8x1xf32, #tpu.memory_space<vmem>>, vector<1x8x1xf32>
    %24 = vector.shape_cast %23 : vector<1x8x1xf32> to vector<8x1xf32>
    %cst_15 = arith.constant 0.000000e+00 : f32
    %25 = vector.broadcast %cst_15 : f32 to vector<8x128xf32>
    %26 = arith.select %22, %16, %25 : vector<8x128xi1>, vector<8x128xf32>
    %cst_16 = arith.constant dense<0.000000e+00> : vector<8xf32>
    %27 = vector.multi_reduction <add>, %26, %cst_16 [1] : vector<8x128xf32> to vector<8xf32>
    %28 = vector.shape_cast %27 : vector<8xf32> to vector<8x1xf32>
    %29 = arith.addf %24, %28 : vector<8x1xf32>
    %c0_17 = arith.constant 0 : index
    %c0_18 = arith.constant 0 : index
    %c0_19 = arith.constant 0 : index
    %30 = vector.load %arg22[%c0_17, %c0_18, %c0_19] : memref<3x8x1xf32, #tpu.memory_space<vmem>>, vector<1x8x1xf32>
    %31 = vector.shape_cast %30 : vector<1x8x1xf32> to vector<8x1xf32>
    %32 = vector.shape_cast %29 : vector<8x1xf32> to vector<1x8x1xf32>
    tpu.vector_store %arg22[%c0_17, %c0_18, %c0_19], %32 {strides = array<i32>} : memref<3x8x1xf32, #tpu.memory_space<vmem>>, vector<1x8x1xf32>,
    %c0_20 = arith.constant 0 : index
    %c0_21 = arith.constant 0 : index
    %c0_22 = arith.constant 0 : index
    %33 = vector.load %arg20[%c0_20, %c0_21, %c0_22] : memref<3x8x1xf32, #tpu.memory_space<vmem>>, vector<1x8x1xf32>
    %34 = vector.shape_cast %33 : vector<1x8x1xf32> to vector<8x1xf32>
    %cst_23 = arith.constant dense<0xFF800000> : vector<8xf32>
    %35 = vector.multi_reduction <maximumf>, %16, %cst_23 [1] : vector<8x128xf32> to vector<8xf32>
    %36 = vector.shape_cast %35 : vector<8xf32> to vector<8x1xf32>
    %37 = arith.maximumf %34, %36 : vector<8x1xf32>
    %c0_24 = arith.constant 0 : index
    %c0_25 = arith.constant 0 : index
    %c0_26 = arith.constant 0 : index
    %38 = vector.load %arg21[%c0_24, %c0_25, %c0_26] : memref<3x8x1xf32, #tpu.memory_space<vmem>>, vector<1x8x1xf32>
    %39 = vector.shape_cast %38 : vector<1x8x1xf32> to vector<8x1xf32>
    %40 = arith.subf %34, %37 : vector<8x1xf32>
    %41 = math.exp %40 : vector<8x1xf32>
    %42 = arith.mulf %39, %41 : vector<8x1xf32>
    %43 = vector.broadcast %37 : vector<8x1xf32> to vector<8x128xf32>
    %44 = arith.subf %16, %43 : vector<8x128xf32>
    %45 = math.exp %44 : vector<8x128xf32>
    %cst_27 = arith.constant dense<0.000000e+00> : vector<8xf32>
    %46 = vector.multi_reduction <add>, %45, %cst_27 [1] : vector<8x128xf32> to vector<8xf32>
    %47 = vector.shape_cast %46 : vector<8xf32> to vector<8x1xf32>
    %48 = arith.addf %42, %47 : vector<8x1xf32>
    %c0_28 = arith.constant 0 : index
    %c0_29 = arith.constant 0 : index
    %c0_30 = arith.constant 0 : index
    %49 = vector.load %arg21[%c0_28, %c0_29, %c0_30] : memref<3x8x1xf32, #tpu.memory_space<vmem>>, vector<1x8x1xf32>
    %50 = vector.shape_cast %49 : vector<1x8x1xf32> to vector<8x1xf32>
    %51 = vector.shape_cast %48 : vector<8x1xf32> to vector<1x8x1xf32>
    tpu.vector_store %arg21[%c0_28, %c0_29, %c0_30], %51 {strides = array<i32>} : memref<3x8x1xf32, #tpu.memory_space<vmem>>, vector<1x8x1xf32>,
    %c0_31 = arith.constant 0 : index
    %c0_32 = arith.constant 0 : index
    %c0_33 = arith.constant 0 : index
    %52 = vector.load %arg20[%c0_31, %c0_32, %c0_33] : memref<3x8x1xf32, #tpu.memory_space<vmem>>, vector<1x8x1xf32>
    %53 = vector.shape_cast %52 : vector<1x8x1xf32> to vector<8x1xf32>
    %54 = vector.shape_cast %37 : vector<8x1xf32> to vector<1x8x1xf32>
    tpu.vector_store %arg20[%c0_31, %c0_32, %c0_33], %54 {strides = array<i32>} : memref<3x8x1xf32, #tpu.memory_space<vmem>>, vector<1x8x1xf32>,
    %c0_34 = arith.constant 0 : index
    %c0_35 = arith.constant 0 : index
    %55 = vector.load %arg7[%c0_34, %c0_35] : memref<8x128xf32, #tpu.memory_space<vmem>>, vector<8x128xf32>
    %56 = tpu.iota {dimensions = array<i32: 1>} : vector<8x128xi32>
    %57 = vector.broadcast %15 : i32 to vector<8x128xi32>
    %58 = arith.addi %56, %57 : vector<8x128xi32>
    %c0_36 = arith.constant 0 : index
    %c0_37 = arith.constant 0 : index
    %59 = vector.load %arg10[%c0_36, %c0_37] : memref<8x1xi32, #tpu.memory_space<vmem>>, vector<8x1xi32>
    %60 = vector.broadcast %59 : vector<8x1xi32> to vector<8x128xi32>
    %61 = arith.cmpi eq, %58, %60 : vector<8x128xi32>
    %c1 = arith.constant 1 : index
    %c0_38 = arith.constant 0 : index
    %c0_39 = arith.constant 0 : index
    %62 = vector.load %arg22[%c1, %c0_38, %c0_39] : memref<3x8x1xf32, #tpu.memory_space<vmem>>, vector<1x8x1xf32>
    %63 = vector.shape_cast %62 : vector<1x8x1xf32> to vector<8x1xf32>
    %cst_40 = arith.constant 0.000000e+00 : f32
    %64 = vector.broadcast %cst_40 : f32 to vector<8x128xf32>
    %65 = arith.select %61, %55, %64 : vector<8x128xi1>, vector<8x128xf32>
    %cst_41 = arith.constant dense<0.000000e+00> : vector<8xf32>
    %66 = vector.multi_reduction <add>, %65, %cst_41 [1] : vector<8x128xf32> to vector<8xf32>
    %67 = vector.shape_cast %66 : vector<8xf32> to vector<8x1xf32>
    %68 = arith.addf %63, %67 : vector<8x1xf32>
    %c1_42 = arith.constant 1 : index
    %c0_43 = arith.constant 0 : index
    %c0_44 = arith.constant 0 : index
    %69 = vector.load %arg22[%c1_42, %c0_43, %c0_44] : memref<3x8x1xf32, #tpu.memory_space<vmem>>, vector<1x8x1xf32>
    %70 = vector.shape_cast %69 : vector<1x8x1xf32> to vector<8x1xf32>
    %71 = vector.shape_cast %68 : vector<8x1xf32> to vector<1x8x1xf32>
    tpu.vector_store %arg22[%c1_42, %c0_43, %c0_44], %71 {strides = array<i32>} : memref<3x8x1xf32, #tpu.memory_space<vmem>>, vector<1x8x1xf32>,
    %c1_45 = arith.constant 1 : index
    %c0_46 = arith.constant 0 : index
    %c0_47 = arith.constant 0 : index
    %72 = vector.load %arg20[%c1_45, %c0_46, %c0_47] : memref<3x8x1xf32, #tpu.memory_space<vmem>>, vector<1x8x1xf32>
    %73 = vector.shape_cast %72 : vector<1x8x1xf32> to vector<8x1xf32>
    %cst_48 = arith.constant dense<0xFF800000> : vector<8xf32>
    %74 = vector.multi_reduction <maximumf>, %55, %cst_48 [1] : vector<8x128xf32> to vector<8xf32>
    %75 = vector.shape_cast %74 : vector<8xf32> to vector<8x1xf32>
    %76 = arith.maximumf %73, %75 : vector<8x1xf32>
    %c1_49 = arith.constant 1 : index
    %c0_50 = arith.constant 0 : index
    %c0_51 = arith.constant 0 : index
    %77 = vector.load %arg21[%c1_49, %c0_50, %c0_51] : memref<3x8x1xf32, #tpu.memory_space<vmem>>, vector<1x8x1xf32>
    %78 = vector.shape_cast %77 : vector<1x8x1xf32> to vector<8x1xf32>
    %79 = arith.subf %73, %76 : vector<8x1xf32>
    %80 = math.exp %79 : vector<8x1xf32>
    %81 = arith.mulf %78, %80 : vector<8x1xf32>
    %82 = vector.broadcast %76 : vector<8x1xf32> to vector<8x128xf32>
    %83 = arith.subf %55, %82 : vector<8x128xf32>
    %84 = math.exp %83 : vector<8x128xf32>
    %cst_52 = arith.constant dense<0.000000e+00> : vector<8xf32>
    %85 = vector.multi_reduction <add>, %84, %cst_52 [1] : vector<8x128xf32> to vector<8xf32>
    %86 = vector.shape_cast %85 : vector<8xf32> to vector<8x1xf32>
    %87 = arith.addf %81, %86 : vector<8x1xf32>
    %c1_53 = arith.constant 1 : index
    %c0_54 = arith.constant 0 : index
    %c0_55 = arith.constant 0 : index
    %88 = vector.load %arg21[%c1_53, %c0_54, %c0_55] : memref<3x8x1xf32, #tpu.memory_space<vmem>>, vector<1x8x1xf32>
    %89 = vector.shape_cast %88 : vector<1x8x1xf32> to vector<8x1xf32>
    %90 = vector.shape_cast %87 : vector<8x1xf32> to vector<1x8x1xf32>
    tpu.vector_store %arg21[%c1_53, %c0_54, %c0_55], %90 {strides = array<i32>} : memref<3x8x1xf32, #tpu.memory_space<vmem>>, vector<1x8x1xf32>,
    %c1_56 = arith.constant 1 : index
    %c0_57 = arith.constant 0 : index
    %c0_58 = arith.constant 0 : index
    %91 = vector.load %arg20[%c1_56, %c0_57, %c0_58] : memref<3x8x1xf32, #tpu.memory_space<vmem>>, vector<1x8x1xf32>
    %92 = vector.shape_cast %91 : vector<1x8x1xf32> to vector<8x1xf32>
    %93 = vector.shape_cast %76 : vector<8x1xf32> to vector<1x8x1xf32>
    tpu.vector_store %arg20[%c1_56, %c0_57, %c0_58], %93 {strides = array<i32>} : memref<3x8x1xf32, #tpu.memory_space<vmem>>, vector<1x8x1xf32>,
    %c0_59 = arith.constant 0 : index
    %c0_60 = arith.constant 0 : index
    %94 = vector.load %arg8[%c0_59, %c0_60] : memref<8x128xf32, #tpu.memory_space<vmem>>, vector<8x128xf32>
    %95 = tpu.iota {dimensions = array<i32: 1>} : vector<8x128xi32>
    %96 = vector.broadcast %15 : i32 to vector<8x128xi32>
    %97 = arith.addi %95, %96 : vector<8x128xi32>
    %c0_61 = arith.constant 0 : index
    %c0_62 = arith.constant 0 : index
    %98 = vector.load %arg11[%c0_61, %c0_62] : memref<8x1xi32, #tpu.memory_space<vmem>>, vector<8x1xi32>
    %99 = vector.broadcast %98 : vector<8x1xi32> to vector<8x128xi32>
    %100 = arith.cmpi eq, %97, %99 : vector<8x128xi32>
    %c2 = arith.constant 2 : index
    %c0_63 = arith.constant 0 : index
    %c0_64 = arith.constant 0 : index
    %101 = vector.load %arg22[%c2, %c0_63, %c0_64] : memref<3x8x1xf32, #tpu.memory_space<vmem>>, vector<1x8x1xf32>
    %102 = vector.shape_cast %101 : vector<1x8x1xf32> to vector<8x1xf32>
    %cst_65 = arith.constant 0.000000e+00 : f32
    %103 = vector.broadcast %cst_65 : f32 to vector<8x128xf32>
    %104 = arith.select %100, %94, %103 : vector<8x128xi1>, vector<8x128xf32>
    %cst_66 = arith.constant dense<0.000000e+00> : vector<8xf32>
    %105 = vector.multi_reduction <add>, %104, %cst_66 [1] : vector<8x128xf32> to vector<8xf32>
    %106 = vector.shape_cast %105 : vector<8xf32> to vector<8x1xf32>
    %107 = arith.addf %102, %106 : vector<8x1xf32>
    %c2_67 = arith.constant 2 : index
    %c0_68 = arith.constant 0 : index
    %c0_69 = arith.constant 0 : index
    %108 = vector.load %arg22[%c2_67, %c0_68, %c0_69] : memref<3x8x1xf32, #tpu.memory_space<vmem>>, vector<1x8x1xf32>
    %109 = vector.shape_cast %108 : vector<1x8x1xf32> to vector<8x1xf32>
    %110 = vector.shape_cast %107 : vector<8x1xf32> to vector<1x8x1xf32>
    tpu.vector_store %arg22[%c2_67, %c0_68, %c0_69], %110 {strides = array<i32>} : memref<3x8x1xf32, #tpu.memory_space<vmem>>, vector<1x8x1xf32>,
    %c2_70 = arith.constant 2 : index
    %c0_71 = arith.constant 0 : index
    %c0_72 = arith.constant 0 : index
    %111 = vector.load %arg20[%c2_70, %c0_71, %c0_72] : memref<3x8x1xf32, #tpu.memory_space<vmem>>, vector<1x8x1xf32>
    %112 = vector.shape_cast %111 : vector<1x8x1xf32> to vector<8x1xf32>
    %cst_73 = arith.constant dense<0xFF800000> : vector<8xf32>
    %113 = vector.multi_reduction <maximumf>, %94, %cst_73 [1] : vector<8x128xf32> to vector<8xf32>
    %114 = vector.shape_cast %113 : vector<8xf32> to vector<8x1xf32>
    %115 = arith.maximumf %112, %114 : vector<8x1xf32>
    %c2_74 = arith.constant 2 : index
    %c0_75 = arith.constant 0 : index
    %c0_76 = arith.constant 0 : index
    %116 = vector.load %arg21[%c2_74, %c0_75, %c0_76] : memref<3x8x1xf32, #tpu.memory_space<vmem>>, vector<1x8x1xf32>
    %117 = vector.shape_cast %116 : vector<1x8x1xf32> to vector<8x1xf32>
    %118 = arith.subf %112, %115 : vector<8x1xf32>
    %119 = math.exp %118 : vector<8x1xf32>
    %120 = arith.mulf %117, %119 : vector<8x1xf32>
    %121 = vector.broadcast %115 : vector<8x1xf32> to vector<8x128xf32>
    %122 = arith.subf %94, %121 : vector<8x128xf32>
    %123 = math.exp %122 : vector<8x128xf32>
    %cst_77 = arith.constant dense<0.000000e+00> : vector<8xf32>
    %124 = vector.multi_reduction <add>, %123, %cst_77 [1] : vector<8x128xf32> to vector<8xf32>
    %125 = vector.shape_cast %124 : vector<8xf32> to vector<8x1xf32>
    %126 = arith.addf %120, %125 : vector<8x1xf32>
    %c2_78 = arith.constant 2 : index
    %c0_79 = arith.constant 0 : index
    %c0_80 = arith.constant 0 : index
    %127 = vector.load %arg21[%c2_78, %c0_79, %c0_80] : memref<3x8x1xf32, #tpu.memory_space<vmem>>, vector<1x8x1xf32>
    %128 = vector.shape_cast %127 : vector<1x8x1xf32> to vector<8x1xf32>
    %129 = vector.shape_cast %126 : vector<8x1xf32> to vector<1x8x1xf32>
    tpu.vector_store %arg21[%c2_78, %c0_79, %c0_80], %129 {strides = array<i32>} : memref<3x8x1xf32, #tpu.memory_space<vmem>>, vector<1x8x1xf32>,
    %c2_81 = arith.constant 2 : index
    %c0_82 = arith.constant 0 : index
    %c0_83 = arith.constant 0 : index
    %130 = vector.load %arg20[%c2_81, %c0_82, %c0_83] : memref<3x8x1xf32, #tpu.memory_space<vmem>>, vector<1x8x1xf32>
    %131 = vector.shape_cast %130 : vector<1x8x1xf32> to vector<8x1xf32>
    %132 = vector.shape_cast %115 : vector<8x1xf32> to vector<1x8x1xf32>
    tpu.vector_store %arg20[%c2_81, %c0_82, %c0_83], %132 {strides = array<i32>} : memref<3x8x1xf32, #tpu.memory_space<vmem>>, vector<1x8x1xf32>,
    %c1_i32 = arith.constant 1 : i32
    %133 = arith.cmpi eq, %arg0, %c1_i32 : i32
    %134 = arith.extui %133 : i1 to i32
    %c0_i32_84 = arith.constant 0 : i32
    %135 = arith.cmpi ne, %134, %c0_i32_84 : i32
    scf.if %135 {
      %c0_85 = arith.constant 0 : index
      %c0_86 = arith.constant 0 : index
      %136 = vector.load %arg19[%c0_85, %c0_86] : memref<1x1xf32, #tpu.memory_space<vmem>>, vector<1x1xf32>
      %cst_87 = arith.constant 2.048000e+03 : f32
      %137 = vector.broadcast %cst_87 : f32 to vector<1x1xf32>
      %138 = arith.divf %136, %137 : vector<1x1xf32>
      %cst_88 = arith.constant 0.000000e+00 : f32
      %139 = vector.broadcast %cst_88 : f32 to vector<1x1xf32>
      %c0_89 = arith.constant 0 : index
      %c0_90 = arith.constant 0 : index
      %c0_91 = arith.constant 0 : index
      %140 = vector.load %arg20[%c0_89, %c0_90, %c0_91] : memref<3x8x1xf32, #tpu.memory_space<vmem>>, vector<1x8x1xf32>
      %141 = vector.shape_cast %140 : vector<1x8x1xf32> to vector<8x1xf32>
      %c0_92 = arith.constant 0 : index
      %c0_93 = arith.constant 0 : index
      %c0_94 = arith.constant 0 : index
      %142 = vector.load %arg21[%c0_92, %c0_93, %c0_94] : memref<3x8x1xf32, #tpu.memory_space<vmem>>, vector<1x8x1xf32>
      %143 = vector.shape_cast %142 : vector<1x8x1xf32> to vector<8x1xf32>
      %144 = math.log %143 : vector<8x1xf32>
      %145 = arith.addf %141, %144 : vector<8x1xf32>
      %c0_95 = arith.constant 0 : index
      %c0_96 = arith.constant 0 : index
      %c0_97 = arith.constant 0 : index
      %146 = vector.load %arg22[%c0_95, %c0_96, %c0_97] : memref<3x8x1xf32, #tpu.memory_space<vmem>>, vector<1x8x1xf32>
      %147 = vector.shape_cast %146 : vector<1x8x1xf32> to vector<8x1xf32>
      %148 = arith.subf %145, %147 : vector<8x1xf32>
      %149 = vector.shape_cast %148 : vector<8x1xf32> to vector<1x8x1xf32>
      %cst_98 = arith.constant dense<0.000000e+00> : vector<1xf32>
      %150 = vector.multi_reduction <add>, %149, %cst_98 [1, 2] : vector<1x8x1xf32> to vector<1xf32>
      %151 = vector.shape_cast %150 : vector<1xf32> to vector<1x1x1xf32>
      %152 = vector.extract %151[0, 0, 0] : f32 from vector<1x1x1xf32>
      %153 = vector.broadcast %152 : f32 to vector<1x1xf32>
      %154 = arith.addf %139, %153 : vector<1x1xf32>
      %c1_99 = arith.constant 1 : index
      %c0_100 = arith.constant 0 : index
      %c0_101 = arith.constant 0 : index
      %155 = vector.load %arg20[%c1_99, %c0_100, %c0_101] : memref<3x8x1xf32, #tpu.memory_space<vmem>>, vector<1x8x1xf32>
      %156 = vector.shape_cast %155 : vector<1x8x1xf32> to vector<8x1xf32>
      %c1_102 = arith.constant 1 : index
      %c0_103 = arith.constant 0 : index
      %c0_104 = arith.constant 0 : index
      %157 = vector.load %arg21[%c1_102, %c0_103, %c0_104] : memref<3x8x1xf32, #tpu.memory_space<vmem>>, vector<1x8x1xf32>
      %158 = vector.shape_cast %157 : vector<1x8x1xf32> to vector<8x1xf32>
      %159 = math.log %158 : vector<8x1xf32>
      %160 = arith.addf %156, %159 : vector<8x1xf32>
      %c1_105 = arith.constant 1 : index
      %c0_106 = arith.constant 0 : index
      %c0_107 = arith.constant 0 : index
      %161 = vector.load %arg22[%c1_105, %c0_106, %c0_107] : memref<3x8x1xf32, #tpu.memory_space<vmem>>, vector<1x8x1xf32>
      %162 = vector.shape_cast %161 : vector<1x8x1xf32> to vector<8x1xf32>
      %163 = arith.subf %160, %162 : vector<8x1xf32>
      %164 = vector.shape_cast %163 : vector<8x1xf32> to vector<1x8x1xf32>
      %cst_108 = arith.constant dense<0.000000e+00> : vector<1xf32>
      %165 = vector.multi_reduction <add>, %164, %cst_108 [1, 2] : vector<1x8x1xf32> to vector<1xf32>
      %166 = vector.shape_cast %165 : vector<1xf32> to vector<1x1x1xf32>
      %167 = vector.extract %166[0, 0, 0] : f32 from vector<1x1x1xf32>
      %168 = vector.broadcast %167 : f32 to vector<1x1xf32>
      %169 = arith.addf %154, %168 : vector<1x1xf32>
      %c2_109 = arith.constant 2 : index
      %c0_110 = arith.constant 0 : index
      %c0_111 = arith.constant 0 : index
      %170 = vector.load %arg20[%c2_109, %c0_110, %c0_111] : memref<3x8x1xf32, #tpu.memory_space<vmem>>, vector<1x8x1xf32>
      %171 = vector.shape_cast %170 : vector<1x8x1xf32> to vector<8x1xf32>
      %c2_112 = arith.constant 2 : index
      %c0_113 = arith.constant 0 : index
      %c0_114 = arith.constant 0 : index
      %172 = vector.load %arg21[%c2_112, %c0_113, %c0_114] : memref<3x8x1xf32, #tpu.memory_space<vmem>>, vector<1x8x1xf32>
      %173 = vector.shape_cast %172 : vector<1x8x1xf32> to vector<8x1xf32>
      %174 = math.log %173 : vector<8x1xf32>
      %175 = arith.addf %171, %174 : vector<8x1xf32>
      %c2_115 = arith.constant 2 : index
      %c0_116 = arith.constant 0 : index
      %c0_117 = arith.constant 0 : index
      %176 = vector.load %arg22[%c2_115, %c0_116, %c0_117] : memref<3x8x1xf32, #tpu.memory_space<vmem>>, vector<1x8x1xf32>
      %177 = vector.shape_cast %176 : vector<1x8x1xf32> to vector<8x1xf32>
      %178 = arith.subf %175, %177 : vector<8x1xf32>
      %179 = vector.shape_cast %178 : vector<8x1xf32> to vector<1x8x1xf32>
      %cst_118 = arith.constant dense<0.000000e+00> : vector<1xf32>
      %180 = vector.multi_reduction <add>, %179, %cst_118 [1, 2] : vector<1x8x1xf32> to vector<1xf32>
      %181 = vector.shape_cast %180 : vector<1xf32> to vector<1x1x1xf32>
      %182 = vector.extract %181[0, 0, 0] : f32 from vector<1x1x1xf32>
      %183 = vector.broadcast %182 : f32 to vector<1x1xf32>
      %184 = arith.addf %169, %183 : vector<1x1xf32>
      %cst_119 = arith.constant 2.400000e+01 : f32
      %185 = vector.broadcast %cst_119 : f32 to vector<1x1xf32>
      %186 = arith.divf %184, %185 : vector<1x1xf32>
      %c0_120 = arith.constant 0 : index
      %c0_121 = arith.constant 0 : index
      %187 = vector.load %arg3[%c0_120, %c0_121] : memref<8x32xf32, #tpu.memory_space<vmem>>, vector<8x32xf32>
      %c0_122 = arith.constant 0 : index
      %c0_123 = arith.constant 0 : index
      %188 = vector.load %arg4[%c0_122, %c0_123] : memref<8x32xf32, #tpu.memory_space<vmem>>, vector<8x32xf32>
      %c0_124 = arith.constant 0 : index
      %c0_125 = arith.constant 0 : index
      %189 = vector.load %arg5[%c0_124, %c0_125] : memref<8x32xf32, #tpu.memory_space<vmem>>, vector<8x32xf32>
      %190 = arith.mulf %187, %187 : vector<8x32xf32>
      %cst_126 = arith.constant dense<0.000000e+00> : vector<8xf32>
      %191 = vector.multi_reduction <add>, %190, %cst_126 [1] : vector<8x32xf32> to vector<8xf32>
      %192 = vector.shape_cast %191 : vector<8xf32> to vector<8x1xf32>
      %cst_127 = arith.constant 1.000000e-16 : f32
      %193 = vector.broadcast %cst_127 : f32 to vector<8x1xf32>
      %194 = arith.maximumf %192, %193 : vector<8x1xf32>
      %195 = math.rsqrt %194 : vector<8x1xf32>
      %196 = vector.broadcast %195 : vector<8x1xf32> to vector<8x32xf32>
      %197 = arith.mulf %187, %196 : vector<8x32xf32>
      %198 = arith.mulf %188, %188 : vector<8x32xf32>
      %cst_128 = arith.constant dense<0.000000e+00> : vector<8xf32>
      %199 = vector.multi_reduction <add>, %198, %cst_128 [1] : vector<8x32xf32> to vector<8xf32>
      %200 = vector.shape_cast %199 : vector<8xf32> to vector<8x1xf32>
      %cst_129 = arith.constant 1.000000e-16 : f32
      %201 = vector.broadcast %cst_129 : f32 to vector<8x1xf32>
      %202 = arith.maximumf %200, %201 : vector<8x1xf32>
      %203 = math.rsqrt %202 : vector<8x1xf32>
      %204 = vector.broadcast %203 : vector<8x1xf32> to vector<8x32xf32>
      %205 = arith.mulf %188, %204 : vector<8x32xf32>
      %206 = arith.mulf %189, %189 : vector<8x32xf32>
      %cst_130 = arith.constant dense<0.000000e+00> : vector<8xf32>
      %207 = vector.multi_reduction <add>, %206, %cst_130 [1] : vector<8x32xf32> to vector<8xf32>
      %208 = vector.shape_cast %207 : vector<8xf32> to vector<8x1xf32>
      %cst_131 = arith.constant 1.000000e-16 : f32
      %209 = vector.broadcast %cst_131 : f32 to vector<8x1xf32>
      %210 = arith.maximumf %208, %209 : vector<8x1xf32>
      %211 = math.rsqrt %210 : vector<8x1xf32>
      %212 = vector.broadcast %211 : vector<8x1xf32> to vector<8x32xf32>
      %213 = arith.mulf %189, %212 : vector<8x32xf32>
      %cst_132 = arith.constant dense<0.000000e+00> : vector<8x8xf32>
      %214 = tpu.matmul %197, %205, %cst_132 {dimension_numbers = #tpu.dot_dimension_numbers<[1], [1], [0], [0], [0, 0, 1, 0], [], []>} : vector<8x32xf32>, vector<8x32xf32>, vector<8x8xf32> -> vector<8x8xf32>
      %cst_133 = arith.constant 2.000000e+01 : f32
      %215 = vector.broadcast %cst_133 : f32 to vector<8x8xf32>
      %216 = arith.mulf %214, %215 : vector<8x8xf32>
      %cst_134 = arith.constant dense<0.000000e+00> : vector<8x8xf32>
      %217 = tpu.matmul %197, %213, %cst_134 {dimension_numbers = #tpu.dot_dimension_numbers<[1], [1], [0], [0], [0, 0, 1, 0], [], []>} : vector<8x32xf32>, vector<8x32xf32>, vector<8x8xf32> -> vector<8x8xf32>
      %cst_135 = arith.constant 2.000000e+01 : f32
      %218 = vector.broadcast %cst_135 : f32 to vector<8x8xf32>
      %219 = arith.mulf %217, %218 : vector<8x8xf32>
      %220 = tpu.iota {dimensions = array<i32: 0>} : vector<8x8xi32>
      %221 = tpu.iota {dimensions = array<i32: 1>} : vector<8x8xi32>
      %222 = arith.cmpi eq, %220, %221 : vector<8x8xi32>
      %c0_136 = arith.constant 0 : index
      %c0_137 = arith.constant 0 : index
      %223 = vector.load %arg9[%c0_136, %c0_137] : memref<8x1xi32, #tpu.memory_space<vmem>>, vector<8x1xi32>
      %c0_138 = arith.constant 0 : index
      %c0_139 = arith.constant 0 : index
      %224 = vector.load %arg12[%c0_138, %c0_139] : memref<1x8xi32, #tpu.memory_space<vmem>>, vector<1x8xi32>
      %225 = vector.broadcast %223 : vector<8x1xi32> to vector<8x8xi32>
      %226 = vector.broadcast %224 : vector<1x8xi32> to vector<8x8xi32>
      %227 = arith.cmpi ne, %225, %226 : vector<8x8xi32>
      %228 = arith.ori %227, %222 : vector<8x8xi1>
      %cst_140 = arith.constant -1.70141173E+38 : f32
      %229 = vector.broadcast %cst_140 : f32 to vector<8x8xf32>
      %230 = arith.select %228, %216, %229 : vector<8x8xi1>, vector<8x8xf32>
      %c0_141 = arith.constant 0 : index
      %c0_142 = arith.constant 0 : index
      %231 = vector.load %arg13[%c0_141, %c0_142] : memref<1x8xi32, #tpu.memory_space<vmem>>, vector<1x8xi32>
      %232 = vector.broadcast %223 : vector<8x1xi32> to vector<8x8xi32>
      %233 = vector.broadcast %231 : vector<1x8xi32> to vector<8x8xi32>
      %234 = arith.cmpi ne, %232, %233 : vector<8x8xi32>
      %cst_143 = arith.constant -1.70141173E+38 : f32
      %235 = vector.broadcast %cst_143 : f32 to vector<8x8xf32>
      %236 = arith.select %234, %219, %235 : vector<8x8xi1>, vector<8x8xf32>
      %cst_144 = arith.constant dense<0xFF800000> : vector<8xf32>
      %237 = vector.multi_reduction <maximumf>, %230, %cst_144 [1] : vector<8x8xf32> to vector<8xf32>
      %238 = vector.shape_cast %237 : vector<8xf32> to vector<8x1xf32>
      %cst_145 = arith.constant dense<0xFF800000> : vector<8xf32>
      %239 = vector.multi_reduction <maximumf>, %236, %cst_145 [1] : vector<8x8xf32> to vector<8xf32>
      %240 = vector.shape_cast %239 : vector<8xf32> to vector<8x1xf32>
      %241 = arith.maximumf %238, %240 : vector<8x1xf32>
      %242 = vector.broadcast %241 : vector<8x1xf32> to vector<8x8xf32>
      %243 = arith.subf %230, %242 : vector<8x8xf32>
      %244 = math.exp %243 : vector<8x8xf32>
      %cst_146 = arith.constant dense<0.000000e+00> : vector<8xf32>
      %245 = vector.multi_reduction <add>, %244, %cst_146 [1] : vector<8x8xf32> to vector<8xf32>
      %246 = vector.shape_cast %245 : vector<8xf32> to vector<8x1xf32>
      %247 = vector.broadcast %241 : vector<8x1xf32> to vector<8x8xf32>
      %248 = arith.subf %236, %247 : vector<8x8xf32>
      %249 = math.exp %248 : vector<8x8xf32>
      %cst_147 = arith.constant dense<0.000000e+00> : vector<8xf32>
      %250 = vector.multi_reduction <add>, %249, %cst_147 [1] : vector<8x8xf32> to vector<8xf32>
      %251 = vector.shape_cast %250 : vector<8xf32> to vector<8x1xf32>
      %252 = arith.addf %246, %251 : vector<8x1xf32>
      %253 = math.log %252 : vector<8x1xf32>
      %254 = arith.addf %241, %253 : vector<8x1xf32>
      %cst_148 = arith.constant 0.000000e+00 : f32
      %255 = vector.broadcast %cst_148 : f32 to vector<8x8xf32>
      %256 = arith.select %222, %216, %255 : vector<8x8xi1>, vector<8x8xf32>
      %cst_149 = arith.constant dense<0.000000e+00> : vector<8xf32>
      %257 = vector.multi_reduction <add>, %256, %cst_149 [1] : vector<8x8xf32> to vector<8xf32>
      %258 = vector.shape_cast %257 : vector<8xf32> to vector<8x1xf32>
      %259 = arith.subf %254, %258 : vector<8x1xf32>
      %260 = vector.shape_cast %259 : vector<8x1xf32> to vector<1x8x1xf32>
      %cst_150 = arith.constant dense<0.000000e+00> : vector<1xf32>
      %261 = vector.multi_reduction <add>, %260, %cst_150 [1, 2] : vector<1x8x1xf32> to vector<1xf32>
      %262 = vector.shape_cast %261 : vector<1xf32> to vector<1x1x1xf32>
      %263 = vector.extract %262[0, 0, 0] : f32 from vector<1x1x1xf32>
      %264 = vector.broadcast %263 : f32 to vector<1x1xf32>
      %cst_151 = arith.constant 8.000000e+00 : f32
      %265 = vector.broadcast %cst_151 : f32 to vector<1x1xf32>
      %266 = arith.divf %264, %265 : vector<1x1xf32>
      %c0_152 = arith.constant 0 : index
      %c0_153 = arith.constant 0 : index
      %267 = vector.load %arg14[%c0_152, %c0_153] : memref<32x128xf32, #tpu.memory_space<vmem>>, vector<32x128xf32>
      %c0_154 = arith.constant 0 : index
      %c0_155 = arith.constant 0 : index
      %268 = vector.load %arg15[%c0_154, %c0_155] : memref<1x128xf32, #tpu.memory_space<vmem>>, vector<1x128xf32>
      %c0_156 = arith.constant 0 : index
      %c0_157 = arith.constant 0 : index
      %269 = vector.load %arg16[%c0_156, %c0_157] : memref<128x128xf32, #tpu.memory_space<vmem>>, vector<128x128xf32>
      %c0_158 = arith.constant 0 : index
      %c0_159 = arith.constant 0 : index
      %270 = vector.load %arg17[%c0_158, %c0_159] : memref<1x128xf32, #tpu.memory_space<vmem>>, vector<1x128xf32>
      %cst_160 = arith.constant dense<0.000000e+00> : vector<8x128xf32>
      %271 = tpu.matmul %187, %267, %cst_160 {dimension_numbers = #tpu.dot_dimension_numbers<[1], [0], [0], [1], [0, 0, 1, 1], [], []>} : vector<8x32xf32>, vector<32x128xf32>, vector<8x128xf32> -> vector<8x128xf32>
      %272 = vector.broadcast %268 : vector<1x128xf32> to vector<8x128xf32>
      %273 = arith.addf %271, %272 : vector<8x128xf32>
      %cst_161 = arith.constant 0.000000e+00 : f32
      %274 = vector.broadcast %cst_161 : f32 to vector<8x128xf32>
      %275 = arith.maximumf %273, %274 : vector<8x128xf32>
      %cst_162 = arith.constant dense<0.000000e+00> : vector<8x128xf32>
      %276 = tpu.matmul %275, %269, %cst_162 {dimension_numbers = #tpu.dot_dimension_numbers<[1], [0], [0], [1], [0, 0, 1, 1], [], []>} : vector<8x128xf32>, vector<128x128xf32>, vector<8x128xf32> -> vector<8x128xf32>
      %277 = vector.broadcast %270 : vector<1x128xf32> to vector<8x128xf32>
      %278 = arith.addf %276, %277 : vector<8x128xf32>
      %cst_163 = arith.constant dense<0.000000e+00> : vector<8x128xf32>
      %279 = tpu.matmul %188, %267, %cst_163 {dimension_numbers = #tpu.dot_dimension_numbers<[1], [0], [0], [1], [0, 0, 1, 1], [], []>} : vector<8x32xf32>, vector<32x128xf32>, vector<8x128xf32> -> vector<8x128xf32>
      %280 = vector.broadcast %268 : vector<1x128xf32> to vector<8x128xf32>
      %281 = arith.addf %279, %280 : vector<8x128xf32>
      %cst_164 = arith.constant 0.000000e+00 : f32
      %282 = vector.broadcast %cst_164 : f32 to vector<8x128xf32>
      %283 = arith.maximumf %281, %282 : vector<8x128xf32>
      %cst_165 = arith.constant dense<0.000000e+00> : vector<8x128xf32>
      %284 = tpu.matmul %283, %269, %cst_165 {dimension_numbers = #tpu.dot_dimension_numbers<[1], [0], [0], [1], [0, 0, 1, 1], [], []>} : vector<8x128xf32>, vector<128x128xf32>, vector<8x128xf32> -> vector<8x128xf32>
      %285 = vector.broadcast %270 : vector<1x128xf32> to vector<8x128xf32>
      %286 = arith.addf %284, %285 : vector<8x128xf32>
      %cst_166 = arith.constant dense<0.000000e+00> : vector<8x128xf32>
      %287 = tpu.matmul %189, %267, %cst_166 {dimension_numbers = #tpu.dot_dimension_numbers<[1], [0], [0], [1], [0, 0, 1, 1], [], []>} : vector<8x32xf32>, vector<32x128xf32>, vector<8x128xf32> -> vector<8x128xf32>
      %288 = vector.broadcast %268 : vector<1x128xf32> to vector<8x128xf32>
      %289 = arith.addf %287, %288 : vector<8x128xf32>
      %cst_167 = arith.constant 0.000000e+00 : f32
      %290 = vector.broadcast %cst_167 : f32 to vector<8x128xf32>
      %291 = arith.maximumf %289, %290 : vector<8x128xf32>
      %cst_168 = arith.constant dense<0.000000e+00> : vector<8x128xf32>
      %292 = tpu.matmul %291, %269, %cst_168 {dimension_numbers = #tpu.dot_dimension_numbers<[1], [0], [0], [1], [0, 0, 1, 1], [], []>} : vector<8x128xf32>, vector<128x128xf32>, vector<8x128xf32> -> vector<8x128xf32>
      %293 = vector.broadcast %270 : vector<1x128xf32> to vector<8x128xf32>
      %294 = arith.addf %292, %293 : vector<8x128xf32>
      %cst_169 = arith.constant dense<0.000000e+00> : vector<128xf32>
      %295 = vector.multi_reduction <add>, %278, %cst_169 [0] : vector<8x128xf32> to vector<128xf32>
      %296 = vector.shape_cast %295 : vector<128xf32> to vector<1x128xf32>
      %cst_170 = arith.constant 8.000000e+00 : f32
      %297 = vector.broadcast %cst_170 : f32 to vector<1x128xf32>
      %298 = arith.divf %296, %297 : vector<1x128xf32>
      %299 = vector.broadcast %298 : vector<1x128xf32> to vector<8x128xf32>
      %300 = arith.subf %278, %299 : vector<8x128xf32>
      %301 = arith.mulf %300, %300 : vector<8x128xf32>
      %cst_171 = arith.constant dense<0.000000e+00> : vector<128xf32>
      %302 = vector.multi_reduction <add>, %301, %cst_171 [0] : vector<8x128xf32> to vector<128xf32>
      %303 = vector.shape_cast %302 : vector<128xf32> to vector<1x128xf32>
      %cst_172 = arith.constant 7.000000e+00 : f32
      %304 = vector.broadcast %cst_172 : f32 to vector<1x128xf32>
      %305 = arith.divf %303, %304 : vector<1x128xf32>
      %cst_173 = arith.constant 9.99999974E-5 : f32
      %306 = vector.broadcast %cst_173 : f32 to vector<1x128xf32>
      %307 = arith.addf %305, %306 : vector<1x128xf32>
      %308 = math.sqrt %307 : vector<1x128xf32>
      %cst_174 = arith.constant 1.000000e+00 : f32
      %309 = vector.broadcast %cst_174 : f32 to vector<1x128xf32>
      %310 = arith.subf %309, %308 : vector<1x128xf32>
      %cst_175 = arith.constant 0.000000e+00 : f32
      %311 = vector.broadcast %cst_175 : f32 to vector<1x128xf32>
      %312 = arith.maximumf %310, %311 : vector<1x128xf32>
      %313 = vector.shape_cast %312 : vector<1x128xf32> to vector<1x1x128xf32>
      %cst_176 = arith.constant dense<0.000000e+00> : vector<1xf32>
      %314 = vector.multi_reduction <add>, %313, %cst_176 [1, 2] : vector<1x1x128xf32> to vector<1xf32>
      %315 = vector.shape_cast %314 : vector<1xf32> to vector<1x1x1xf32>
      %316 = vector.extract %315[0, 0, 0] : f32 from vector<1x1x1xf32>
      %317 = vector.broadcast %316 : f32 to vector<1x1xf32>
      %cst_177 = arith.constant 1.280000e+02 : f32
      %318 = vector.broadcast %cst_177 : f32 to vector<1x1xf32>
      %319 = arith.divf %317, %318 : vector<1x1xf32>
      %cst_178 = arith.constant dense<0.000000e+00> : vector<8x8xf32>
      %320 = tpu.matmul %300, %300, %cst_178 {dimension_numbers = #tpu.dot_dimension_numbers<[1], [1], [0], [0], [0, 0, 1, 0], [], []>} : vector<8x128xf32>, vector<8x128xf32>, vector<8x8xf32> -> vector<8x8xf32>
      %321 = arith.mulf %320, %320 : vector<8x8xf32>
      %322 = vector.shape_cast %321 : vector<8x8xf32> to vector<1x8x8xf32>
      %cst_179 = arith.constant dense<0.000000e+00> : vector<1xf32>
      %323 = vector.multi_reduction <add>, %322, %cst_179 [1, 2] : vector<1x8x8xf32> to vector<1xf32>
      %324 = vector.shape_cast %323 : vector<1xf32> to vector<1x1x1xf32>
      %325 = vector.extract %324[0, 0, 0] : f32 from vector<1x1x1xf32>
      %326 = vector.broadcast %325 : f32 to vector<1x1xf32>
      %cst_180 = arith.constant 4.900000e+01 : f32
      %327 = vector.broadcast %cst_180 : f32 to vector<1x1xf32>
      %328 = arith.divf %326, %327 : vector<1x1xf32>
      %329 = arith.mulf %305, %305 : vector<1x128xf32>
      %330 = vector.shape_cast %329 : vector<1x128xf32> to vector<1x1x128xf32>
      %cst_181 = arith.constant dense<0.000000e+00> : vector<1xf32>
      %331 = vector.multi_reduction <add>, %330, %cst_181 [1, 2] : vector<1x1x128xf32> to vector<1xf32>
      %332 = vector.shape_cast %331 : vector<1xf32> to vector<1x1x1xf32>
      %333 = vector.extract %332[0, 0, 0] : f32 from vector<1x1x1xf32>
      %334 = vector.broadcast %333 : f32 to vector<1x1xf32>
      %335 = arith.subf %328, %334 : vector<1x1xf32>
      %cst_182 = arith.constant 1.280000e+02 : f32
      %336 = vector.broadcast %cst_182 : f32 to vector<1x1xf32>
      %337 = arith.divf %335, %336 : vector<1x1xf32>
      %cst_183 = arith.constant dense<0.000000e+00> : vector<128xf32>
      %338 = vector.multi_reduction <add>, %286, %cst_183 [0] : vector<8x128xf32> to vector<128xf32>
      %339 = vector.shape_cast %338 : vector<128xf32> to vector<1x128xf32>
      %cst_184 = arith.constant 8.000000e+00 : f32
      %340 = vector.broadcast %cst_184 : f32 to vector<1x128xf32>
      %341 = arith.divf %339, %340 : vector<1x128xf32>
      %342 = vector.broadcast %341 : vector<1x128xf32> to vector<8x128xf32>
      %343 = arith.subf %286, %342 : vector<8x128xf32>
      %344 = arith.mulf %343, %343 : vector<8x128xf32>
      %cst_185 = arith.constant dense<0.000000e+00> : vector<128xf32>
      %345 = vector.multi_reduction <add>, %344, %cst_185 [0] : vector<8x128xf32> to vector<128xf32>
      %346 = vector.shape_cast %345 : vector<128xf32> to vector<1x128xf32>
      %cst_186 = arith.constant 7.000000e+00 : f32
      %347 = vector.broadcast %cst_186 : f32 to vector<1x128xf32>
      %348 = arith.divf %346, %347 : vector<1x128xf32>
      %cst_187 = arith.constant 9.99999974E-5 : f32
      %349 = vector.broadcast %cst_187 : f32 to vector<1x128xf32>
      %350 = arith.addf %348, %349 : vector<1x128xf32>
      %351 = math.sqrt %350 : vector<1x128xf32>
      %cst_188 = arith.constant 1.000000e+00 : f32
      %352 = vector.broadcast %cst_188 : f32 to vector<1x128xf32>
      %353 = arith.subf %352, %351 : vector<1x128xf32>
      %cst_189 = arith.constant 0.000000e+00 : f32
      %354 = vector.broadcast %cst_189 : f32 to vector<1x128xf32>
      %355 = arith.maximumf %353, %354 : vector<1x128xf32>
      %356 = vector.shape_cast %355 : vector<1x128xf32> to vector<1x1x128xf32>
      %cst_190 = arith.constant dense<0.000000e+00> : vector<1xf32>
      %357 = vector.multi_reduction <add>, %356, %cst_190 [1, 2] : vector<1x1x128xf32> to vector<1xf32>
      %358 = vector.shape_cast %357 : vector<1xf32> to vector<1x1x1xf32>
      %359 = vector.extract %358[0, 0, 0] : f32 from vector<1x1x1xf32>
      %360 = vector.broadcast %359 : f32 to vector<1x1xf32>
      %cst_191 = arith.constant 1.280000e+02 : f32
      %361 = vector.broadcast %cst_191 : f32 to vector<1x1xf32>
      %362 = arith.divf %360, %361 : vector<1x1xf32>
      %cst_192 = arith.constant dense<0.000000e+00> : vector<8x8xf32>
      %363 = tpu.matmul %343, %343, %cst_192 {dimension_numbers = #tpu.dot_dimension_numbers<[1], [1], [0], [0], [0, 0, 1, 0], [], []>} : vector<8x128xf32>, vector<8x128xf32>, vector<8x8xf32> -> vector<8x8xf32>
      %364 = arith.mulf %363, %363 : vector<8x8xf32>
      %365 = vector.shape_cast %364 : vector<8x8xf32> to vector<1x8x8xf32>
      %cst_193 = arith.constant dense<0.000000e+00> : vector<1xf32>
      %366 = vector.multi_reduction <add>, %365, %cst_193 [1, 2] : vector<1x8x8xf32> to vector<1xf32>
      %367 = vector.shape_cast %366 : vector<1xf32> to vector<1x1x1xf32>
      %368 = vector.extract %367[0, 0, 0] : f32 from vector<1x1x1xf32>
      %369 = vector.broadcast %368 : f32 to vector<1x1xf32>
      %cst_194 = arith.constant 4.900000e+01 : f32
      %370 = vector.broadcast %cst_194 : f32 to vector<1x1xf32>
      %371 = arith.divf %369, %370 : vector<1x1xf32>
      %372 = arith.mulf %348, %348 : vector<1x128xf32>
      %373 = vector.shape_cast %372 : vector<1x128xf32> to vector<1x1x128xf32>
      %cst_195 = arith.constant dense<0.000000e+00> : vector<1xf32>
      %374 = vector.multi_reduction <add>, %373, %cst_195 [1, 2] : vector<1x1x128xf32> to vector<1xf32>
      %375 = vector.shape_cast %374 : vector<1xf32> to vector<1x1x1xf32>
      %376 = vector.extract %375[0, 0, 0] : f32 from vector<1x1x1xf32>
      %377 = vector.broadcast %376 : f32 to vector<1x1xf32>
      %378 = arith.subf %371, %377 : vector<1x1xf32>
      %cst_196 = arith.constant 1.280000e+02 : f32
      %379 = vector.broadcast %cst_196 : f32 to vector<1x1xf32>
      %380 = arith.divf %378, %379 : vector<1x1xf32>
      %cst_197 = arith.constant dense<0.000000e+00> : vector<128xf32>
      %381 = vector.multi_reduction <add>, %294, %cst_197 [0] : vector<8x128xf32> to vector<128xf32>
      %382 = vector.shape_cast %381 : vector<128xf32> to vector<1x128xf32>
      %cst_198 = arith.constant 8.000000e+00 : f32
      %383 = vector.broadcast %cst_198 : f32 to vector<1x128xf32>
      %384 = arith.divf %382, %383 : vector<1x128xf32>
      %385 = vector.broadcast %384 : vector<1x128xf32> to vector<8x128xf32>
      %386 = arith.subf %294, %385 : vector<8x128xf32>
      %387 = arith.mulf %386, %386 : vector<8x128xf32>
      %cst_199 = arith.constant dense<0.000000e+00> : vector<128xf32>
      %388 = vector.multi_reduction <add>, %387, %cst_199 [0] : vector<8x128xf32> to vector<128xf32>
      %389 = vector.shape_cast %388 : vector<128xf32> to vector<1x128xf32>
      %cst_200 = arith.constant 7.000000e+00 : f32
      %390 = vector.broadcast %cst_200 : f32 to vector<1x128xf32>
      %391 = arith.divf %389, %390 : vector<1x128xf32>
      %cst_201 = arith.constant 9.99999974E-5 : f32
      %392 = vector.broadcast %cst_201 : f32 to vector<1x128xf32>
      %393 = arith.addf %391, %392 : vector<1x128xf32>
      %394 = math.sqrt %393 : vector<1x128xf32>
      %cst_202 = arith.constant 1.000000e+00 : f32
      %395 = vector.broadcast %cst_202 : f32 to vector<1x128xf32>
      %396 = arith.subf %395, %394 : vector<1x128xf32>
      %cst_203 = arith.constant 0.000000e+00 : f32
      %397 = vector.broadcast %cst_203 : f32 to vector<1x128xf32>
      %398 = arith.maximumf %396, %397 : vector<1x128xf32>
      %399 = vector.shape_cast %398 : vector<1x128xf32> to vector<1x1x128xf32>
      %cst_204 = arith.constant dense<0.000000e+00> : vector<1xf32>
      %400 = vector.multi_reduction <add>, %399, %cst_204 [1, 2] : vector<1x1x128xf32> to vector<1xf32>
      %401 = vector.shape_cast %400 : vector<1xf32> to vector<1x1x1xf32>
      %402 = vector.extract %401[0, 0, 0] : f32 from vector<1x1x1xf32>
      %403 = vector.broadcast %402 : f32 to vector<1x1xf32>
      %cst_205 = arith.constant 1.280000e+02 : f32
      %404 = vector.broadcast %cst_205 : f32 to vector<1x1xf32>
      %405 = arith.divf %403, %404 : vector<1x1xf32>
      %cst_206 = arith.constant dense<0.000000e+00> : vector<8x8xf32>
      %406 = tpu.matmul %386, %386, %cst_206 {dimension_numbers = #tpu.dot_dimension_numbers<[1], [1], [0], [0], [0, 0, 1, 0], [], []>} : vector<8x128xf32>, vector<8x128xf32>, vector<8x8xf32> -> vector<8x8xf32>
      %407 = arith.mulf %406, %406 : vector<8x8xf32>
      %408 = vector.shape_cast %407 : vector<8x8xf32> to vector<1x8x8xf32>
      %cst_207 = arith.constant dense<0.000000e+00> : vector<1xf32>
      %409 = vector.multi_reduction <add>, %408, %cst_207 [1, 2] : vector<1x8x8xf32> to vector<1xf32>
      %410 = vector.shape_cast %409 : vector<1xf32> to vector<1x1x1xf32>
      %411 = vector.extract %410[0, 0, 0] : f32 from vector<1x1x1xf32>
      %412 = vector.broadcast %411 : f32 to vector<1x1xf32>
      %cst_208 = arith.constant 4.900000e+01 : f32
      %413 = vector.broadcast %cst_208 : f32 to vector<1x1xf32>
      %414 = arith.divf %412, %413 : vector<1x1xf32>
      %415 = arith.mulf %391, %391 : vector<1x128xf32>
      %416 = vector.shape_cast %415 : vector<1x128xf32> to vector<1x1x128xf32>
      %cst_209 = arith.constant dense<0.000000e+00> : vector<1xf32>
      %417 = vector.multi_reduction <add>, %416, %cst_209 [1, 2] : vector<1x1x128xf32> to vector<1xf32>
      %418 = vector.shape_cast %417 : vector<1xf32> to vector<1x1x1xf32>
      %419 = vector.extract %418[0, 0, 0] : f32 from vector<1x1x1xf32>
      %420 = vector.broadcast %419 : f32 to vector<1x1xf32>
      %421 = arith.subf %414, %420 : vector<1x1xf32>
      %cst_210 = arith.constant 1.280000e+02 : f32
      %422 = vector.broadcast %cst_210 : f32 to vector<1x1xf32>
      %423 = arith.divf %421, %422 : vector<1x1xf32>
      %424 = arith.addf %319, %362 : vector<1x1xf32>
      %425 = arith.addf %424, %405 : vector<1x1xf32>
      %cst_211 = arith.constant 3.000000e+00 : f32
      %426 = vector.broadcast %cst_211 : f32 to vector<1x1xf32>
      %427 = arith.divf %425, %426 : vector<1x1xf32>
      %428 = arith.addf %337, %380 : vector<1x1xf32>
      %429 = arith.addf %428, %423 : vector<1x1xf32>
      %cst_212 = arith.constant 3.000000e+00 : f32
      %430 = vector.broadcast %cst_212 : f32 to vector<1x1xf32>
      %431 = arith.divf %429, %430 : vector<1x1xf32>
      %432 = arith.subf %278, %286 : vector<8x128xf32>
      %433 = arith.mulf %432, %432 : vector<8x128xf32>
      %434 = vector.shape_cast %433 : vector<8x128xf32> to vector<1x8x128xf32>
      %cst_213 = arith.constant dense<0.000000e+00> : vector<1xf32>
      %435 = vector.multi_reduction <add>, %434, %cst_213 [1, 2] : vector<1x8x128xf32> to vector<1xf32>
      %436 = vector.shape_cast %435 : vector<1xf32> to vector<1x1x1xf32>
      %437 = vector.extract %436[0, 0, 0] : f32 from vector<1x1x1xf32>
      %438 = vector.broadcast %437 : f32 to vector<1x1xf32>
      %cst_214 = arith.constant 1.024000e+03 : f32
      %439 = vector.broadcast %cst_214 : f32 to vector<1x1xf32>
      %440 = arith.divf %438, %439 : vector<1x1xf32>
      %441 = tpu.iota {dimensions = array<i32: 1>} : vector<1x128xi32>
      %cst_215 = arith.constant 0.000000e+00 : f32
      %442 = vector.broadcast %cst_215 : f32 to vector<1x128xf32>
      %c0_i32_216 = arith.constant 0 : i32
      %443 = vector.broadcast %c0_i32_216 : i32 to vector<1x128xi32>
      %444 = arith.cmpi eq, %441, %443 : vector<1x128xi32>
      %445 = vector.shape_cast %138 : vector<1x1xf32> to vector<1x1xf32>
      %446 = vector.broadcast %445 : vector<1x1xf32> to vector<1x128xf32>
      %447 = arith.select %444, %446, %442 : vector<1x128xi1>, vector<1x128xf32>
      %c1_i32_217 = arith.constant 1 : i32
      %448 = vector.broadcast %c1_i32_217 : i32 to vector<1x128xi32>
      %449 = arith.cmpi eq, %441, %448 : vector<1x128xi32>
      %450 = vector.shape_cast %266 : vector<1x1xf32> to vector<1x1xf32>
      %451 = vector.broadcast %450 : vector<1x1xf32> to vector<1x128xf32>
      %452 = arith.select %449, %451, %447 : vector<1x128xi1>, vector<1x128xf32>
      %c2_i32 = arith.constant 2 : i32
      %453 = vector.broadcast %c2_i32 : i32 to vector<1x128xi32>
      %454 = arith.cmpi eq, %441, %453 : vector<1x128xi32>
      %455 = vector.shape_cast %186 : vector<1x1xf32> to vector<1x1xf32>
      %456 = vector.broadcast %455 : vector<1x1xf32> to vector<1x128xf32>
      %457 = arith.select %454, %456, %452 : vector<1x128xi1>, vector<1x128xf32>
      %c3_i32 = arith.constant 3 : i32
      %458 = vector.broadcast %c3_i32 : i32 to vector<1x128xi32>
      %459 = arith.cmpi eq, %441, %458 : vector<1x128xi32>
      %460 = vector.shape_cast %427 : vector<1x1xf32> to vector<1x1xf32>
      %461 = vector.broadcast %460 : vector<1x1xf32> to vector<1x128xf32>
      %462 = arith.select %459, %461, %457 : vector<1x128xi1>, vector<1x128xf32>
      %c4_i32 = arith.constant 4 : i32
      %463 = vector.broadcast %c4_i32 : i32 to vector<1x128xi32>
      %464 = arith.cmpi eq, %441, %463 : vector<1x128xi32>
      %465 = vector.shape_cast %440 : vector<1x1xf32> to vector<1x1xf32>
      %466 = vector.broadcast %465 : vector<1x1xf32> to vector<1x128xf32>
      %467 = arith.select %464, %466, %462 : vector<1x128xi1>, vector<1x128xf32>
      %c5_i32 = arith.constant 5 : i32
      %468 = vector.broadcast %c5_i32 : i32 to vector<1x128xi32>
      %469 = arith.cmpi eq, %441, %468 : vector<1x128xi32>
      %470 = vector.shape_cast %431 : vector<1x1xf32> to vector<1x1xf32>
      %471 = vector.broadcast %470 : vector<1x1xf32> to vector<1x128xf32>
      %472 = arith.select %469, %471, %467 : vector<1x128xi1>, vector<1x128xf32>
      %c0_218 = arith.constant 0 : index
      %c0_219 = arith.constant 0 : index
      %473 = vector.load %arg18[%c0_218, %c0_219] : memref<1x128xf32, #tpu.memory_space<vmem>>, vector<1x128xf32>
      tpu.vector_store %arg18[%c0_218, %c0_219], %472 {strides = array<i32>} : memref<1x128xf32, #tpu.memory_space<vmem>>, vector<1x128xf32>,
    } else {
    }
    return
  }
  func.func @transform_0(%arg0: i32) -> (i32, i32) {
    %c0_i32 = arith.constant 0 : i32
    %c0_i32_0 = arith.constant 0 : i32
    return %c0_i32, %arg0 : i32, i32
  }
  func.func @transform_1(%arg0: i32) -> (i32, i32) {
    %c0_i32 = arith.constant 0 : i32
    %c0_i32_0 = arith.constant 0 : i32
    return %c0_i32, %arg0 : i32, i32
  }
  func.func @transform_2(%arg0: i32) -> (i32, i32) {
    %c0_i32 = arith.constant 0 : i32
    %c0_i32_0 = arith.constant 0 : i32
    %c0_i32_1 = arith.constant 0 : i32
    return %c0_i32, %c0_i32_0 : i32, i32
  }
  func.func @transform_3(%arg0: i32) -> (i32, i32) {
    %c0_i32 = arith.constant 0 : i32
    %c0_i32_0 = arith.constant 0 : i32
    %c0_i32_1 = arith.constant 0 : i32
    return %c0_i32, %c0_i32_0 : i32, i32
  }
  func.func @transform_4(%arg0: i32) -> (i32, i32) {
    %c0_i32 = arith.constant 0 : i32
    %c0_i32_0 = arith.constant 0 : i32
    %c0_i32_1 = arith.constant 0 : i32
    return %c0_i32, %c0_i32_0 : i32, i32
  }
  func.func @transform_5(%arg0: i32) -> (i32, i32) {
    %c0_i32 = arith.constant 0 : i32
    %c0_i32_0 = arith.constant 0 : i32
    return %c0_i32, %arg0 : i32, i32
  }
  func.func @transform_6(%arg0: i32) -> (i32, i32) {
    %c0_i32 = arith.constant 0 : i32
    %c0_i32_0 = arith.constant 0 : i32
    return %c0_i32, %arg0 : i32, i32
  }
  func.func @transform_7(%arg0: i32) -> (i32, i32) {
    %c0_i32 = arith.constant 0 : i32
    %c0_i32_0 = arith.constant 0 : i32
    return %c0_i32, %arg0 : i32, i32
  }
  func.func @transform_8(%arg0: i32) -> (i32, i32) {
    %c0_i32 = arith.constant 0 : i32
    %c0_i32_0 = arith.constant 0 : i32
    %c0_i32_1 = arith.constant 0 : i32
    return %c0_i32, %c0_i32_0 : i32, i32
  }
  func.func @transform_9(%arg0: i32) -> (i32, i32) {
    %c0_i32 = arith.constant 0 : i32
    %c0_i32_0 = arith.constant 0 : i32
    %c0_i32_1 = arith.constant 0 : i32
    return %c0_i32, %c0_i32_0 : i32, i32
  }
  func.func @transform_10(%arg0: i32) -> (i32, i32) {
    %c0_i32 = arith.constant 0 : i32
    %c0_i32_0 = arith.constant 0 : i32
    %c0_i32_1 = arith.constant 0 : i32
    return %c0_i32, %c0_i32_0 : i32, i32
  }
  func.func @transform_11(%arg0: i32) -> (i32, i32) {
    %c0_i32 = arith.constant 0 : i32
    %c0_i32_0 = arith.constant 0 : i32
    %c0_i32_1 = arith.constant 0 : i32
    return %c0_i32, %c0_i32_0 : i32, i32
  }
  func.func @transform_12(%arg0: i32) -> (i32, i32) {
    %c0_i32 = arith.constant 0 : i32
    %c0_i32_0 = arith.constant 0 : i32
    %c0_i32_1 = arith.constant 0 : i32
    return %c0_i32, %c0_i32_0 : i32, i32
  }
  func.func @transform_13(%arg0: i32) -> (i32, i32) {
    %c0_i32 = arith.constant 0 : i32
    %c0_i32_0 = arith.constant 0 : i32
    %c0_i32_1 = arith.constant 0 : i32
    return %c0_i32, %c0_i32_0 : i32, i32
  }
  func.func @transform_14(%arg0: i32) -> (i32, i32) {
    %c0_i32 = arith.constant 0 : i32
    %c0_i32_0 = arith.constant 0 : i32
    %c0_i32_1 = arith.constant 0 : i32
    return %c0_i32, %c0_i32_0 : i32, i32
  }
  func.func @transform_15(%arg0: i32) -> (i32, i32) {
    %c0_i32 = arith.constant 0 : i32
    %c0_i32_0 = arith.constant 0 : i32
    %c0_i32_1 = arith.constant 0 : i32
    return %c0_i32, %c0_i32_0 : i32, i32
  }
  func.func @transform_16(%arg0: i32) -> (i32, i32) {
    %c0_i32 = arith.constant 0 : i32
    %c0_i32_0 = arith.constant 0 : i32
    %c0_i32_1 = arith.constant 0 : i32
    return %c0_i32, %c0_i32_0 : i32, i32
  }
  func.func @transform_17(%arg0: i32) -> (i32, i32) {
    %c0_i32 = arith.constant 0 : i32
    %c0_i32_0 = arith.constant 0 : i32
    %c0_i32_1 = arith.constant 0 : i32
    return %c0_i32, %c0_i32_0 : i32, i32
  }
}

</mosaic_0001>

<llo_original>
// kernel: _forward_impl.1
$region0: #{_forward_impl.1}
  #allocation0 [shape = 'u32[]', space=smem, size = 0x4, offset = 0x4, fixed_abs, tag = 'smem constant byte address 0x4 - core index']
  #allocation1 [shape = 'u32[144,128]{1,0:T(1,128)}', space=vmem, size = 0x12000, scoped, tag = 'internal scratch']
  #allocation2 [shape = 'f32[1,1]{1,0:T(1,128)}', space=vmem, size = 0x200, scoped, tag = 'scratch operand']
  #allocation3 [shape = 'f32[3,8,1]{2,1,0:T(8,128)}', space=vmem, size = 0x3000, scoped, tag = 'scratch operand']
  #allocation4 [shape = 'f32[3,8,1]{2,1,0:T(8,128)}', space=vmem, size = 0x3000, scoped, tag = 'scratch operand']
  #allocation5 [shape = 'f32[3,8,1]{2,1,0:T(8,128)}', space=vmem, size = 0x3000, scoped, tag = 'scratch operand']
  %s0 = inlined_call_operand.vmem [shape: f32[8,256], index: 0, kind: input, shape index: {}]
  %s1 = inlined_call_operand.vmem [shape: f32[8,256], index: 1, kind: input, shape index: {}]
  %s2 = inlined_call_operand.hbm [shape: f32[8,32], index: 2, kind: input, shape index: {}]
  %s3 = inlined_call_operand.hbm [shape: f32[8,32], index: 3, kind: input, shape index: {}]
  %s4 = inlined_call_operand.vmem [shape: f32[8,32], index: 4, kind: input, shape index: {}]
  %s5 = inlined_call_operand.hbm [shape: f32[8,256], index: 5, kind: input, shape index: {}]
  %s6 = inlined_call_operand.hbm [shape: f32[8,256], index: 6, kind: input, shape index: {}]
  %s7 = inlined_call_operand.hbm [shape: f32[8,256], index: 7, kind: input, shape index: {}]
  %s8 = inlined_call_operand.vmem [shape: s32[8,1], index: 8, kind: input, shape index: {}]
  %s9 = inlined_call_operand.vmem [shape: s32[8,1], index: 9, kind: input, shape index: {}]
  %s10 = inlined_call_operand.vmem [shape: s32[8,1], index: 10, kind: input, shape index: {}]
  %s11 = inlined_call_operand.vmem [shape: s32[1,8], index: 11, kind: input, shape index: {}]
  %s12 = inlined_call_operand.vmem [shape: s32[1,8], index: 12, kind: input, shape index: {}]
  %s13 = inlined_call_operand.vmem [shape: f32[32,128], index: 13, kind: input, shape index: {}]
  %s14 = inlined_call_operand.vmem [shape: f32[1,128], index: 14, kind: input, shape index: {}, may-alias: {14,16}]
  %s15 = inlined_call_operand.hbm [shape: f32[128,128], index: 15, kind: input, shape index: {}]
  %s16 = inlined_call_operand.vmem [shape: f32[1,128], index: 16, kind: input, shape index: {}, may-alias: {14,16}]
  %s17 = inlined_call_operand.vmem [shape: f32[1,128], index: 17, kind: output, shape index: {}]
  %s18 = sld [smem:[#allocation0]]
  $region133: #{_forward_impl.1} parent=0
    _
  %s20 = ssub.s32 1, %s18
  %s21 = scalar_select 0, %s20, %s18
  $region1: #{_forward_impl.1} parent=0
    #allocation6 [shape = 'u8[4096]{0}', space=vmem, size = 0x1000, scoped, tag = 'input window, operand 2, single buffered']
    #allocation7 [shape = 's32[2]{0}', space=sflag, size = 0x8, scoped, tag = 'scoped memory for _forward_impl.1']
    #allocation8 [shape = 'u8[4096]{0}', space=vmem, size = 0x1000, scoped, tag = 'input window, operand 3, single buffered']
    #allocation9 [shape = 's32[1]{0}', space=sflag, size = 0x4, scoped, tag = 'scoped memory for _forward_impl.1']
    #allocation10 [shape = 'u8[8192]{0}', space=vmem, size = 0x2000, scoped, tag = 'input window, operand 5']
    #allocation11 [shape = 'u8[8192]{0}', space=vmem, size = 0x2000, scoped, tag = 'input window, operand 6']
    #allocation12 [shape = 'u8[8192]{0}', space=vmem, size = 0x2000, scoped, tag = 'input window, operand 7']
    #allocation13 [shape = 'u8[65536]{0}', space=vmem, size = 0x10000, scoped, tag = 'input window, operand 15, single buffered']
    %22 = vsyncpa [#allocation7], 0
    %23 = vsyncpa [#allocation9], 0
    loop: start=0, step=1, limit=4
    $region2: #{_forward_impl.1} parent=1 // loop_pre_header
      _
    $region3: #{_forward_impl.1} parent=1 // loop_header
      %s25 = sphi 0, %s29
      %p26 = scmp.ge.s32.totalorder %s25, 4
      %s35 = sphi 0, %s37
      %s38 = sphi 0, %s35
      %s39 = sphi 0, %s38
      %s55 = sphi 0, %s39
      %s61 = sphi 0, %s63
      %s64 = sphi 0, %s61
      %s65 = sphi 0, %s64
      %s81 = sphi 0, %s65
      %s85 = sphi 0, %s85
      %s87 = sphi 0, %s85
      %s88 = sphi 0, %s87
      %s102 = sphi 0, %s88
      %s106 = sphi 0, %s106
      %s108 = sphi 0, %s106
      %s109 = sphi 0, %s108
      %s123 = sphi 0, %s109
      %s127 = sphi 0, %s127
      %s129 = sphi 0, %s127
      %s130 = sphi 0, %s129
      %s144 = sphi 0, %s130
      %s150 = sphi 0, %s152
      %s153 = sphi 0, %s150
      %s154 = sphi 0, %s153
      %s170 = sphi 0, %s154
      %s176 = sphi 0, %s178
      %s179 = sphi 0, %s176
      %s180 = sphi 0, %s179
      %s196 = sphi 0, %s180
      %s202 = sphi 0, %s204
      %s205 = sphi 0, %s202
      %s206 = sphi 0, %s205
      %s222 = sphi 0, %s206
      %s226 = sphi 0, %s226
      %s228 = sphi 0, %s226
      %s229 = sphi 0, %s228
      %s243 = sphi 0, %s229
      %s247 = sphi 0, %s247
      %s249 = sphi 0, %s247
      %s250 = sphi 0, %s249
      %s264 = sphi 0, %s250
      %s268 = sphi 0, %s268
      %s270 = sphi 0, %s268
      %s271 = sphi 0, %s270
      %s285 = sphi 0, %s271
      %s289 = sphi 0, %s289
      %s291 = sphi 0, %s289
      %s292 = sphi 0, %s291
      %s306 = sphi 0, %s292
      %s310 = sphi 0, %s310
      %s312 = sphi 0, %s310
      %s313 = sphi 0, %s312
      %s327 = sphi 0, %s313
      %s331 = sphi 0, %s331
      %s333 = sphi 0, %s331
      %s334 = sphi 0, %s333
      %s348 = sphi 0, %s334
      %s352 = sphi 0, %s352
      %s354 = sphi 0, %s352
      %s355 = sphi 0, %s354
      %s369 = sphi 0, %s355
      %s373 = sphi 0, %s373
      %s375 = sphi 0, %s373
      %s376 = sphi 0, %s375
      %s390 = sphi 0, %s376
      %s394 = sphi 0, %s394
      %s396 = sphi 0, %s394
      %s397 = sphi 0, %s396
      %s411 = sphi 0, %s397
      %s415 = sphi 0, %s415
      %s417 = sphi 0, %s415
      %s418 = sphi 0, %s417
      %s432 = sphi 0, %s418
    $region4: #{_forward_impl.1} parent=1 // loop_header_branch
      %28 = sbr.rel (%p26) target = $region8
    $region5: #{_forward_impl.1} parent=1 // loop_body
      %s30 = ssub.s32 %s25, 1
      %s31 = ssub.s32 %s25, 2
      %s32 = sadd.s32 %s25, 1
      %s33 = ssub.s32 %s25, %s32
      %p34 = scmp.eq.s32.totalorder %s33, 0
      %s36 = sadd.s32 %s35, 1
      %s37 = scalar_select %p34, %s35, %s36
      %p40 = pneg %p34
      %p41 = scmp.eq.s32.totalorder %s25, 1
      %p42 = por %p40, %p41
      %p43 = scmp.ne.s32.totalorder %s35, %s38
      %p44 = scmp.eq.s32.totalorder %s25, 0
      %p45 = por %p43, %p44
      %p46 = scmp.ne.s32.totalorder %s35, %s38
      %p47 = scmp.eq.s32.totalorder %s30, 1
      %p48 = por %p46, %p47
      %p49 = scmp.ne.s32.totalorder %s38, %s39
      %p50 = scmp.eq.s32.totalorder %s30, 0
      %p51 = por %p49, %p50
      %p52 = scmp.ne.s32.totalorder %s38, %s39
      %p53 = scmp.eq.s32.totalorder %s31, 1
      %p54 = por %p52, %p53
      %p56 = scmp.ne.s32.totalorder %s39, %s55
      %p57 = scmp.eq.s32.totalorder %s31, 0
      %p58 = por %p56, %p57
      %s59 = ssub.s32 %s25, %s32
      %p60 = scmp.eq.s32.totalorder %s59, 0
      %s62 = sadd.s32 %s61, 1
      %s63 = scalar_select %p60, %s61, %s62
      %p66 = pneg %p60
      %p67 = scmp.eq.s32.totalorder %s25, 1
      %p68 = por %p66, %p67
      %p69 = scmp.ne.s32.totalorder %s61, %s64
      %p70 = scmp.eq.s32.totalorder %s25, 0
      %p71 = por %p69, %p70
      %p72 = scmp.ne.s32.totalorder %s61, %s64
      %p73 = scmp.eq.s32.totalorder %s30, 1
      %p74 = por %p72, %p73
      %p75 = scmp.ne.s32.totalorder %s64, %s65
      %p76 = scmp.eq.s32.totalorder %s30, 0
      %p77 = por %p75, %p76
      %p78 = scmp.ne.s32.totalorder %s64, %s65
      %p79 = scmp.eq.s32.totalorder %s31, 1
      %p80 = por %p78, %p79
      %p82 = scmp.ne.s32.totalorder %s65, %s81
      %p83 = scmp.eq.s32.totalorder %s31, 0
      %p84 = por %p82, %p83
      %s86 = sadd.s32 %s85, 1
      %p89 = scmp.eq.s32.totalorder %s25, 1
      %p90 = scmp.ne.s32.totalorder %s85, %s87
      %p91 = scmp.eq.s32.totalorder %s25, 0
      %p92 = por %p90, %p91
      %p93 = scmp.ne.s32.totalorder %s85, %s87
      %p94 = scmp.eq.s32.totalorder %s30, 1
      %p95 = por %p93, %p94
      %p96 = scmp.ne.s32.totalorder %s87, %s88
      %p97 = scmp.eq.s32.totalorder %s30, 0
      %p98 = por %p96, %p97
      %p99 = scmp.ne.s32.totalorder %s87, %s88
      %p100 = scmp.eq.s32.totalorder %s31, 1
      %p101 = por %p99, %p100
      %p103 = scmp.ne.s32.totalorder %s88, %s102
      %p104 = scmp.eq.s32.totalorder %s31, 0
      %p105 = por %p103, %p104
      %s107 = sadd.s32 %s106, 1
      %p110 = scmp.eq.s32.totalorder %s25, 1
      %p111 = scmp.ne.s32.totalorder %s106, %s108
      %p112 = scmp.eq.s32.totalorder %s25, 0
      %p113 = por %p111, %p112
      %p114 = scmp.ne.s32.totalorder %s106, %s108
      %p115 = scmp.eq.s32.totalorder %s30, 1
      %p116 = por %p114, %p115
      %p117 = scmp.ne.s32.totalorder %s108, %s109
      %p118 = scmp.eq.s32.totalorder %s30, 0
      %p119 = por %p117, %p118
      %p120 = scmp.ne.s32.totalorder %s108, %s109
      %p121 = scmp.eq.s32.totalorder %s31, 1
      %p122 = por %p120, %p121
      %p124 = scmp.ne.s32.totalorder %s109, %s123
      %p125 = scmp.eq.s32.totalorder %s31, 0
      %p126 = por %p124, %p125
      %s128 = sadd.s32 %s127, 1
      %p131 = scmp.eq.s32.totalorder %s25, 1
      %p132 = scmp.ne.s32.totalorder %s127, %s129
      %p133 = scmp.eq.s32.totalorder %s25, 0
      %p134 = por %p132, %p133
      %p135 = scmp.ne.s32.totalorder %s127, %s129
      %p136 = scmp.eq.s32.totalorder %s30, 1
      %p137 = por %p135, %p136
      %p138 = scmp.ne.s32.totalorder %s129, %s130
      %p139 = scmp.eq.s32.totalorder %s30, 0
      %p140 = por %p138, %p139
      %p141 = scmp.ne.s32.totalorder %s129, %s130
      %p142 = scmp.eq.s32.totalorder %s31, 1
      %p143 = por %p141, %p142
      %p145 = scmp.ne.s32.totalorder %s130, %s144
      %p146 = scmp.eq.s32.totalorder %s31, 0
      %p147 = por %p145, %p146
      %s148 = ssub.s32 %s25, %s32
      %p149 = scmp.eq.s32.totalorder %s148, 0
      %s151 = sadd.s32 %s150, 1
      %s152 = scalar_select %p149, %s150, %s151
      %p155 = pneg %p149
      %p156 = scmp.eq.s32.totalorder %s25, 1
      %p157 = por %p155, %p156
      %p158 = scmp.ne.s32.totalorder %s150, %s153
      %p159 = scmp.eq.s32.totalorder %s25, 0
      %p160 = por %p158, %p159
      %p161 = scmp.ne.s32.totalorder %s150, %s153
      %p162 = scmp.eq.s32.totalorder %s30, 1
      %p163 = por %p161, %p162
      %p164 = scmp.ne.s32.totalorder %s153, %s154
      %p165 = scmp.eq.s32.totalorder %s30, 0
      %p166 = por %p164, %p165
      %p167 = scmp.ne.s32.totalorder %s153, %s154
      %p168 = scmp.eq.s32.totalorder %s31, 1
      %p169 = por %p167, %p168
      %p171 = scmp.ne.s32.totalorder %s154, %s170
      %p172 = scmp.eq.s32.totalorder %s31, 0
      %p173 = por %p171, %p172
      %s174 = ssub.s32 %s25, %s32
      %p175 = scmp.eq.s32.totalorder %s174, 0
      %s177 = sadd.s32 %s176, 1
      %s178 = scalar_select %p175, %s176, %s177
      %p181 = pneg %p175
      %p182 = scmp.eq.s32.totalorder %s25, 1
      %p183 = por %p181, %p182
      %p184 = scmp.ne.s32.totalorder %s176, %s179
      %p185 = scmp.eq.s32.totalorder %s25, 0
      %p186 = por %p184, %p185
      %p187 = scmp.ne.s32.totalorder %s176, %s179
      %p188 = scmp.eq.s32.totalorder %s30, 1
      %p189 = por %p187, %p188
      %p190 = scmp.ne.s32.totalorder %s179, %s180
      %p191 = scmp.eq.s32.totalorder %s30, 0
      %p192 = por %p190, %p191
      %p193 = scmp.ne.s32.totalorder %s179, %s180
      %p194 = scmp.eq.s32.totalorder %s31, 1
      %p195 = por %p193, %p194
      %p197 = scmp.ne.s32.totalorder %s180, %s196
      %p198 = scmp.eq.s32.totalorder %s31, 0
      %p199 = por %p197, %p198
      %s200 = ssub.s32 %s25, %s32
      %p201 = scmp.eq.s32.totalorder %s200, 0
      %s203 = sadd.s32 %s202, 1
      %s204 = scalar_select %p201, %s202, %s203
      %p207 = pneg %p201
      %p208 = scmp.eq.s32.totalorder %s25, 1
      %p209 = por %p207, %p208
      %p210 = scmp.ne.s32.totalorder %s202, %s205
      %p211 = scmp.eq.s32.totalorder %s25, 0
      %p212 = por %p210, %p211
      %p213 = scmp.ne.s32.totalorder %s202, %s205
      %p214 = scmp.eq.s32.totalorder %s30, 1
      %p215 = por %p213, %p214
      %p216 = scmp.ne.s32.totalorder %s205, %s206
      %p217 = scmp.eq.s32.totalorder %s30, 0
      %p218 = por %p216, %p217
      %p219 = scmp.ne.s32.totalorder %s205, %s206
      %p220 = scmp.eq.s32.totalorder %s31, 1
      %p221 = por %p219, %p220
      %p223 = scmp.ne.s32.totalorder %s206, %s222
      %p224 = scmp.eq.s32.totalorder %s31, 0
      %p225 = por %p223, %p224
      %s227 = sadd.s32 %s226, 1
      %p230 = scmp.eq.s32.totalorder %s25, 1
      %p231 = scmp.ne.s32.totalorder %s226, %s228
      %p232 = scmp.eq.s32.totalorder %s25, 0
      %p233 = por %p231, %p232
      %p234 = scmp.ne.s32.totalorder %s226, %s228
      %p235 = scmp.eq.s32.totalorder %s30, 1
      %p236 = por %p234, %p235
      %p237 = scmp.ne.s32.totalorder %s228, %s229
      %p238 = scmp.eq.s32.totalorder %s30, 0
      %p239 = por %p237, %p238
      %p240 = scmp.ne.s32.totalorder %s228, %s229
      %p241 = scmp.eq.s32.totalorder %s31, 1
      %p242 = por %p240, %p241
      %p244 = scmp.ne.s32.totalorder %s229, %s243
      %p245 = scmp.eq.s32.totalorder %s31, 0
      %p246 = por %p244, %p245
      %s248 = sadd.s32 %s247, 1
      %p251 = scmp.eq.s32.totalorder %s25, 1
      %p252 = scmp.ne.s32.totalorder %s247, %s249
      %p253 = scmp.eq.s32.totalorder %s25, 0
      %p254 = por %p252, %p253
      %p255 = scmp.ne.s32.totalorder %s247, %s249
      %p256 = scmp.eq.s32.totalorder %s30, 1
      %p257 = por %p255, %p256
      %p258 = scmp.ne.s32.totalorder %s249, %s250
      %p259 = scmp.eq.s32.totalorder %s30, 0
      %p260 = por %p258, %p259
      %p261 = scmp.ne.s32.totalorder %s249, %s250
      %p262 = scmp.eq.s32.totalorder %s31, 1
      %p263 = por %p261, %p262
      %p265 = scmp.ne.s32.totalorder %s250, %s264
      %p266 = scmp.eq.s32.totalorder %s31, 0
      %p267 = por %p265, %p266
      %s269 = sadd.s32 %s268, 1
      %p272 = scmp.eq.s32.totalorder %s25, 1
      %p273 = scmp.ne.s32.totalorder %s268, %s270
      %p274 = scmp.eq.s32.totalorder %s25, 0
      %p275 = por %p273, %p274
      %p276 = scmp.ne.s32.totalorder %s268, %s270
      %p277 = scmp.eq.s32.totalorder %s30, 1
      %p278 = por %p276, %p277
      %p279 = scmp.ne.s32.totalorder %s270, %s271
      %p280 = scmp.eq.s32.totalorder %s30, 0
      %p281 = por %p279, %p280
      %p282 = scmp.ne.s32.totalorder %s270, %s271
      %p283 = scmp.eq.s32.totalorder %s31, 1
      %p284 = por %p282, %p283
      %p286 = scmp.ne.s32.totalorder %s271, %s285
      %p287 = scmp.eq.s32.totalorder %s31, 0
      %p288 = por %p286, %p287
      %s290 = sadd.s32 %s289, 1
      %p293 = scmp.eq.s32.totalorder %s25, 1
      %p294 = scmp.ne.s32.totalorder %s289, %s291
      %p295 = scmp.eq.s32.totalorder %s25, 0
      %p296 = por %p294, %p295
      %p297 = scmp.ne.s32.totalorder %s289, %s291
      %p298 = scmp.eq.s32.totalorder %s30, 1
      %p299 = por %p297, %p298
      %p300 = scmp.ne.s32.totalorder %s291, %s292
      %p301 = scmp.eq.s32.totalorder %s30, 0
      %p302 = por %p300, %p301
      %p303 = scmp.ne.s32.totalorder %s291, %s292
      %p304 = scmp.eq.s32.totalorder %s31, 1
      %p305 = por %p303, %p304
      %p307 = scmp.ne.s32.totalorder %s292, %s306
      %p308 = scmp.eq.s32.totalorder %s31, 0
      %p309 = por %p307, %p308
      %s311 = sadd.s32 %s310, 1
      %p314 = scmp.eq.s32.totalorder %s25, 1
      %p315 = scmp.ne.s32.totalorder %s310, %s312
      %p316 = scmp.eq.s32.totalorder %s25, 0
      %p317 = por %p315, %p316
      %p318 = scmp.ne.s32.totalorder %s310, %s312
      %p319 = scmp.eq.s32.totalorder %s30, 1
      %p320 = por %p318, %p319
      %p321 = scmp.ne.s32.totalorder %s312, %s313
      %p322 = scmp.eq.s32.totalorder %s30, 0
      %p323 = por %p321, %p322
      %p324 = scmp.ne.s32.totalorder %s312, %s313
      %p325 = scmp.eq.s32.totalorder %s31, 1
      %p326 = por %p324, %p325
      %p328 = scmp.ne.s32.totalorder %s313, %s327
      %p329 = scmp.eq.s32.totalorder %s31, 0
      %p330 = por %p328, %p329
      %s332 = sadd.s32 %s331, 1
      %p335 = scmp.eq.s32.totalorder %s25, 1
      %p336 = scmp.ne.s32.totalorder %s331, %s333
      %p337 = scmp.eq.s32.totalorder %s25, 0
      %p338 = por %p336, %p337
      %p339 = scmp.ne.s32.totalorder %s331, %s333
      %p340 = scmp.eq.s32.totalorder %s30, 1
      %p341 = por %p339, %p340
      %p342 = scmp.ne.s32.totalorder %s333, %s334
      %p343 = scmp.eq.s32.totalorder %s30, 0
      %p344 = por %p342, %p343
      %p345 = scmp.ne.s32.totalorder %s333, %s334
      %p346 = scmp.eq.s32.totalorder %s31, 1
      %p347 = por %p345, %p346
      %p349 = scmp.ne.s32.totalorder %s334, %s348
      %p350 = scmp.eq.s32.totalorder %s31, 0
      %p351 = por %p349, %p350
      %s353 = sadd.s32 %s352, 1
      %p356 = scmp.eq.s32.totalorder %s25, 1
      %p357 = scmp.ne.s32.totalorder %s352, %s354
      %p358 = scmp.eq.s32.totalorder %s25, 0
      %p359 = por %p357, %p358
      %p360 = scmp.ne.s32.totalorder %s352, %s354
      %p361 = scmp.eq.s32.totalorder %s30, 1
      %p362 = por %p360, %p361
      %p363 = scmp.ne.s32.totalorder %s354, %s355
      %p364 = scmp.eq.s32.totalorder %s30, 0
      %p365 = por %p363, %p364
      %p366 = scmp.ne.s32.totalorder %s354, %s355
      %p367 = scmp.eq.s32.totalorder %s31, 1
      %p368 = por %p366, %p367
      %p370 = scmp.ne.s32.totalorder %s355, %s369
      %p371 = scmp.eq.s32.totalorder %s31, 0
      %p372 = por %p370, %p371
      %s374 = sadd.s32 %s373, 1
      %p377 = scmp.eq.s32.totalorder %s25, 1
      %p378 = scmp.ne.s32.totalorder %s373, %s375
      %p379 = scmp.eq.s32.totalorder %s25, 0
      %p380 = por %p378, %p379
      %p381 = scmp.ne.s32.totalorder %s373, %s375
      %p382 = scmp.eq.s32.totalorder %s30, 1
      %p383 = por %p381, %p382
      %p384 = scmp.ne.s32.totalorder %s375, %s376
      %p385 = scmp.eq.s32.totalorder %s30, 0
      %p386 = por %p384, %p385
      %p387 = scmp.ne.s32.totalorder %s375, %s376
      %p388 = scmp.eq.s32.totalorder %s31, 1
      %p389 = por %p387, %p388
      %p391 = scmp.ne.s32.totalorder %s376, %s390
      %p392 = scmp.eq.s32.totalorder %s31, 0
      %p393 = por %p391, %p392
      %s395 = sadd.s32 %s394, 1
      %p398 = scmp.eq.s32.totalorder %s25, 1
      %p399 = scmp.ne.s32.totalorder %s394, %s396
      %p400 = scmp.eq.s32.totalorder %s25, 0
      %p401 = por %p399, %p400
      %p402 = scmp.ne.s32.totalorder %s394, %s396
      %p403 = scmp.eq.s32.totalorder %s30, 1
      %p404 = por %p402, %p403
      %p405 = scmp.ne.s32.totalorder %s396, %s397
      %p406 = scmp.eq.s32.totalorder %s30, 0
      %p407 = por %p405, %p406
      %p408 = scmp.ne.s32.totalorder %s396, %s397
      %p409 = scmp.eq.s32.totalorder %s31, 1
      %p410 = por %p408, %p409
      %p412 = scmp.ne.s32.totalorder %s397, %s411
      %p413 = scmp.eq.s32.totalorder %s31, 0
      %p414 = por %p412, %p413
      %s416 = sadd.s32 %s415, 1
      %p419 = scmp.eq.s32.totalorder %s25, 1
      %p420 = scmp.ne.s32.totalorder %s415, %s417
      %p421 = scmp.eq.s32.totalorder %s25, 0
      %p422 = por %p420, %p421
      %p423 = scmp.ne.s32.totalorder %s415, %s417
      %p424 = scmp.eq.s32.totalorder %s30, 1
      %p425 = por %p423, %p424
      %p426 = scmp.ne.s32.totalorder %s417, %s418
      %p427 = scmp.eq.s32.totalorder %s30, 0
      %p428 = por %p426, %p427
      %p429 = scmp.ne.s32.totalorder %s417, %s418
      %p430 = scmp.eq.s32.totalorder %s31, 1
      %p431 = por %p429, %p430
      %p433 = scmp.ne.s32.totalorder %s418, %s432
      %p434 = scmp.eq.s32.totalorder %s31, 0
      %p435 = por %p433, %p434
      %p436 = scmp.le.s32.totalorder 1, %s25
      %p437 = scmp.lt.s32.totalorder %s25, 3
      %p438 = pnand %p436, %p437
      %p439 = pneg %p438
      // Predicated region
      $region9: #{_forward_impl.1} parent=5 // pred_check
        _
      $region10: #{_forward_impl.1} parent=5 // pred_check_branch
        %441 = sbr.rel (%p438) target = $region12
      $region11: #{_forward_impl.1} parent=5 // pred_region
        %s442 = ssub.s32 %s25, 1
        // Predicated region
        $region13: #{_forward_impl.1} parent=11 // pred_check
          %p443 = pneg %p98
        $region14: #{_forward_impl.1} parent=11 // pred_check_branch
          %445 = sbr.rel (%p443) target = $region16
        $region15: #{_forward_impl.1} parent=11 // pred_region
          %s447 = ssub.s32 128, 128
          %448 = vsyncadd [#allocation7], %s447
          %s450 = sshll.u32 [#allocation6], 4
          %s451 = int_to_ptr.vmem [resolvable:$true] %s450
          %453 = dma.hbm_to_vmem [thread:$0]  %s2, 128, %s451, [#allocation7]
        $region16: #{_forward_impl.1} parent=11 // pred_fallthru
          _
        // Predicated region
        $region17: #{_forward_impl.1} parent=11 // pred_check
          %p454 = pneg %p119
        $region18: #{_forward_impl.1} parent=11 // pred_check_branch
          %456 = sbr.rel (%p454) target = $region20
        $region19: #{_forward_impl.1} parent=11 // pred_region
          %s458 = ssub.s32 128, 128
          %459 = vsyncadd [#allocation9], %s458
          %s461 = sshll.u32 [#allocation8], 4
          %s462 = int_to_ptr.vmem [resolvable:$true] %s461
          %464 = dma.hbm_to_vmem [thread:$0]  %s3, 128, %s462, [#allocation9]
        $region20: #{_forward_impl.1} parent=11 // pred_fallthru
          _
        // Predicated region
        $region21: #{_forward_impl.1} parent=11 // pred_check
          %p465 = pneg %p140
        $region22: #{_forward_impl.1} parent=11 // pred_check_branch
          %467 = sbr.rel (%p465) target = $region24
        $region23: #{_forward_impl.1} parent=11 // pred_region
          _
        $region24: #{_forward_impl.1} parent=11 // pred_fallthru
          _
        // Predicated region
        $region25: #{_forward_impl.1} parent=11 // pred_check
          %p468 = pneg %p239
        $region26: #{_forward_impl.1} parent=11 // pred_check_branch
          %470 = sbr.rel (%p468) target = $region28
        $region27: #{_forward_impl.1} parent=11 // pred_region
          _
        $region28: #{_forward_impl.1} parent=11 // pred_fallthru
          _
        // Predicated region
        $region29: #{_forward_impl.1} parent=11 // pred_check
          %p471 = pneg %p260
        $region30: #{_forward_impl.1} parent=11 // pred_check_branch
          %473 = sbr.rel (%p471) target = $region32
        $region31: #{_forward_impl.1} parent=11 // pred_region
          _
        $region32: #{_forward_impl.1} parent=11 // pred_fallthru
          _
        // Predicated region
        $region33: #{_forward_impl.1} parent=11 // pred_check
          %p474 = pneg %p281
        $region34: #{_forward_impl.1} parent=11 // pred_check_branch
          %476 = sbr.rel (%p474) target = $region36
        $region35: #{_forward_impl.1} parent=11 // pred_region
          _
        $region36: #{_forward_impl.1} parent=11 // pred_fallthru
          _
        // Predicated region
        $region37: #{_forward_impl.1} parent=11 // pred_check
          %p477 = pneg %p302
        $region38: #{_forward_impl.1} parent=11 // pred_check_branch
          %479 = sbr.rel (%p477) target = $region40
        $region39: #{_forward_impl.1} parent=11 // pred_region
          _
        $region40: #{_forward_impl.1} parent=11 // pred_fallthru
          _
        // Predicated region
        $region41: #{_forward_impl.1} parent=11 // pred_check
          %p480 = pneg %p323
        $region42: #{_forward_impl.1} parent=11 // pred_check_branch
          %482 = sbr.rel (%p480) target = $region44
        $region43: #{_forward_impl.1} parent=11 // pred_region
          _
        $region44: #{_forward_impl.1} parent=11 // pred_fallthru
          _
        // Predicated region
        $region45: #{_forward_impl.1} parent=11 // pred_check
          %p483 = pneg %p344
        $region46: #{_forward_impl.1} parent=11 // pred_check_branch
          %485 = sbr.rel (%p483) target = $region48
        $region47: #{_forward_impl.1} parent=11 // pred_region
          _
        $region48: #{_forward_impl.1} parent=11 // pred_fallthru
          _
        // Predicated region
        $region49: #{_forward_impl.1} parent=11 // pred_check
          %p486 = pneg %p365
        $region50: #{_forward_impl.1} parent=11 // pred_check_branch
          %488 = sbr.rel (%p486) target = $region52
        $region51: #{_forward_impl.1} parent=11 // pred_region
          _
        $region52: #{_forward_impl.1} parent=11 // pred_fallthru
          _
        // Predicated region
        $region53: #{_forward_impl.1} parent=11 // pred_check
          %p489 = pneg %p386
        $region54: #{_forward_impl.1} parent=11 // pred_check_branch
          %491 = sbr.rel (%p489) target = $region56
        $region55: #{_forward_impl.1} parent=11 // pred_region
          %s493 = ssub.s32 2048, 2048
          %494 = vsyncadd [#allocation9], %s493
          %s495 = sshll.u32 [#allocation13], 4
          %s496 = int_to_ptr.vmem [resolvable:$true] %s495
          %501 = dma.hbm_to_vmem [thread:$0]  %s15, 2048, %s496, [#allocation9], 128, 128, 8
        $region56: #{_forward_impl.1} parent=11 // pred_fallthru
          _
        // Predicated region
        $region57: #{_forward_impl.1} parent=11 // pred_check
          %p502 = pneg %p407
        $region58: #{_forward_impl.1} parent=11 // pred_check_branch
          %504 = sbr.rel (%p502) target = $region60
        $region59: #{_forward_impl.1} parent=11 // pred_region
          _
        $region60: #{_forward_impl.1} parent=11 // pred_fallthru
          _
      $region12: #{_forward_impl.1} parent=5 // pred_fallthru
        _
      %p505 = scmp.lt.s32.totalorder %s25, 2
      // Predicated region
      $region61: #{_forward_impl.1} parent=5 // pred_check
        %p506 = pneg %p505
      $region62: #{_forward_impl.1} parent=5 // pred_check_branch
        %508 = sbr.rel (%p506) target = $region64
      $region63: #{_forward_impl.1} parent=5 // pred_region
        // Predicated region
        $region65: #{_forward_impl.1} parent=63 // pred_check
          %p509 = pneg %p45
        $region66: #{_forward_impl.1} parent=63 // pred_check_branch
          %511 = sbr.rel (%p509) target = $region68
        $region67: #{_forward_impl.1} parent=63 // pred_region
          %p512 = scmp.lt.s32.totalorder %s25, 1
          %s513 = scalar_select %p512, %s25, 1
          %s514 = smul.addr %s513, 8
          %s515 = scalar_lea.vmem %s0, %s514
        $region68: #{_forward_impl.1} parent=63 // pred_fallthru
          _
        // Predicated region
        $region69: #{_forward_impl.1} parent=63 // pred_check
          %p516 = pneg %p71
        $region70: #{_forward_impl.1} parent=63 // pred_check_branch
          %518 = sbr.rel (%p516) target = $region72
        $region71: #{_forward_impl.1} parent=63 // pred_region
          %p519 = scmp.lt.s32.totalorder %s25, 1
          %s520 = scalar_select %p519, %s25, 1
          %s521 = smul.addr %s520, 8
          %s522 = scalar_lea.vmem %s1, %s521
        $region72: #{_forward_impl.1} parent=63 // pred_fallthru
          _
        // Predicated region
        $region73: #{_forward_impl.1} parent=63 // pred_check
          %p523 = pneg %p160
        $region74: #{_forward_impl.1} parent=63 // pred_check_branch
          %525 = sbr.rel (%p523) target = $region76
        $region75: #{_forward_impl.1} parent=63 // pred_region
          %s526 = sand.u32 %s25, 1
          %s527 = scalar_lea.sflag [#allocation7], %s526
          %s528 = sand.u32 %s150, 1
          %s529 = smul.addr %s528, 8
          %s530 = scalar_lea.vmem [#allocation10], %s529
          %s532 = ssub.s32 128, 128
          %533 = vsyncadd %s527, %s532
          %s534 = smul.addr %s25, 128
          %s535 = scalar_lea.hbm %s5, %s534
          %s537 = sshll.u32 %s530, 4
          %s538 = int_to_ptr.vmem [resolvable:$true] %s537
          %540 = dma.hbm_to_vmem [thread:$0]  %s535, 128, %s538, %s527
        $region76: #{_forward_impl.1} parent=63 // pred_fallthru
          _
        // Predicated region
        $region77: #{_forward_impl.1} parent=63 // pred_check
          %p541 = pneg %p186
        $region78: #{_forward_impl.1} parent=63 // pred_check_branch
          %543 = sbr.rel (%p541) target = $region80
        $region79: #{_forward_impl.1} parent=63 // pred_region
          %s544 = sand.u32 %s25, 1
          %s545 = scalar_lea.sflag [#allocation7], %s544
          %s546 = sand.u32 %s176, 1
          %s547 = smul.addr %s546, 8
          %s548 = scalar_lea.vmem [#allocation11], %s547
          %s550 = ssub.s32 128, 128
          %551 = vsyncadd %s545, %s550
          %s552 = smul.addr %s25, 128
          %s553 = scalar_lea.hbm %s6, %s552
          %s555 = sshll.u32 %s548, 4
          %s556 = int_to_ptr.vmem [resolvable:$true] %s555
          %558 = dma.hbm_to_vmem [thread:$0]  %s553, 128, %s556, %s545
        $region80: #{_forward_impl.1} parent=63 // pred_fallthru
          _
        // Predicated region
        $region81: #{_forward_impl.1} parent=63 // pred_check
          %p559 = pneg %p212
        $region82: #{_forward_impl.1} parent=63 // pred_check_branch
          %561 = sbr.rel (%p559) target = $region84
        $region83: #{_forward_impl.1} parent=63 // pred_region
          %s562 = sand.u32 %s25, 1
          %s563 = scalar_lea.sflag [#allocation7], %s562
          %s564 = sand.u32 %s202, 1
          %s565 = smul.addr %s564, 8
          %s566 = scalar_lea.vmem [#allocation12], %s565
          %s568 = ssub.s32 128, 128
          %569 = vsyncadd %s563, %s568
          %s570 = smul.addr %s25, 128
          %s571 = scalar_lea.hbm %s7, %s570
          %s573 = sshll.u32 %s566, 4
          %s574 = int_to_ptr.vmem [resolvable:$true] %s573
          %576 = dma.hbm_to_vmem [thread:$0]  %s571, 128, %s574, %s563
        $region84: #{_forward_impl.1} parent=63 // pred_fallthru
          _
      $region64: #{_forward_impl.1} parent=5 // pred_fallthru
        _
      %p577 = scmp.le.s32.totalorder 1, %s25
      %p578 = scmp.lt.s32.totalorder %s25, 3
      %p579 = pnand %p577, %p578
      %p580 = pneg %p579
      // Predicated region
      $region85: #{_forward_impl.1} parent=5 // pred_check
        _
      $region86: #{_forward_impl.1} parent=5 // pred_check_branch
        %582 = sbr.rel (%p579) target = $region88
      $region87: #{_forward_impl.1} parent=5 // pred_region
        %s583 = ssub.s32 %s25, 1
        // Predicated region
        $region89: #{_forward_impl.1} parent=87 // pred_check
          %p584 = pneg %p98
        $region90: #{_forward_impl.1} parent=87 // pred_check_branch
          %586 = sbr.rel (%p584) target = $region92
        $region91: #{_forward_impl.1} parent=87 // pred_region
          %587 = dma.done [#allocation7], 128
        $region92: #{_forward_impl.1} parent=87 // pred_fallthru
          _
        // Predicated region
        $region93: #{_forward_impl.1} parent=87 // pred_check
          %p588 = pneg %p119
        $region94: #{_forward_impl.1} parent=87 // pred_check_branch
          %590 = sbr.rel (%p588) target = $region96
        $region95: #{_forward_impl.1} parent=87 // pred_region
          %591 = dma.done [#allocation9], 128
        $region96: #{_forward_impl.1} parent=87 // pred_fallthru
          _
        %s592 = sand.u32 %s30, 1
        %s593 = scalar_lea.sflag [#allocation7], %s592
        %s594 = sand.u32 %s153, 1
        %s595 = smul.addr %s594, 8
        %s596 = scalar_lea.vmem [#allocation10], %s595
        // Predicated region
        $region97: #{_forward_impl.1} parent=87 // pred_check
          %p597 = pneg %p166
        $region98: #{_forward_impl.1} parent=87 // pred_check_branch
          %599 = sbr.rel (%p597) target = $region100
        $region99: #{_forward_impl.1} parent=87 // pred_region
          %600 = dma.done %s593, 128
        $region100: #{_forward_impl.1} parent=87 // pred_fallthru
          _
        %s601 = sand.u32 %s30, 1
        %s602 = scalar_lea.sflag [#allocation7], %s601
        %s603 = sand.u32 %s179, 1
        %s604 = smul.addr %s603, 8
        %s605 = scalar_lea.vmem [#allocation11], %s604
        // Predicated region
        $region101: #{_forward_impl.1} parent=87 // pred_check
          %p606 = pneg %p192
        $region102: #{_forward_impl.1} parent=87 // pred_check_branch
          %608 = sbr.rel (%p606) target = $region104
        $region103: #{_forward_impl.1} parent=87 // pred_region
          %609 = dma.done %s602, 128
        $region104: #{_forward_impl.1} parent=87 // pred_fallthru
          _
        %s610 = sand.u32 %s30, 1
        %s611 = scalar_lea.sflag [#allocation7], %s610
        %s612 = sand.u32 %s205, 1
        %s613 = smul.addr %s612, 8
        %s614 = scalar_lea.vmem [#allocation12], %s613
        // Predicated region
        $region105: #{_forward_impl.1} parent=87 // pred_check
          %p615 = pneg %p218
        $region106: #{_forward_impl.1} parent=87 // pred_check_branch
          %617 = sbr.rel (%p615) target = $region108
        $region107: #{_forward_impl.1} parent=87 // pred_region
          %618 = dma.done %s611, 128
        $region108: #{_forward_impl.1} parent=87 // pred_fallthru
          _
        // Predicated region
        $region109: #{_forward_impl.1} parent=87 // pred_check
          %p619 = pneg %p386
        $region110: #{_forward_impl.1} parent=87 // pred_check_branch
          %621 = sbr.rel (%p619) target = $region112
        $region111: #{_forward_impl.1} parent=87 // pred_region
          %622 = dma.done [#allocation9], 2048
        $region112: #{_forward_impl.1} parent=87 // pred_fallthru
          _
        %p623 = scmp.lt.s32.totalorder %s30, 1
        %s624 = scalar_select %p623, %s30, 1
        %s625 = smul.addr %s624, 8
        %s626 = scalar_lea.vmem %s0, %s625
        %p627 = pneg %p51
        %p628 = pneg %p48
        %p629 = scmp.lt.s32.totalorder %s30, 1
        %s630 = scalar_select %p629, %s30, 1
        %s631 = smul.addr %s630, 8
        %s632 = scalar_lea.vmem %s1, %s631
        %p633 = pneg %p77
        %p634 = pneg %p74
        %p635 = pneg %p98
        %p636 = pneg %p95
        %p637 = pneg %p119
        %p638 = pneg %p116
        %p639 = pneg %p140
        %p640 = pneg %p137
        %s641 = sand.u32 %s30, 1
        %s642 = scalar_lea.sflag [#allocation7], %s641
        %s643 = sand.u32 %s153, 1
        %s644 = smul.addr %s643, 8
        %s645 = scalar_lea.vmem [#allocation10], %s644
        %p646 = pneg %p166
        %p647 = pneg %p163
        %s648 = sand.u32 %s30, 1
        %s649 = scalar_lea.sflag [#allocation7], %s648
        %s650 = sand.u32 %s179, 1
        %s651 = smul.addr %s650, 8
        %s652 = scalar_lea.vmem [#allocation11], %s651
        %p653 = pneg %p192
        %p654 = pneg %p189
        %s655 = sand.u32 %s30, 1
        %s656 = scalar_lea.sflag [#allocation7], %s655
        %s657 = sand.u32 %s205, 1
        %s658 = smul.addr %s657, 8
        %s659 = scalar_lea.vmem [#allocation12], %s658
        %p660 = pneg %p218
        %p661 = pneg %p215
        %p662 = pneg %p239
        %p663 = pneg %p236
        %p664 = pneg %p260
        %p665 = pneg %p257
        %p666 = pneg %p281
        %p667 = pneg %p278
        %p668 = pneg %p302
        %p669 = pneg %p299
        %p670 = pneg %p323
        %p671 = pneg %p320
        %p672 = pneg %p344
        %p673 = pneg %p341
        %p674 = pneg %p365
        %p675 = pneg %p362
        %p676 = pneg %p386
        %p677 = pneg %p383
        %p678 = pneg %p407
        %p679 = pneg %p404
        %p680 = pneg %p428
        %p681 = pneg %p425
        %p682 = scmp.lt.s32.totalorder %s30, 1
        %s683 = scalar_select %p682, %s30, 1
        %s684 = smul.addr %s683, 8
        %s685 = scalar_lea.vmem %s0, %s684
        %p686 = scmp.lt.s32.totalorder %s30, 1
        %s687 = scalar_select %p686, %s30, 1
        %s688 = smul.addr %s687, 8
        %s689 = scalar_lea.vmem %s1, %s688
        %p690 = scmp.eq.s32.totalorder %s30, 0
        // Predicated region
        $region113: #{_forward_impl.1} parent=87 // pred_check
          %p691 = pneg %p690
        $region114: #{_forward_impl.1} parent=87 // pred_check_branch
          %693 = sbr.rel (%p691) target = $region116
        $region115: #{_forward_impl.1} parent=87 // pred_region
          %vm694 = vcmask 0
          %695 = vst.msk [vmem:[#allocation2] sm:$0x1] %vm694, 0.0
          %vm696 = vcmask 7168
          %697 = vst.msk [vmem:[#allocation3] sm:$0xff] %vm696, -inf
          %698 = vst.msk [vmem:[#allocation3 + $0x8] sm:$0xff] %vm696, -inf
          %699 = vst.msk [vmem:[#allocation3 + $0x10] sm:$0xff] %vm696, -inf
          %700 = vst.msk [vmem:[#allocation4] sm:$0xff] %vm696, 0.0
          %701 = vst.msk [vmem:[#allocation4 + $0x8] sm:$0xff] %vm696, 0.0
          %702 = vst.msk [vmem:[#allocation4 + $0x10] sm:$0xff] %vm696, 0.0
          %703 = vst.msk [vmem:[#allocation5] sm:$0xff] %vm696, 0.0
          %704 = vst.msk [vmem:[#allocation5 + $0x8] sm:$0xff] %vm696, 0.0
          %705 = vst.msk [vmem:[#allocation5 + $0x10] sm:$0xff] %vm696, 0.0
          %706 = vst [vmem:[%s17] sm:$0x1] 0.0
        $region116: #{_forward_impl.1} parent=87 // pred_fallthru
          _
        %v707 = vld [vmem:[%s685] sm:$0xff]
        %v708 = vld [vmem:[%s689] sm:$0xff]
        %v709 = vsub.f32 %v707, %v708
        %v710 = vld [vmem:[#allocation2] sm:$0x1]
        %v711 = vmul.f32 %v709, %v709
        %712 = vadd.xlane.f32.xlu0 %v711
        %v713 = vpop.xlane.xlu0 %712
        %v714 = vrot.slane %v713, 4
        %v715 = vadd.f32 %v713, %v714
        %v716 = vrot.slane %v715, 2
        %v717 = vadd.f32 %v715, %v716
        %v718 = vrot.slane %v717, 1
        %v719 = vadd.f32 %v717, %v718
        %s720 = vtos %v719
        %v721 = vstv %s720
        %v722 = vadd.f32 %v710, %v721
        %vm723 = vcmask 0
        %724 = vst.msk [vmem:[#allocation2] sm:$0x1] %vm723, %v722
        %s725 = smul.u32 %s30, 128
        %v726 = vld [vmem:[%s596] sm:$0xff]
        %v727 = vlaneseq
        %v728 = vand.u32 %v727, 127
        %v729 = vstv %s725
        %v730 = vadd.s32 %v728, %v729
        %v731 = vld [vmem:[%s8] sm:$0xff]
        %732 = vset.pattern.permute.xlu0 0
        %733 = vperm.xlu0 %732, %v731
        %v734 = vpop.permute.xlu0 %733
        %vm735 = vcmp.eq.s32.totalorder %v730, %v734
        %v736 = vld [vmem:[#allocation5] sm:$0xff]
        %v737 = vsel %vm735, %v726, 0.0
        %738 = vadd.xlane.f32.xlu0 %v737
        %v739 = vpop.xlane.xlu0 %738
        %v740 = vadd.f32 %v736, %v739
        %vm741 = vcmask 7168
        %742 = vst.msk [vmem:[#allocation5] sm:$0xff] %vm741, %v740
        %v743 = vld [vmem:[#allocation3] sm:$0xff]
        %744 = vmax.xlane.f32.xlu0 %v726
        %v745 = vpop.xlane.xlu0 %744
        %v746 = vmax.f32 %v743, %v745
        %v747 = vld [vmem:[#allocation4] sm:$0xff]
        %v748 = vsub.f32 %v743, %v746
        %v749 = vmul.f32 %v748, 1.442695
        %v750 = vpow.pop %v749
        %v751 = vmul.f32 %v747, %v750
        %753 = vset.pattern.permute.xlu0 0
        %754 = vperm.xlu0 %753, %v746
        %v755 = vpop.permute.xlu0 %754
        %v757 = vsub.f32 %v726, %v755
        %v758 = vmul.f32 %v757, 1.442695
        %v759 = vpow.pop %v758
        %760 = vadd.xlane.f32.xlu0 %v759
        %v761 = vpop.xlane.xlu0 %760
        %v762 = vadd.f32 %v751, %v761
        %763 = vst.msk [vmem:[#allocation4] sm:$0xff] %vm741, %v762
        %764 = vst.msk [vmem:[#allocation3] sm:$0xff] %vm741, %v746
        %v765 = vld [vmem:[%s605] sm:$0xff]
        %v766 = vld [vmem:[%s9] sm:$0xff]
        %767 = vset.pattern.permute.xlu0 0
        %768 = vperm.xlu0 %767, %v766
        %v769 = vpop.permute.xlu0 %768
        %vm770 = vcmp.eq.s32.totalorder %v730, %v769
        %s771 = scalar_lea.vmem [#allocation5], 8
        %v772 = vld [vmem:[%s771] sm:$0xff]
        %v773 = vsel %vm770, %v765, 0.0
        %774 = vadd.xlane.f32.xlu0 %v773
        %v775 = vpop.xlane.xlu0 %774
        %v776 = vadd.f32 %v772, %v775
        %777 = vst.msk [vmem:[%s771] sm:$0xff] %vm741, %v776
        %s778 = scalar_lea.vmem [#allocation3], 8
        %v779 = vld [vmem:[%s778] sm:$0xff]
        %780 = vmax.xlane.f32.xlu0 %v765
        %v781 = vpop.xlane.xlu0 %780
        %v782 = vmax.f32 %v779, %v781
        %s783 = scalar_lea.vmem [#allocation4], 8
        %v784 = vld [vmem:[%s783] sm:$0xff]
        %v785 = vsub.f32 %v779, %v782
        %v786 = vmul.f32 %v785, 1.442695
        %v787 = vpow.pop %v786
        %v788 = vmul.f32 %v784, %v787
        %790 = vset.pattern.permute.xlu0 0
        %791 = vperm.xlu0 %790, %v782
        %v792 = vpop.permute.xlu0 %791
        %v794 = vsub.f32 %v765, %v792
        %v795 = vmul.f32 %v794, 1.442695
        %v796 = vpow.pop %v795
        %797 = vadd.xlane.f32.xlu0 %v796
        %v798 = vpop.xlane.xlu0 %797
        %v799 = vadd.f32 %v788, %v798
        %800 = vst.msk [vmem:[%s783] sm:$0xff] %vm741, %v799
        %801 = vst.msk [vmem:[%s778] sm:$0xff] %vm741, %v782
        %v802 = vld [vmem:[%s614] sm:$0xff]
        %v803 = vld [vmem:[%s10] sm:$0xff]
        %804 = vset.pattern.permute.xlu0 0
        %805 = vperm.xlu0 %804, %v803
        %v806 = vpop.permute.xlu0 %805
        %vm807 = vcmp.eq.s32.totalorder %v730, %v806
        %s808 = scalar_lea.vmem [#allocation5], 16
        %v809 = vld [vmem:[%s808] sm:$0xff]
        %v810 = vsel %vm807, %v802, 0.0
        %811 = vadd.xlane.f32.xlu0 %v810
        %v812 = vpop.xlane.xlu0 %811
        %v813 = vadd.f32 %v809, %v812
        %814 = vst.msk [vmem:[%s808] sm:$0xff] %vm741, %v813
        %s815 = scalar_lea.vmem [#allocation3], 16
        %v816 = vld [vmem:[%s815] sm:$0xff]
        %817 = vmax.xlane.f32.xlu0 %v802
        %v818 = vpop.xlane.xlu0 %817
        %v819 = vmax.f32 %v816, %v818
        %s820 = scalar_lea.vmem [#allocation4], 16
        %v821 = vld [vmem:[%s820] sm:$0xff]
        %v822 = vsub.f32 %v816, %v819
        %v823 = vmul.f32 %v822, 1.442695
        %v824 = vpow.pop %v823
        %v825 = vmul.f32 %v821, %v824
        %827 = vset.pattern.permute.xlu0 0
        %828 = vperm.xlu0 %827, %v819
        %v829 = vpop.permute.xlu0 %828
        %v831 = vsub.f32 %v802, %v829
        %v832 = vmul.f32 %v831, 1.442695
        %v833 = vpow.pop %v832
        %834 = vadd.xlane.f32.xlu0 %v833
        %v835 = vpop.xlane.xlu0 %834
        %v836 = vadd.f32 %v825, %v835
        %837 = vst.msk [vmem:[%s820] sm:$0xff] %vm741, %v836
        %838 = vst.msk [vmem:[%s815] sm:$0xff] %vm741, %v819
        %p839 = scmp.eq.s32.totalorder %s30, 1
        // Predicated region
        $region117: #{_forward_impl.1} parent=87 // pred_check
          %p840 = pneg %p839
        $region118: #{_forward_impl.1} parent=87 // pred_check_branch
          %842 = sbr.rel (%p840) target = $region120
        $region119: #{_forward_impl.1} parent=87 // pred_region
          %v843 = vld [vmem:[#allocation2] sm:$0x1]
          %v844 = vrcp.pop 2048.0
          %v845 = vmul.f32 %v843, %v844
          %v846 = vld [vmem:[#allocation3] sm:$0xff]
          %v847 = vld [vmem:[#allocation4] sm:$0xff]
          %v848 = vlog2.pop %v847
          %v849 = vmul.f32 %v848, 0.6931472
          %v850 = vadd.f32 %v846, %v849
          %v851 = vld [vmem:[#allocation5] sm:$0xff]
          %v852 = vsub.f32 %v850, %v851
          %v853 = vsel %vm741, %v852, 0.0
          %854 = vadd.xlane.f32.xlu0 %v853
          %v855 = vpop.xlane.xlu0 %854
          %v856 = vrot.slane %v855, 4
          %v857 = vadd.f32 %v855, %v856
          %v858 = vrot.slane %v857, 2
          %v859 = vadd.f32 %v857, %v858
          %v860 = vrot.slane %v859, 1
          %v861 = vadd.f32 %v859, %v860
          %s862 = vtos %v861
          %v863 = vstv %s862
          %v864 = vadd.f32 %v863, 0.0
          %v865 = vld [vmem:[%s778] sm:$0xff]
          %v866 = vld [vmem:[%s783] sm:$0xff]
          %v867 = vlog2.pop %v866
          %v868 = vmul.f32 %v867, 0.6931472
          %v869 = vadd.f32 %v865, %v868
          %v870 = vld [vmem:[%s771] sm:$0xff]
          %v871 = vsub.f32 %v869, %v870
          %v872 = vsel %vm741, %v871, 0.0
          %873 = vadd.xlane.f32.xlu0 %v872
          %v874 = vpop.xlane.xlu0 %873
          %v875 = vrot.slane %v874, 4
          %v876 = vadd.f32 %v874, %v875
          %v877 = vrot.slane %v876, 2
          %v878 = vadd.f32 %v876, %v877
          %v879 = vrot.slane %v878, 1
          %v880 = vadd.f32 %v878, %v879
          %s881 = vtos %v880
          %v882 = vstv %s881
          %v883 = vadd.f32 %v864, %v882
          %v884 = vld [vmem:[%s815] sm:$0xff]
          %v885 = vld [vmem:[%s820] sm:$0xff]
          %v886 = vlog2.pop %v885
          %v887 = vmul.f32 %v886, 0.6931472
          %v888 = vadd.f32 %v884, %v887
          %v889 = vld [vmem:[%s808] sm:$0xff]
          %v890 = vsub.f32 %v888, %v889
          %v891 = vsel %vm741, %v890, 0.0
          %892 = vadd.xlane.f32.xlu0 %v891
          %v893 = vpop.xlane.xlu0 %892
          %v894 = vrot.slane %v893, 4
          %v895 = vadd.f32 %v893, %v894
          %v896 = vrot.slane %v895, 2
          %v897 = vadd.f32 %v895, %v896
          %v898 = vrot.slane %v897, 1
          %v899 = vadd.f32 %v897, %v898
          %s900 = vtos %v899
          %v901 = vstv %s900
          %v902 = vadd.f32 %v883, %v901
          %v903 = vrcp.pop 24.0
          %v904 = vmul.f32 %v902, %v903
          %v905 = vld [vmem:[#allocation6] sm:$0xff]
          %v906 = vld [vmem:[#allocation8] sm:$0xff]
          %v907 = vld [vmem:[%s4] sm:$0xff]
          %v908 = vmul.f32 %v905, %v905
          %vm909 = vcmask 261120
          %v910 = vsel %vm909, %v908, 0.0
          %911 = vadd.xlane.f32.xlu0 %v910
          %v912 = vpop.xlane.xlu0 %911
          %v913 = vmax.f32 %v912, 1e-16
          %v914 = vrsqrt.pop %v913
          %v915 = vmul.f32 %v905, %v914
          %v916 = vmul.f32 %v906, %v906
          %v917 = vsel %vm909, %v916, 0.0
          %918 = vadd.xlane.f32.xlu0 %v917
          %v919 = vpop.xlane.xlu0 %918
          %v920 = vmax.f32 %v919, 1e-16
          %v921 = vrsqrt.pop %v920
          %v922 = vmul.f32 %v906, %v921
          %v923 = vmul.f32 %v907, %v907
          %v924 = vsel %vm909, %v923, 0.0
          %925 = vadd.xlane.f32.xlu0 %v924
          %v926 = vpop.xlane.xlu0 %925
          %v927 = vmax.f32 %v926, 1e-16
          %v928 = vrsqrt.pop %v927
          %v929 = vmul.f32 %v907, %v928
          %v931 = vsel %vm909, %v915, 0
          %v934 = vsel %vm909, %v922, 0
          %936 = vmatprep.subr.mxu0 0.0
          %937 = vmatpush1.xpose.msra.mxu0 %v934
          %938 = vmatprep.subr.mxu0 0.0
          %939 = vmatpush1.xpose.msra.mxu0 0.0
          %940 = vmatprep.subr.mxu0 0.0
          %941 = vmatpush1.xpose.msra.mxu0 0.0
          %942 = vmatprep.subr.mxu0 0.0
          %943 = vmatpush1.xpose.msra.mxu0 0.0
          %944 = vmatprep.subr.mxu0 0.0
          %945 = vmatpush1.xpose.msra.mxu0 0.0
          %946 = vmatprep.subr.mxu0 0.0
          %947 = vmatpush1.xpose.msra.mxu0 0.0
          %948 = vmatprep.subr.mxu0 0.0
          %949 = vmatpush1.xpose.msra.mxu0 0.0
          %950 = vmatprep.subr.mxu0 0.0
          %951 = vmatpush1.xpose.msra.mxu0 0.0
          %952 = vmatprep.subr.mxu0 0.0
          %953 = vmatpush1.xpose.msra.mxu0 0.0
          %954 = vmatprep.subr.mxu0 0.0
          %955 = vmatpush1.xpose.msra.mxu0 0.0
          %956 = vmatprep.subr.mxu0 0.0
          %957 = vmatpush1.xpose.msra.mxu0 0.0
          %958 = vmatprep.subr.mxu0 0.0
          %959 = vmatpush1.xpose.msra.mxu0 0.0
          %960 = vmatprep.subr.mxu0 0.0
          %961 = vmatpush1.xpose.msra.mxu0 0.0
          %962 = vmatprep.subr.mxu0 0.0
          %963 = vmatpush1.xpose.msra.mxu0 0.0
          %964 = vmatprep.subr.mxu0 0.0
          %965 = vmatpush1.xpose.msra.mxu0 0.0
          %966 = vmatprep.subr.mxu0 0.0
          %967 = vmatpush1.xpose.msra.mxu0 0.0
          %968 = vmatprep.subr.mxu0 0.0
          %969 = vmatpush1.xpose.msra.mxu0 0.0
          %970 = vmatprep.subr.mxu0 0.0
          %971 = vmatpush1.xpose.msra.mxu0 0.0
          %972 = vmatprep.subr.mxu0 0.0
          %973 = vmatpush1.xpose.msra.mxu0 0.0
          %974 = vmatprep.subr.mxu0 0.0
          %975 = vmatpush1.xpose.msra.mxu0 0.0
          %976 = vmatprep.subr.mxu0 0.0
          %977 = vmatpush1.xpose.msra.mxu0 0.0
          %978 = vmatprep.subr.mxu0 0.0
          %979 = vmatpush1.xpose.msra.mxu0 0.0
          %980 = vmatprep.subr.mxu0 0.0
          %981 = vmatpush1.xpose.msra.mxu0 0.0
          %982 = vmatprep.subr.mxu0 0.0
          %983 = vmatpush1.xpose.msra.mxu0 0.0
          %984 = vmatprep.subr.mxu0 0.0
          %985 = vmatpush1.xpose.msra.mxu0 0.0
          %986 = vmatprep.subr.mxu0 0.0
          %987 = vmatpush1.xpose.msra.mxu0 0.0
          %988 = vmatprep.subr.mxu0 0.0
          %989 = vmatpush1.xpose.msra.mxu0 0.0
          %990 = vmatprep.subr.mxu0 0.0
          %991 = vmatpush1.xpose.msra.mxu0 0.0
          %992 = vmatprep.subr.mxu0 0.0
          %993 = vmatpush1.xpose.msra.mxu0 0.0
          %994 = vmatprep.subr.mxu0 0.0
          %995 = vmatpush1.xpose.msra.mxu0 0.0
          %996 = vmatprep.subr.mxu0 0.0
          %997 = vmatpush1.xpose.msra.mxu0 0.0
          %998 = vmatprep.subr.mxu0 0.0
          %999 = vmatpush1.xpose.msra.mxu0 0.0
          %1000 = vmatprep.mubr.f32.mxu0 0.0
          %1001 = vmatmul.mubr.f32.gmra.mrb[0].mxu0 %v931
          %v1002 = vpop.f32.mrb[0].mxu0
          %v1003 = vadd.f32 0.0, %v1002
          %v1004 = vpop.f32.mrb[0].mxu0
          %1005 = vdwg.mxu0
          %v1006 = vmul.f32 %v1003, 20.0
          %v1008 = vsel %vm909, %v929, 0
          %1010 = vmatprep.subr.mxu0 0.0
          %1011 = vmatpush1.xpose.msra.mxu0 %v1008
          %1012 = vmatprep.subr.mxu0 0.0
          %1013 = vmatpush1.xpose.msra.mxu0 0.0
          %1014 = vmatprep.subr.mxu0 0.0
          %1015 = vmatpush1.xpose.msra.mxu0 0.0
          %1016 = vmatprep.subr.mxu0 0.0
          %1017 = vmatpush1.xpose.msra.mxu0 0.0
          %1018 = vmatprep.subr.mxu0 0.0
          %1019 = vmatpush1.xpose.msra.mxu0 0.0
          %1020 = vmatprep.subr.mxu0 0.0
          %1021 = vmatpush1.xpose.msra.mxu0 0.0
          %1022 = vmatprep.subr.mxu0 0.0
          %1023 = vmatpush1.xpose.msra.mxu0 0.0
          %1024 = vmatprep.subr.mxu0 0.0
          %1025 = vmatpush1.xpose.msra.mxu0 0.0
          %1026 = vmatprep.subr.mxu0 0.0
          %1027 = vmatpush1.xpose.msra.mxu0 0.0
          %1028 = vmatprep.subr.mxu0 0.0
          %1029 = vmatpush1.xpose.msra.mxu0 0.0
          %1030 = vmatprep.subr.mxu0 0.0
          %1031 = vmatpush1.xpose.msra.mxu0 0.0
          %1032 = vmatprep.subr.mxu0 0.0
          %1033 = vmatpush1.xpose.msra.mxu0 0.0
          %1034 = vmatprep.subr.mxu0 0.0
          %1035 = vmatpush1.xpose.msra.mxu0 0.0
          %1036 = vmatprep.subr.mxu0 0.0
          %1037 = vmatpush1.xpose.msra.mxu0 0.0
          %1038 = vmatprep.subr.mxu0 0.0
          %1039 = vmatpush1.xpose.msra.mxu0 0.0
          %1040 = vmatprep.subr.mxu0 0.0
          %1041 = vmatpush1.xpose.msra.mxu0 0.0
          %1042 = vmatprep.subr.mxu0 0.0
          %1043 = vmatpush1.xpose.msra.mxu0 0.0
          %1044 = vmatprep.subr.mxu0 0.0
          %1045 = vmatpush1.xpose.msra.mxu0 0.0
          %1046 = vmatprep.subr.mxu0 0.0
          %1047 = vmatpush1.xpose.msra.mxu0 0.0
          %1048 = vmatprep.subr.mxu0 0.0
          %1049 = vmatpush1.xpose.msra.mxu0 0.0
          %1050 = vmatprep.subr.mxu0 0.0
          %1051 = vmatpush1.xpose.msra.mxu0 0.0
          %1052 = vmatprep.subr.mxu0 0.0
          %1053 = vmatpush1.xpose.msra.mxu0 0.0
          %1054 = vmatprep.subr.mxu0 0.0
          %1055 = vmatpush1.xpose.msra.mxu0 0.0
          %1056 = vmatprep.subr.mxu0 0.0
          %1057 = vmatpush1.xpose.msra.mxu0 0.0
          %1058 = vmatprep.subr.mxu0 0.0
          %1059 = vmatpush1.xpose.msra.mxu0 0.0
          %1060 = vmatprep.subr.mxu0 0.0
          %1061 = vmatpush1.xpose.msra.mxu0 0.0
          %1062 = vmatprep.subr.mxu0 0.0
          %1063 = vmatpush1.xpose.msra.mxu0 0.0
          %1064 = vmatprep.subr.mxu0 0.0
          %1065 = vmatpush1.xpose.msra.mxu0 0.0
          %1066 = vmatprep.subr.mxu0 0.0
          %1067 = vmatpush1.xpose.msra.mxu0 0.0
          %1068 = vmatprep.subr.mxu0 0.0
          %1069 = vmatpush1.xpose.msra.mxu0 0.0
          %1070 = vmatprep.subr.mxu0 0.0
          %1071 = vmatpush1.xpose.msra.mxu0 0.0
          %1072 = vmatprep.subr.mxu0 0.0
          %1073 = vmatpush1.xpose.msra.mxu0 0.0
          %1074 = vmatprep.mubr.f32.mxu0 0.0
          %1075 = vmatmul.mubr.f32.gmra.mrb[0].mxu0 %v931
          %v1076 = vpop.f32.mrb[0].mxu0
          %v1077 = vadd.f32 0.0, %v1076
          %v1078 = vpop.f32.mrb[0].mxu0
          %1079 = vdwg.mxu0
          %v1080 = vmul.f32 %v1077, 20.0
          %v1081 = vlaneseq
          %v1082 = vshrl.u32 %v1081, 7
          %vm1083 = vcmp.eq.s32.totalorder %v1082, %v728
          %v1084 = vld [vmem:[%s8] sm:$0xff]
          %v1085 = vld [vmem:[%s11] sm:$0x1]
          %1086 = vset.pattern.permute.xlu0 0
          %1087 = vperm.xlu0 %1086, %v1084
          %v1088 = vpop.permute.xlu0 %1087
          %v1089 = vlaneseq
          %v1090 = vshrl.u32 %v1089, 7
          %v1091 = vsub.s32 0, %v1090
          %v1092 = vrot.slane %v1085, %v1091
          %vm1093 = vcmp.ne.s32.totalorder %v1088, %v1092
          %vm1094 = vmor %vm1093, %vm1083
          %v1095 = vsel %vm1094, %v1006, -1.7014117e+38
          %v1096 = vld [vmem:[%s12] sm:$0x1]
          %v1097 = vlaneseq
          %v1098 = vshrl.u32 %v1097, 7
          %v1099 = vsub.s32 0, %v1098
          %v1100 = vrot.slane %v1096, %v1099
          %vm1101 = vcmp.ne.s32.totalorder %v1088, %v1100
          %v1102 = vsel %vm1101, %v1080, -1.7014117e+38
          %vm1103 = vcmask 64512
          %v1104 = vsel %vm1103, %v1095, -inf
          %1105 = vmax.xlane.f32.xlu0 %v1104
          %v1106 = vpop.xlane.xlu0 %1105
          %v1107 = vsel %vm1103, %v1102, -inf
          %1108 = vmax.xlane.f32.xlu0 %v1107
          %v1109 = vpop.xlane.xlu0 %1108
          %v1110 = vmax.f32 %v1106, %v1109
          %v1111 = vsub.f32 %v1095, %v1110
          %v1112 = vmul.f32 %v1111, 1.442695
          %v1113 = vpow.pop %v1112
          %v1114 = vsel %vm1103, %v1113, 0.0
          %1115 = vadd.xlane.f32.xlu0 %v1114
          %v1116 = vpop.xlane.xlu0 %1115
          %v1117 = vsub.f32 %v1102, %v1110
          %v1118 = vmul.f32 %v1117, 1.442695
          %v1119 = vpow.pop %v1118
          %v1120 = vsel %vm1103, %v1119, 0.0
          %1121 = vadd.xlane.f32.xlu0 %v1120
          %v1122 = vpop.xlane.xlu0 %1121
          %v1123 = vadd.f32 %v1116, %v1122
          %v1124 = vlog2.pop %v1123
          %v1125 = vmul.f32 %v1124, 0.6931472
          %v1126 = vadd.f32 %v1110, %v1125
          %v1127 = vsel %vm1083, %v1006, 0.0
          %v1128 = vsel %vm1103, %v1127, 0.0
          %1129 = vadd.xlane.f32.xlu0 %v1128
          %v1130 = vpop.xlane.xlu0 %1129
          %v1131 = vsub.f32 %v1126, %v1130
          %v1132 = vsel %vm741, %v1131, 0.0
          %1133 = vadd.xlane.f32.xlu0 %v1132
          %v1134 = vpop.xlane.xlu0 %1133
          %v1135 = vrot.slane %v1134, 4
          %v1136 = vadd.f32 %v1134, %v1135
          %v1137 = vrot.slane %v1136, 2
          %v1138 = vadd.f32 %v1136, %v1137
          %v1139 = vrot.slane %v1138, 1
          %v1140 = vadd.f32 %v1138, %v1139
          %s1141 = vtos %v1140
          %v1142 = vstv %s1141
          %v1143 = vrcp.pop 8.0
          %v1144 = vmul.f32 %v1142, %v1143
          %v1145 = vld [vmem:[%s13] sm:$0xff]
          %v1146 = vld [vmem:[%s13 + $0x8] sm:$0xff]
          %v1147 = vld [vmem:[%s13 + $0x10] sm:$0xff]
          %v1148 = vld [vmem:[%s13 + $0x18] sm:$0xff]
          %v1149 = vld [vmem:[%s14] sm:$0x1]
          %v1150 = vld [vmem:[#allocation13] sm:$0xff]
          %v1151 = vld [vmem:[#allocation13 + $0x8] sm:$0xff]
          %v1152 = vld [vmem:[#allocation13 + $0x10] sm:$0xff]
          %v1153 = vld [vmem:[#allocation13 + $0x18] sm:$0xff]
          %v1154 = vld [vmem:[#allocation13 + $0x20] sm:$0xff]
          %v1155 = vld [vmem:[#allocation13 + $0x28] sm:$0xff]
          %v1156 = vld [vmem:[#allocation13 + $0x30] sm:$0xff]
          %v1157 = vld [vmem:[#allocation13 + $0x38] sm:$0xff]
          %v1158 = vld [vmem:[#allocation13 + $0x40] sm:$0xff]
          %v1159 = vld [vmem:[#allocation13 + $0x48] sm:$0xff]
          %v1160 = vld [vmem:[#allocation13 + $0x50] sm:$0xff]
          %v1161 = vld [vmem:[#allocation13 + $0x58] sm:$0xff]
          %v1162 = vld [vmem:[#allocation13 + $0x60] sm:$0xff]
          %v1163 = vld [vmem:[#allocation13 + $0x68] sm:$0xff]
          %v1164 = vld [vmem:[#allocation13 + $0x70] sm:$0xff]
          %v1165 = vld [vmem:[#allocation13 + $0x78] sm:$0xff]
          %v1166 = vld [vmem:[%s16] sm:$0x1]
          %v1168 = vlaneseq
          %v1169 = vshrl.u32 %v1168, 7
          %v1170 = vsub.s32 0, %v1169
          %v1171 = vrot.slane %v1149, %v1170
          %v1174 = vsel %vm909, %v905, 0
          %1176 = vmatprep.subr.mxu0 0.0
          %1177 = vmatpush1.msra.mxu0 %v1145
          %1178 = vmatprep.subr.mxu0 0.0
          %1179 = vmatpush1.msra.mxu0 %v1146
          %1180 = vmatprep.subr.mxu0 0.0
          %1181 = vmatpush1.msra.mxu0 %v1147
          %1182 = vmatprep.subr.mxu0 0.0
          %1183 = vmatpush1.msra.mxu0 %v1148
          %1184 = vmatprep.subr.mxu0 0.0
          %1185 = vmatpush1.msra.mxu0 0.0
          %1186 = vmatprep.subr.mxu0 0.0
          %1187 = vmatpush1.msra.mxu0 0.0
          %1188 = vmatprep.subr.mxu0 0.0
          %1189 = vmatpush1.msra.mxu0 0.0
          %1190 = vmatprep.subr.mxu0 0.0
          %1191 = vmatpush1.msra.mxu0 0.0
          %1192 = vmatprep.subr.mxu0 0.0
          %1193 = vmatpush1.msra.mxu0 0.0
          %1194 = vmatprep.subr.mxu0 0.0
          %1195 = vmatpush1.msra.mxu0 0.0
          %1196 = vmatprep.subr.mxu0 0.0
          %1197 = vmatpush1.msra.mxu0 0.0
          %1198 = vmatprep.subr.mxu0 0.0
          %1199 = vmatpush1.msra.mxu0 0.0
          %1200 = vmatprep.subr.mxu0 0.0
          %1201 = vmatpush1.msra.mxu0 0.0
          %1202 = vmatprep.subr.mxu0 0.0
          %1203 = vmatpush1.msra.mxu0 0.0
          %1204 = vmatprep.subr.mxu0 0.0
          %1205 = vmatpush1.msra.mxu0 0.0
          %1206 = vmatprep.subr.mxu0 0.0
          %1207 = vmatpush1.msra.mxu0 0.0
          %1208 = vmatprep.subr.mxu0 0.0
          %1209 = vmatpush1.msra.mxu0 0.0
          %1210 = vmatprep.subr.mxu0 0.0
          %1211 = vmatpush1.msra.mxu0 0.0
          %1212 = vmatprep.subr.mxu0 0.0
          %1213 = vmatpush1.msra.mxu0 0.0
          %1214 = vmatprep.subr.mxu0 0.0
          %1215 = vmatpush1.msra.mxu0 0.0
          %1216 = vmatprep.subr.mxu0 0.0
          %1217 = vmatpush1.msra.mxu0 0.0
          %1218 = vmatprep.subr.mxu0 0.0
          %1219 = vmatpush1.msra.mxu0 0.0
          %1220 = vmatprep.subr.mxu0 0.0
          %1221 = vmatpush1.msra.mxu0 0.0
          %1222 = vmatprep.subr.mxu0 0.0
          %1223 = vmatpush1.msra.mxu0 0.0
          %1224 = vmatprep.subr.mxu0 0.0
          %1225 = vmatpush1.msra.mxu0 0.0
          %1226 = vmatprep.subr.mxu0 0.0
          %1227 = vmatpush1.msra.mxu0 0.0
          %1228 = vmatprep.subr.mxu0 0.0
          %1229 = vmatpush1.msra.mxu0 0.0
          %1230 = vmatprep.subr.mxu0 0.0
          %1231 = vmatpush1.msra.mxu0 0.0
          %1232 = vmatprep.subr.mxu0 0.0
          %1233 = vmatpush1.msra.mxu0 0.0
          %1234 = vmatprep.subr.mxu0 0.0
          %1235 = vmatpush1.msra.mxu0 0.0
          %1236 = vmatprep.subr.mxu0 0.0
          %1237 = vmatpush1.msra.mxu0 0.0
          %1238 = vmatprep.subr.mxu0 0.0
          %1239 = vmatpush1.msra.mxu0 0.0
          %1240 = vmatprep.mubr.f32.mxu0 0.0
          %1241 = vmatmul.mubr.f32.gmra.mrb[0].mxu0 %v1174
          %v1242 = vpop.f32.mrb[0].mxu0
          %v1243 = vadd.f32 %v1171, %v1242
          %v1244 = vpop.f32.mrb[0].mxu0
          %1245 = vdwg.mxu0
          %v1246 = vmax.f32 %v1243, 0.0
          %v1248 = vlaneseq
          %v1249 = vshrl.u32 %v1248, 7
          %v1250 = vsub.s32 0, %v1249
          %v1251 = vrot.slane %v1166, %v1250
          %1253 = vmatprep.subr.mxu0 0.0
          %1254 = vmatpush1.msra.mxu0 %v1150
          %1255 = vmatprep.subr.mxu0 0.0
          %1256 = vmatpush1.msra.mxu0 %v1151
          %1257 = vmatprep.subr.mxu0 0.0
          %1258 = vmatpush1.msra.mxu0 %v1152
          %1259 = vmatprep.subr.mxu0 0.0
          %1260 = vmatpush1.msra.mxu0 %v1153
          %1261 = vmatprep.subr.mxu0 0.0
          %1262 = vmatpush1.msra.mxu0 %v1154
          %1263 = vmatprep.subr.mxu0 0.0
          %1264 = vmatpush1.msra.mxu0 %v1155
          %1265 = vmatprep.subr.mxu0 0.0
          %1266 = vmatpush1.msra.mxu0 %v1156
          %1267 = vmatprep.subr.mxu0 0.0
          %1268 = vmatpush1.msra.mxu0 %v1157
          %1269 = vmatprep.subr.mxu0 0.0
          %1270 = vmatpush1.msra.mxu0 %v1158
          %1271 = vmatprep.subr.mxu0 0.0
          %1272 = vmatpush1.msra.mxu0 %v1159
          %1273 = vmatprep.subr.mxu0 0.0
          %1274 = vmatpush1.msra.mxu0 %v1160
          %1275 = vmatprep.subr.mxu0 0.0
          %1276 = vmatpush1.msra.mxu0 %v1161
          %1277 = vmatprep.subr.mxu0 0.0
          %1278 = vmatpush1.msra.mxu0 %v1162
          %1279 = vmatprep.subr.mxu0 0.0
          %1280 = vmatpush1.msra.mxu0 %v1163
          %1281 = vmatprep.subr.mxu0 0.0
          %1282 = vmatpush1.msra.mxu0 %v1164
          %1283 = vmatprep.subr.mxu0 0.0
          %1284 = vmatpush1.msra.mxu0 %v1165
          %1285 = vmatprep.subr.mxu0 0.0
          %1286 = vmatpush1.msra.mxu0 0.0
          %1287 = vmatprep.subr.mxu0 0.0
          %1288 = vmatpush1.msra.mxu0 0.0
          %1289 = vmatprep.subr.mxu0 0.0
          %1290 = vmatpush1.msra.mxu0 0.0
          %1291 = vmatprep.subr.mxu0 0.0
          %1292 = vmatpush1.msra.mxu0 0.0
          %1293 = vmatprep.subr.mxu0 0.0
          %1294 = vmatpush1.msra.mxu0 0.0
          %1295 = vmatprep.subr.mxu0 0.0
          %1296 = vmatpush1.msra.mxu0 0.0
          %1297 = vmatprep.subr.mxu0 0.0
          %1298 = vmatpush1.msra.mxu0 0.0
          %1299 = vmatprep.subr.mxu0 0.0
          %1300 = vmatpush1.msra.mxu0 0.0
          %1301 = vmatprep.subr.mxu0 0.0
          %1302 = vmatpush1.msra.mxu0 0.0
          %1303 = vmatprep.subr.mxu0 0.0
          %1304 = vmatpush1.msra.mxu0 0.0
          %1305 = vmatprep.subr.mxu0 0.0
          %1306 = vmatpush1.msra.mxu0 0.0
          %1307 = vmatprep.subr.mxu0 0.0
          %1308 = vmatpush1.msra.mxu0 0.0
          %1309 = vmatprep.subr.mxu0 0.0
          %1310 = vmatpush1.msra.mxu0 0.0
          %1311 = vmatprep.subr.mxu0 0.0
          %1312 = vmatpush1.msra.mxu0 0.0
          %1313 = vmatprep.subr.mxu0 0.0
          %1314 = vmatpush1.msra.mxu0 0.0
          %1315 = vmatprep.subr.mxu0 0.0
          %1316 = vmatpush1.msra.mxu0 0.0
          %1317 = vmatprep.mubr.f32.mxu0 0.0
          %1318 = vmatmul.mubr.f32.gmra.mrb[0].mxu0 %v1246
          %v1319 = vpop.f32.mrb[0].mxu0
          %v1320 = vadd.f32 %v1251, %v1319
          %v1321 = vpop.f32.mrb[0].mxu0
          %1322 = vdwg.mxu0
          %v1324 = vsel %vm909, %v906, 0
          %1326 = vmatprep.subr.mxu0 0.0
          %1327 = vmatpush1.msra.mxu0 %v1145
          %1328 = vmatprep.subr.mxu0 0.0
          %1329 = vmatpush1.msra.mxu0 %v1146
          %1330 = vmatprep.subr.mxu0 0.0
          %1331 = vmatpush1.msra.mxu0 %v1147
          %1332 = vmatprep.subr.mxu0 0.0
          %1333 = vmatpush1.msra.mxu0 %v1148
          %1334 = vmatprep.subr.mxu0 0.0
          %1335 = vmatpush1.msra.mxu0 0.0
          %1336 = vmatprep.subr.mxu0 0.0
          %1337 = vmatpush1.msra.mxu0 0.0
          %1338 = vmatprep.subr.mxu0 0.0
          %1339 = vmatpush1.msra.mxu0 0.0
          %1340 = vmatprep.subr.mxu0 0.0
          %1341 = vmatpush1.msra.mxu0 0.0
          %1342 = vmatprep.subr.mxu0 0.0
          %1343 = vmatpush1.msra.mxu0 0.0
          %1344 = vmatprep.subr.mxu0 0.0
          %1345 = vmatpush1.msra.mxu0 0.0
          %1346 = vmatprep.subr.mxu0 0.0
          %1347 = vmatpush1.msra.mxu0 0.0
          %1348 = vmatprep.subr.mxu0 0.0
          %1349 = vmatpush1.msra.mxu0 0.0
          %1350 = vmatprep.subr.mxu0 0.0
          %1351 = vmatpush1.msra.mxu0 0.0
          %1352 = vmatprep.subr.mxu0 0.0
          %1353 = vmatpush1.msra.mxu0 0.0
          %1354 = vmatprep.subr.mxu0 0.0
          %1355 = vmatpush1.msra.mxu0 0.0
          %1356 = vmatprep.subr.mxu0 0.0
          %1357 = vmatpush1.msra.mxu0 0.0
          %1358 = vmatprep.subr.mxu0 0.0
          %1359 = vmatpush1.msra.mxu0 0.0
          %1360 = vmatprep.subr.mxu0 0.0
          %1361 = vmatpush1.msra.mxu0 0.0
          %1362 = vmatprep.subr.mxu0 0.0
          %1363 = vmatpush1.msra.mxu0 0.0
          %1364 = vmatprep.subr.mxu0 0.0
          %1365 = vmatpush1.msra.mxu0 0.0
          %1366 = vmatprep.subr.mxu0 0.0
          %1367 = vmatpush1.msra.mxu0 0.0
          %1368 = vmatprep.subr.mxu0 0.0
          %1369 = vmatpush1.msra.mxu0 0.0
          %1370 = vmatprep.subr.mxu0 0.0
          %1371 = vmatpush1.msra.mxu0 0.0
          %1372 = vmatprep.subr.mxu0 0.0
          %1373 = vmatpush1.msra.mxu0 0.0
          %1374 = vmatprep.subr.mxu0 0.0
          %1375 = vmatpush1.msra.mxu0 0.0
          %1376 = vmatprep.subr.mxu0 0.0
          %1377 = vmatpush1.msra.mxu0 0.0
          %1378 = vmatprep.subr.mxu0 0.0
          %1379 = vmatpush1.msra.mxu0 0.0
          %1380 = vmatprep.subr.mxu0 0.0
          %1381 = vmatpush1.msra.mxu0 0.0
          %1382 = vmatprep.subr.mxu0 0.0
          %1383 = vmatpush1.msra.mxu0 0.0
          %1384 = vmatprep.subr.mxu0 0.0
          %1385 = vmatpush1.msra.mxu0 0.0
          %1386 = vmatprep.subr.mxu0 0.0
          %1387 = vmatpush1.msra.mxu0 0.0
          %1388 = vmatprep.subr.mxu0 0.0
          %1389 = vmatpush1.msra.mxu0 0.0
          %1390 = vmatprep.mubr.f32.mxu0 0.0
          %1391 = vmatmul.mubr.f32.gmra.mrb[0].mxu0 %v1324
          %v1392 = vpop.f32.mrb[0].mxu0
          %v1393 = vadd.f32 %v1171, %v1392
          %v1394 = vpop.f32.mrb[0].mxu0
          %1395 = vdwg.mxu0
          %v1396 = vmax.f32 %v1393, 0.0
          %1397 = vmatprep.subr.mxu0 0.0
          %1398 = vmatpush1.msra.mxu0 %v1150
          %1399 = vmatprep.subr.mxu0 0.0
          %1400 = vmatpush1.msra.mxu0 %v1151
          %1401 = vmatprep.subr.mxu0 0.0
          %1402 = vmatpush1.msra.mxu0 %v1152
          %1403 = vmatprep.subr.mxu0 0.0
          %1404 = vmatpush1.msra.mxu0 %v1153
          %1405 = vmatprep.subr.mxu0 0.0
          %1406 = vmatpush1.msra.mxu0 %v1154
          %1407 = vmatprep.subr.mxu0 0.0
          %1408 = vmatpush1.msra.mxu0 %v1155
          %1409 = vmatprep.subr.mxu0 0.0
          %1410 = vmatpush1.msra.mxu0 %v1156
          %1411 = vmatprep.subr.mxu0 0.0
          %1412 = vmatpush1.msra.mxu0 %v1157
          %1413 = vmatprep.subr.mxu0 0.0
          %1414 = vmatpush1.msra.mxu0 %v1158
          %1415 = vmatprep.subr.mxu0 0.0
          %1416 = vmatpush1.msra.mxu0 %v1159
          %1417 = vmatprep.subr.mxu0 0.0
          %1418 = vmatpush1.msra.mxu0 %v1160
          %1419 = vmatprep.subr.mxu0 0.0
          %1420 = vmatpush1.msra.mxu0 %v1161
          %1421 = vmatprep.subr.mxu0 0.0
          %1422 = vmatpush1.msra.mxu0 %v1162
          %1423 = vmatprep.subr.mxu0 0.0
          %1424 = vmatpush1.msra.mxu0 %v1163
          %1425 = vmatprep.subr.mxu0 0.0
          %1426 = vmatpush1.msra.mxu0 %v1164
          %1427 = vmatprep.subr.mxu0 0.0
          %1428 = vmatpush1.msra.mxu0 %v1165
          %1429 = vmatprep.subr.mxu0 0.0
          %1430 = vmatpush1.msra.mxu0 0.0
          %1431 = vmatprep.subr.mxu0 0.0
          %1432 = vmatpush1.msra.mxu0 0.0
          %1433 = vmatprep.subr.mxu0 0.0
          %1434 = vmatpush1.msra.mxu0 0.0
          %1435 = vmatprep.subr.mxu0 0.0
          %1436 = vmatpush1.msra.mxu0 0.0
          %1437 = vmatprep.subr.mxu0 0.0
          %1438 = vmatpush1.msra.mxu0 0.0
          %1439 = vmatprep.subr.mxu0 0.0
          %1440 = vmatpush1.msra.mxu0 0.0
          %1441 = vmatprep.subr.mxu0 0.0
          %1442 = vmatpush1.msra.mxu0 0.0
          %1443 = vmatprep.subr.mxu0 0.0
          %1444 = vmatpush1.msra.mxu0 0.0
          %1445 = vmatprep.subr.mxu0 0.0
          %1446 = vmatpush1.msra.mxu0 0.0
          %1447 = vmatprep.subr.mxu0 0.0
          %1448 = vmatpush1.msra.mxu0 0.0
          %1449 = vmatprep.subr.mxu0 0.0
          %1450 = vmatpush1.msra.mxu0 0.0
          %1451 = vmatprep.subr.mxu0 0.0
          %1452 = vmatpush1.msra.mxu0 0.0
          %1453 = vmatprep.subr.mxu0 0.0
          %1454 = vmatpush1.msra.mxu0 0.0
          %1455 = vmatprep.subr.mxu0 0.0
          %1456 = vmatpush1.msra.mxu0 0.0
          %1457 = vmatprep.subr.mxu0 0.0
          %1458 = vmatpush1.msra.mxu0 0.0
          %1459 = vmatprep.subr.mxu0 0.0
          %1460 = vmatpush1.msra.mxu0 0.0
          %1461 = vmatprep.mubr.f32.mxu0 0.0
          %1462 = vmatmul.mubr.f32.gmra.mrb[0].mxu0 %v1396
          %v1463 = vpop.f32.mrb[0].mxu0
          %v1464 = vadd.f32 %v1251, %v1463
          %v1465 = vpop.f32.mrb[0].mxu0
          %1466 = vdwg.mxu0
          %v1468 = vsel %vm909, %v907, 0
          %1470 = vmatprep.subr.mxu0 0.0
          %1471 = vmatpush1.msra.mxu0 %v1145
          %1472 = vmatprep.subr.mxu0 0.0
          %1473 = vmatpush1.msra.mxu0 %v1146
          %1474 = vmatprep.subr.mxu0 0.0
          %1475 = vmatpush1.msra.mxu0 %v1147
          %1476 = vmatprep.subr.mxu0 0.0
          %1477 = vmatpush1.msra.mxu0 %v1148
          %1478 = vmatprep.subr.mxu0 0.0
          %1479 = vmatpush1.msra.mxu0 0.0
          %1480 = vmatprep.subr.mxu0 0.0
          %1481 = vmatpush1.msra.mxu0 0.0
          %1482 = vmatprep.subr.mxu0 0.0
          %1483 = vmatpush1.msra.mxu0 0.0
          %1484 = vmatprep.subr.mxu0 0.0
          %1485 = vmatpush1.msra.mxu0 0.0
          %1486 = vmatprep.subr.mxu0 0.0
          %1487 = vmatpush1.msra.mxu0 0.0
          %1488 = vmatprep.subr.mxu0 0.0
          %1489 = vmatpush1.msra.mxu0 0.0
          %1490 = vmatprep.subr.mxu0 0.0
          %1491 = vmatpush1.msra.mxu0 0.0
          %1492 = vmatprep.subr.mxu0 0.0
          %1493 = vmatpush1.msra.mxu0 0.0
          %1494 = vmatprep.subr.mxu0 0.0
          %1495 = vmatpush1.msra.mxu0 0.0
          %1496 = vmatprep.subr.mxu0 0.0
          %1497 = vmatpush1.msra.mxu0 0.0
          %1498 = vmatprep.subr.mxu0 0.0
          %1499 = vmatpush1.msra.mxu0 0.0
          %1500 = vmatprep.subr.mxu0 0.0
          %1501 = vmatpush1.msra.mxu0 0.0
          %1502 = vmatprep.subr.mxu0 0.0
          %1503 = vmatpush1.msra.mxu0 0.0
          %1504 = vmatprep.subr.mxu0 0.0
          %1505 = vmatpush1.msra.mxu0 0.0
          %1506 = vmatprep.subr.mxu0 0.0
          %1507 = vmatpush1.msra.mxu0 0.0
          %1508 = vmatprep.subr.mxu0 0.0
          %1509 = vmatpush1.msra.mxu0 0.0
          %1510 = vmatprep.subr.mxu0 0.0
          %1511 = vmatpush1.msra.mxu0 0.0
          %1512 = vmatprep.subr.mxu0 0.0
          %1513 = vmatpush1.msra.mxu0 0.0
          %1514 = vmatprep.subr.mxu0 0.0
          %1515 = vmatpush1.msra.mxu0 0.0
          %1516 = vmatprep.subr.mxu0 0.0
          %1517 = vmatpush1.msra.mxu0 0.0
          %1518 = vmatprep.subr.mxu0 0.0
          %1519 = vmatpush1.msra.mxu0 0.0
          %1520 = vmatprep.subr.mxu0 0.0
          %1521 = vmatpush1.msra.mxu0 0.0
          %1522 = vmatprep.subr.mxu0 0.0
          %1523 = vmatpush1.msra.mxu0 0.0
          %1524 = vmatprep.subr.mxu0 0.0
          %1525 = vmatpush1.msra.mxu0 0.0
          %1526 = vmatprep.subr.mxu0 0.0
          %1527 = vmatpush1.msra.mxu0 0.0
          %1528 = vmatprep.subr.mxu0 0.0
          %1529 = vmatpush1.msra.mxu0 0.0
          %1530 = vmatprep.subr.mxu0 0.0
          %1531 = vmatpush1.msra.mxu0 0.0
          %1532 = vmatprep.subr.mxu0 0.0
          %1533 = vmatpush1.msra.mxu0 0.0
          %1534 = vmatprep.mubr.f32.mxu0 0.0
          %1535 = vmatmul.mubr.f32.gmra.mrb[0].mxu0 %v1468
          %v1536 = vpop.f32.mrb[0].mxu0
          %v1537 = vadd.f32 %v1171, %v1536
          %v1538 = vpop.f32.mrb[0].mxu0
          %1539 = vdwg.mxu0
          %v1540 = vmax.f32 %v1537, 0.0
          %1541 = vmatprep.subr.mxu0 0.0
          %1542 = vmatpush1.msra.mxu0 %v1150
          %1543 = vmatprep.subr.mxu0 0.0
          %1544 = vmatpush1.msra.mxu0 %v1151
          %1545 = vmatprep.subr.mxu0 0.0
          %1546 = vmatpush1.msra.mxu0 %v1152
          %1547 = vmatprep.subr.mxu0 0.0
          %1548 = vmatpush1.msra.mxu0 %v1153
          %1549 = vmatprep.subr.mxu0 0.0
          %1550 = vmatpush1.msra.mxu0 %v1154
          %1551 = vmatprep.subr.mxu0 0.0
          %1552 = vmatpush1.msra.mxu0 %v1155
          %1553 = vmatprep.subr.mxu0 0.0
          %1554 = vmatpush1.msra.mxu0 %v1156
          %1555 = vmatprep.subr.mxu0 0.0
          %1556 = vmatpush1.msra.mxu0 %v1157
          %1557 = vmatprep.subr.mxu0 0.0
          %1558 = vmatpush1.msra.mxu0 %v1158
          %1559 = vmatprep.subr.mxu0 0.0
          %1560 = vmatpush1.msra.mxu0 %v1159
          %1561 = vmatprep.subr.mxu0 0.0
          %1562 = vmatpush1.msra.mxu0 %v1160
          %1563 = vmatprep.subr.mxu0 0.0
          %1564 = vmatpush1.msra.mxu0 %v1161
          %1565 = vmatprep.subr.mxu0 0.0
          %1566 = vmatpush1.msra.mxu0 %v1162
          %1567 = vmatprep.subr.mxu0 0.0
          %1568 = vmatpush1.msra.mxu0 %v1163
          %1569 = vmatprep.subr.mxu0 0.0
          %1570 = vmatpush1.msra.mxu0 %v1164
          %1571 = vmatprep.subr.mxu0 0.0
          %1572 = vmatpush1.msra.mxu0 %v1165
          %1573 = vmatprep.subr.mxu0 0.0
          %1574 = vmatpush1.msra.mxu0 0.0
          %1575 = vmatprep.subr.mxu0 0.0
          %1576 = vmatpush1.msra.mxu0 0.0
          %1577 = vmatprep.subr.mxu0 0.0
          %1578 = vmatpush1.msra.mxu0 0.0
          %1579 = vmatprep.subr.mxu0 0.0
          %1580 = vmatpush1.msra.mxu0 0.0
          %1581 = vmatprep.subr.mxu0 0.0
          %1582 = vmatpush1.msra.mxu0 0.0
          %1583 = vmatprep.subr.mxu0 0.0
          %1584 = vmatpush1.msra.mxu0 0.0
          %1585 = vmatprep.subr.mxu0 0.0
          %1586 = vmatpush1.msra.mxu0 0.0
          %1587 = vmatprep.subr.mxu0 0.0
          %1588 = vmatpush1.msra.mxu0 0.0
          %1589 = vmatprep.subr.mxu0 0.0
          %1590 = vmatpush1.msra.mxu0 0.0
          %1591 = vmatprep.subr.mxu0 0.0
          %1592 = vmatpush1.msra.mxu0 0.0
          %1593 = vmatprep.subr.mxu0 0.0
          %1594 = vmatpush1.msra.mxu0 0.0
          %1595 = vmatprep.subr.mxu0 0.0
          %1596 = vmatpush1.msra.mxu0 0.0
          %1597 = vmatprep.subr.mxu0 0.0
          %1598 = vmatpush1.msra.mxu0 0.0
          %1599 = vmatprep.subr.mxu0 0.0
          %1600 = vmatpush1.msra.mxu0 0.0
          %1601 = vmatprep.subr.mxu0 0.0
          %1602 = vmatpush1.msra.mxu0 0.0
          %1603 = vmatprep.subr.mxu0 0.0
          %1604 = vmatpush1.msra.mxu0 0.0
          %1605 = vmatprep.mubr.f32.mxu0 0.0
          %1606 = vmatmul.mubr.f32.gmra.mrb[0].mxu0 %v1540
          %v1607 = vpop.f32.mrb[0].mxu0
          %v1608 = vadd.f32 %v1251, %v1607
          %v1609 = vpop.f32.mrb[0].mxu0
          %1610 = vdwg.mxu0
          %v1611 = vrot.slane %v1320, 4
          %v1612 = vadd.f32 %v1320, %v1611
          %v1613 = vrot.slane %v1612, 2
          %v1614 = vadd.f32 %v1612, %v1613
          %v1615 = vrot.slane %v1614, 1
          %v1616 = vadd.f32 %v1614, %v1615
          %v1617 = vmul.f32 %v1616, %v1143
          %v1618 = vsub.f32 %v1320, %v1617
          %v1619 = vmul.f32 %v1618, %v1618
          %v1620 = vrot.slane %v1619, 4
          %v1621 = vadd.f32 %v1619, %v1620
          %v1622 = vrot.slane %v1621, 2
          %v1623 = vadd.f32 %v1621, %v1622
          %v1624 = vrot.slane %v1623, 1
          %v1625 = vadd.f32 %v1623, %v1624
          %v1626 = vrcp.pop 7.0
          %v1627 = vmul.f32 %v1625, %v1626
          %v1628 = vadd.f32 %v1627, 0.0001
          %v1629 = vrsqrt.pop %v1628
          %v1630 = vmul.f32 %v1628, %v1629
          %vm1631 = vcmp.eq.f32.partialorder %v1628, inf
          %v1632 = vsel %vm1631, %v1628, %v1630
          %vm1633 = vcmp.eq.f32.partialorder %v1628, 0.0
          %v1634 = vand.u32 %v1628, 2147483648
          %v1635 = vsel %vm1633, %v1634, %v1632
          %v1636 = vsub.f32 1.0, %v1635
          %v1637 = vmax.f32 %v1636, 0.0
          %vm1638 = vcmask 1040384
          %v1639 = vsel %vm1638, %v1637, 0.0
          %1640 = vadd.xlane.f32.xlu0 %v1639
          %v1641 = vpop.xlane.xlu0 %1640
          %v1642 = vrot.slane %v1641, 4
          %v1643 = vadd.f32 %v1641, %v1642
          %v1644 = vrot.slane %v1643, 2
          %v1645 = vadd.f32 %v1643, %v1644
          %v1646 = vrot.slane %v1645, 1
          %v1647 = vadd.f32 %v1645, %v1646
          %s1648 = vtos %v1647
          %v1649 = vstv %s1648
          %v1650 = vrcp.pop 128.0
          %v1651 = vmul.f32 %v1649, %v1650
          %1652 = vmatprep.subr.mxu0 0.0
          %1653 = vmatpush1.xpose.msra.mxu0 %v1618
          %1654 = vmatprep.subr.mxu0 0.0
          %1655 = vmatpush1.xpose.msra.mxu0 0.0
          %1656 = vmatprep.subr.mxu0 0.0
          %1657 = vmatpush1.xpose.msra.mxu0 0.0
          %1658 = vmatprep.subr.mxu0 0.0
          %1659 = vmatpush1.xpose.msra.mxu0 0.0
          %1660 = vmatprep.subr.mxu0 0.0
          %1661 = vmatpush1.xpose.msra.mxu0 0.0
          %1662 = vmatprep.subr.mxu0 0.0
          %1663 = vmatpush1.xpose.msra.mxu0 0.0
          %1664 = vmatprep.subr.mxu0 0.0
          %1665 = vmatpush1.xpose.msra.mxu0 0.0
          %1666 = vmatprep.subr.mxu0 0.0
          %1667 = vmatpush1.xpose.msra.mxu0 0.0
          %1668 = vmatprep.subr.mxu0 0.0
          %1669 = vmatpush1.xpose.msra.mxu0 0.0
          %1670 = vmatprep.subr.mxu0 0.0
          %1671 = vmatpush1.xpose.msra.mxu0 0.0
          %1672 = vmatprep.subr.mxu0 0.0
          %1673 = vmatpush1.xpose.msra.mxu0 0.0
          %1674 = vmatprep.subr.mxu0 0.0
          %1675 = vmatpush1.xpose.msra.mxu0 0.0
          %1676 = vmatprep.subr.mxu0 0.0
          %1677 = vmatpush1.xpose.msra.mxu0 0.0
          %1678 = vmatprep.subr.mxu0 0.0
          %1679 = vmatpush1.xpose.msra.mxu0 0.0
          %1680 = vmatprep.subr.mxu0 0.0
          %1681 = vmatpush1.xpose.msra.mxu0 0.0
          %1682 = vmatprep.subr.mxu0 0.0
          %1683 = vmatpush1.xpose.msra.mxu0 0.0
          %1684 = vmatprep.subr.mxu0 0.0
          %1685 = vmatpush1.xpose.msra.mxu0 0.0
          %1686 = vmatprep.subr.mxu0 0.0
          %1687 = vmatpush1.xpose.msra.mxu0 0.0
          %1688 = vmatprep.subr.mxu0 0.0
          %1689 = vmatpush1.xpose.msra.mxu0 0.0
          %1690 = vmatprep.subr.mxu0 0.0
          %1691 = vmatpush1.xpose.msra.mxu0 0.0
          %1692 = vmatprep.subr.mxu0 0.0
          %1693 = vmatpush1.xpose.msra.mxu0 0.0
          %1694 = vmatprep.subr.mxu0 0.0
          %1695 = vmatpush1.xpose.msra.mxu0 0.0
          %1696 = vmatprep.subr.mxu0 0.0
          %1697 = vmatpush1.xpose.msra.mxu0 0.0
          %1698 = vmatprep.subr.mxu0 0.0
          %1699 = vmatpush1.xpose.msra.mxu0 0.0
          %1700 = vmatprep.subr.mxu0 0.0
          %1701 = vmatpush1.xpose.msra.mxu0 0.0
          %1702 = vmatprep.subr.mxu0 0.0
          %1703 = vmatpush1.xpose.msra.mxu0 0.0
          %1704 = vmatprep.subr.mxu0 0.0
          %1705 = vmatpush1.xpose.msra.mxu0 0.0
          %1706 = vmatprep.subr.mxu0 0.0
          %1707 = vmatpush1.xpose.msra.mxu0 0.0
          %1708 = vmatprep.subr.mxu0 0.0
          %1709 = vmatpush1.xpose.msra.mxu0 0.0
          %1710 = vmatprep.subr.mxu0 0.0
          %1711 = vmatpush1.xpose.msra.mxu0 0.0
          %1712 = vmatprep.subr.mxu0 0.0
          %1713 = vmatpush1.xpose.msra.mxu0 0.0
          %1714 = vmatprep.subr.mxu0 0.0
          %1715 = vmatpush1.xpose.msra.mxu0 0.0
          %1716 = vmatprep.mubr.f32.mxu0 0.0
          %1717 = vmatmul.mubr.f32.gmra.mrb[0].mxu0 %v1618
          %v1718 = vpop.f32.mrb[0].mxu0
          %v1719 = vadd.f32 0.0, %v1718
          %v1720 = vpop.f32.mrb[0].mxu0
          %1721 = vdwg.mxu0
          %v1722 = vmul.f32 %v1719, %v1719
          %v1723 = vsel %vm1103, %v1722, 0.0
          %1724 = vadd.xlane.f32.xlu0 %v1723
          %v1725 = vpop.xlane.xlu0 %1724
          %v1726 = vrot.slane %v1725, 4
          %v1727 = vadd.f32 %v1725, %v1726
          %v1728 = vrot.slane %v1727, 2
          %v1729 = vadd.f32 %v1727, %v1728
          %v1730 = vrot.slane %v1729, 1
          %v1731 = vadd.f32 %v1729, %v1730
          %s1732 = vtos %v1731
          %v1733 = vstv %s1732
          %v1734 = vrcp.pop 49.0
          %v1735 = vmul.f32 %v1733, %v1734
          %v1736 = vmul.f32 %v1627, %v1627
          %v1737 = vsel %vm1638, %v1736, 0.0
          %1738 = vadd.xlane.f32.xlu0 %v1737
          %v1739 = vpop.xlane.xlu0 %1738
          %v1740 = vrot.slane %v1739, 4
          %v1741 = vadd.f32 %v1739, %v1740
          %v1742 = vrot.slane %v1741, 2
          %v1743 = vadd.f32 %v1741, %v1742
          %v1744 = vrot.slane %v1743, 1
          %v1745 = vadd.f32 %v1743, %v1744
          %s1746 = vtos %v1745
          %v1747 = vstv %s1746
          %v1748 = vsub.f32 %v1735, %v1747
          %v1749 = vmul.f32 %v1748, %v1650
          %v1750 = vrot.slane %v1464, 4
          %v1751 = vadd.f32 %v1464, %v1750
          %v1752 = vrot.slane %v1751, 2
          %v1753 = vadd.f32 %v1751, %v1752
          %v1754 = vrot.slane %v1753, 1
          %v1755 = vadd.f32 %v1753, %v1754
          %v1756 = vmul.f32 %v1755, %v1143
          %v1757 = vsub.f32 %v1464, %v1756
          %v1758 = vmul.f32 %v1757, %v1757
          %v1759 = vrot.slane %v1758, 4
          %v1760 = vadd.f32 %v1758, %v1759
          %v1761 = vrot.slane %v1760, 2
          %v1762 = vadd.f32 %v1760, %v1761
          %v1763 = vrot.slane %v1762, 1
          %v1764 = vadd.f32 %v1762, %v1763
          %v1765 = vmul.f32 %v1764, %v1626
          %v1766 = vadd.f32 %v1765, 0.0001
          %v1767 = vrsqrt.pop %v1766
          %v1768 = vmul.f32 %v1766, %v1767
          %vm1769 = vcmp.eq.f32.partialorder %v1766, inf
          %v1770 = vsel %vm1769, %v1766, %v1768
          %vm1771 = vcmp.eq.f32.partialorder %v1766, 0.0
          %v1772 = vand.u32 %v1766, 2147483648
          %v1773 = vsel %vm1771, %v1772, %v1770
          %v1774 = vsub.f32 1.0, %v1773
          %v1775 = vmax.f32 %v1774, 0.0
          %v1776 = vsel %vm1638, %v1775, 0.0
          %1777 = vadd.xlane.f32.xlu0 %v1776
          %v1778 = vpop.xlane.xlu0 %1777
          %v1779 = vrot.slane %v1778, 4
          %v1780 = vadd.f32 %v1778, %v1779
          %v1781 = vrot.slane %v1780, 2
          %v1782 = vadd.f32 %v1780, %v1781
          %v1783 = vrot.slane %v1782, 1
          %v1784 = vadd.f32 %v1782, %v1783
          %s1785 = vtos %v1784
          %v1786 = vstv %s1785
          %v1787 = vmul.f32 %v1786, %v1650
          %1788 = vmatprep.subr.mxu0 0.0
          %1789 = vmatpush1.xpose.msra.mxu0 %v1757
          %1790 = vmatprep.subr.mxu0 0.0
          %1791 = vmatpush1.xpose.msra.mxu0 0.0
          %1792 = vmatprep.subr.mxu0 0.0
          %1793 = vmatpush1.xpose.msra.mxu0 0.0
          %1794 = vmatprep.subr.mxu0 0.0
          %1795 = vmatpush1.xpose.msra.mxu0 0.0
          %1796 = vmatprep.subr.mxu0 0.0
          %1797 = vmatpush1.xpose.msra.mxu0 0.0
          %1798 = vmatprep.subr.mxu0 0.0
          %1799 = vmatpush1.xpose.msra.mxu0 0.0
          %1800 = vmatprep.subr.mxu0 0.0
          %1801 = vmatpush1.xpose.msra.mxu0 0.0
          %1802 = vmatprep.subr.mxu0 0.0
          %1803 = vmatpush1.xpose.msra.mxu0 0.0
          %1804 = vmatprep.subr.mxu0 0.0
          %1805 = vmatpush1.xpose.msra.mxu0 0.0
          %1806 = vmatprep.subr.mxu0 0.0
          %1807 = vmatpush1.xpose.msra.mxu0 0.0
          %1808 = vmatprep.subr.mxu0 0.0
          %1809 = vmatpush1.xpose.msra.mxu0 0.0
          %1810 = vmatprep.subr.mxu0 0.0
          %1811 = vmatpush1.xpose.msra.mxu0 0.0
          %1812 = vmatprep.subr.mxu0 0.0
          %1813 = vmatpush1.xpose.msra.mxu0 0.0
          %1814 = vmatprep.subr.mxu0 0.0
          %1815 = vmatpush1.xpose.msra.mxu0 0.0
          %1816 = vmatprep.subr.mxu0 0.0
          %1817 = vmatpush1.xpose.msra.mxu0 0.0
          %1818 = vmatprep.subr.mxu0 0.0
          %1819 = vmatpush1.xpose.msra.mxu0 0.0
          %1820 = vmatprep.subr.mxu0 0.0
          %1821 = vmatpush1.xpose.msra.mxu0 0.0
          %1822 = vmatprep.subr.mxu0 0.0
          %1823 = vmatpush1.xpose.msra.mxu0 0.0
          %1824 = vmatprep.subr.mxu0 0.0
          %1825 = vmatpush1.xpose.msra.mxu0 0.0
          %1826 = vmatprep.subr.mxu0 0.0
          %1827 = vmatpush1.xpose.msra.mxu0 0.0
          %1828 = vmatprep.subr.mxu0 0.0
          %1829 = vmatpush1.xpose.msra.mxu0 0.0
          %1830 = vmatprep.subr.mxu0 0.0
          %1831 = vmatpush1.xpose.msra.mxu0 0.0
          %1832 = vmatprep.subr.mxu0 0.0
          %1833 = vmatpush1.xpose.msra.mxu0 0.0
          %1834 = vmatprep.subr.mxu0 0.0
          %1835 = vmatpush1.xpose.msra.mxu0 0.0
          %1836 = vmatprep.subr.mxu0 0.0
          %1837 = vmatpush1.xpose.msra.mxu0 0.0
          %1838 = vmatprep.subr.mxu0 0.0
          %1839 = vmatpush1.xpose.msra.mxu0 0.0
          %1840 = vmatprep.subr.mxu0 0.0
          %1841 = vmatpush1.xpose.msra.mxu0 0.0
          %1842 = vmatprep.subr.mxu0 0.0
          %1843 = vmatpush1.xpose.msra.mxu0 0.0
          %1844 = vmatprep.subr.mxu0 0.0
          %1845 = vmatpush1.xpose.msra.mxu0 0.0
          %1846 = vmatprep.subr.mxu0 0.0
          %1847 = vmatpush1.xpose.msra.mxu0 0.0
          %1848 = vmatprep.subr.mxu0 0.0
          %1849 = vmatpush1.xpose.msra.mxu0 0.0
          %1850 = vmatprep.subr.mxu0 0.0
          %1851 = vmatpush1.xpose.msra.mxu0 0.0
          %1852 = vmatprep.mubr.f32.mxu0 0.0
          %1853 = vmatmul.mubr.f32.gmra.mrb[0].mxu0 %v1757
          %v1854 = vpop.f32.mrb[0].mxu0
          %v1855 = vadd.f32 0.0, %v1854
          %v1856 = vpop.f32.mrb[0].mxu0
          %1857 = vdwg.mxu0
          %v1858 = vmul.f32 %v1855, %v1855
          %v1859 = vsel %vm1103, %v1858, 0.0
          %1860 = vadd.xlane.f32.xlu0 %v1859
          %v1861 = vpop.xlane.xlu0 %1860
          %v1862 = vrot.slane %v1861, 4
          %v1863 = vadd.f32 %v1861, %v1862
          %v1864 = vrot.slane %v1863, 2
          %v1865 = vadd.f32 %v1863, %v1864
          %v1866 = vrot.slane %v1865, 1
          %v1867 = vadd.f32 %v1865, %v1866
          %s1868 = vtos %v1867
          %v1869 = vstv %s1868
          %v1870 = vmul.f32 %v1869, %v1734
          %v1871 = vmul.f32 %v1765, %v1765
          %v1872 = vsel %vm1638, %v1871, 0.0
          %1873 = vadd.xlane.f32.xlu0 %v1872
          %v1874 = vpop.xlane.xlu0 %1873
          %v1875 = vrot.slane %v1874, 4
          %v1876 = vadd.f32 %v1874, %v1875
          %v1877 = vrot.slane %v1876, 2
          %v1878 = vadd.f32 %v1876, %v1877
          %v1879 = vrot.slane %v1878, 1
          %v1880 = vadd.f32 %v1878, %v1879
          %s1881 = vtos %v1880
          %v1882 = vstv %s1881
          %v1883 = vsub.f32 %v1870, %v1882
          %v1884 = vmul.f32 %v1883, %v1650
          %v1885 = vrot.slane %v1608, 4
          %v1886 = vadd.f32 %v1608, %v1885
          %v1887 = vrot.slane %v1886, 2
          %v1888 = vadd.f32 %v1886, %v1887
          %v1889 = vrot.slane %v1888, 1
          %v1890 = vadd.f32 %v1888, %v1889
          %v1891 = vmul.f32 %v1890, %v1143
          %v1892 = vsub.f32 %v1608, %v1891
          %v1893 = vmul.f32 %v1892, %v1892
          %v1894 = vrot.slane %v1893, 4
          %v1895 = vadd.f32 %v1893, %v1894
          %v1896 = vrot.slane %v1895, 2
          %v1897 = vadd.f32 %v1895, %v1896
          %v1898 = vrot.slane %v1897, 1
          %v1899 = vadd.f32 %v1897, %v1898
          %v1900 = vmul.f32 %v1899, %v1626
          %v1901 = vadd.f32 %v1900, 0.0001
          %v1902 = vrsqrt.pop %v1901
          %v1903 = vmul.f32 %v1901, %v1902
          %vm1904 = vcmp.eq.f32.partialorder %v1901, inf
          %v1905 = vsel %vm1904, %v1901, %v1903
          %vm1906 = vcmp.eq.f32.partialorder %v1901, 0.0
          %v1907 = vand.u32 %v1901, 2147483648
          %v1908 = vsel %vm1906, %v1907, %v1905
          %v1909 = vsub.f32 1.0, %v1908
          %v1910 = vmax.f32 %v1909, 0.0
          %v1911 = vsel %vm1638, %v1910, 0.0
          %1912 = vadd.xlane.f32.xlu0 %v1911
          %v1913 = vpop.xlane.xlu0 %1912
          %v1914 = vrot.slane %v1913, 4
          %v1915 = vadd.f32 %v1913, %v1914
          %v1916 = vrot.slane %v1915, 2
          %v1917 = vadd.f32 %v1915, %v1916
          %v1918 = vrot.slane %v1917, 1
          %v1919 = vadd.f32 %v1917, %v1918
          %s1920 = vtos %v1919
          %v1921 = vstv %s1920
          %v1922 = vmul.f32 %v1921, %v1650
          %1923 = vmatprep.subr.mxu0 0.0
          %1924 = vmatpush1.xpose.msra.mxu0 %v1892
          %1925 = vmatprep.subr.mxu0 0.0
          %1926 = vmatpush1.xpose.msra.mxu0 0.0
          %1927 = vmatprep.subr.mxu0 0.0
          %1928 = vmatpush1.xpose.msra.mxu0 0.0
          %1929 = vmatprep.subr.mxu0 0.0
          %1930 = vmatpush1.xpose.msra.mxu0 0.0
          %1931 = vmatprep.subr.mxu0 0.0
          %1932 = vmatpush1.xpose.msra.mxu0 0.0
          %1933 = vmatprep.subr.mxu0 0.0
          %1934 = vmatpush1.xpose.msra.mxu0 0.0
          %1935 = vmatprep.subr.mxu0 0.0
          %1936 = vmatpush1.xpose.msra.mxu0 0.0
          %1937 = vmatprep.subr.mxu0 0.0
          %1938 = vmatpush1.xpose.msra.mxu0 0.0
          %1939 = vmatprep.subr.mxu0 0.0
          %1940 = vmatpush1.xpose.msra.mxu0 0.0
          %1941 = vmatprep.subr.mxu0 0.0
          %1942 = vmatpush1.xpose.msra.mxu0 0.0
          %1943 = vmatprep.subr.mxu0 0.0
          %1944 = vmatpush1.xpose.msra.mxu0 0.0
          %1945 = vmatprep.subr.mxu0 0.0
          %1946 = vmatpush1.xpose.msra.mxu0 0.0
          %1947 = vmatprep.subr.mxu0 0.0
          %1948 = vmatpush1.xpose.msra.mxu0 0.0
          %1949 = vmatprep.subr.mxu0 0.0
          %1950 = vmatpush1.xpose.msra.mxu0 0.0
          %1951 = vmatprep.subr.mxu0 0.0
          %1952 = vmatpush1.xpose.msra.mxu0 0.0
          %1953 = vmatprep.subr.mxu0 0.0
          %1954 = vmatpush1.xpose.msra.mxu0 0.0
          %1955 = vmatprep.subr.mxu0 0.0
          %1956 = vmatpush1.xpose.msra.mxu0 0.0
          %1957 = vmatprep.subr.mxu0 0.0
          %1958 = vmatpush1.xpose.msra.mxu0 0.0
          %1959 = vmatprep.subr.mxu0 0.0
          %1960 = vmatpush1.xpose.msra.mxu0 0.0
          %1961 = vmatprep.subr.mxu0 0.0
          %1962 = vmatpush1.xpose.msra.mxu0 0.0
          %1963 = vmatprep.subr.mxu0 0.0
          %1964 = vmatpush1.xpose.msra.mxu0 0.0
          %1965 = vmatprep.subr.mxu0 0.0
          %1966 = vmatpush1.xpose.msra.mxu0 0.0
          %1967 = vmatprep.subr.mxu0 0.0
          %1968 = vmatpush1.xpose.msra.mxu0 0.0
          %1969 = vmatprep.subr.mxu0 0.0
          %1970 = vmatpush1.xpose.msra.mxu0 0.0
          %1971 = vmatprep.subr.mxu0 0.0
          %1972 = vmatpush1.xpose.msra.mxu0 0.0
          %1973 = vmatprep.subr.mxu0 0.0
          %1974 = vmatpush1.xpose.msra.mxu0 0.0
          %1975 = vmatprep.subr.mxu0 0.0
          %1976 = vmatpush1.xpose.msra.mxu0 0.0
          %1977 = vmatprep.subr.mxu0 0.0
          %1978 = vmatpush1.xpose.msra.mxu0 0.0
          %1979 = vmatprep.subr.mxu0 0.0
          %1980 = vmatpush1.xpose.msra.mxu0 0.0
          %1981 = vmatprep.subr.mxu0 0.0
          %1982 = vmatpush1.xpose.msra.mxu0 0.0
          %1983 = vmatprep.subr.mxu0 0.0
          %1984 = vmatpush1.xpose.msra.mxu0 0.0
          %1985 = vmatprep.subr.mxu0 0.0
          %1986 = vmatpush1.xpose.msra.mxu0 0.0
          %1987 = vmatprep.mubr.f32.mxu0 0.0
          %1988 = vmatmul.mubr.f32.gmra.mrb[0].mxu0 %v1892
          %v1989 = vpop.f32.mrb[0].mxu0
          %v1990 = vadd.f32 0.0, %v1989
          %v1991 = vpop.f32.mrb[0].mxu0
          %1992 = vdwg.mxu0
          %v1993 = vmul.f32 %v1990, %v1990
          %v1994 = vsel %vm1103, %v1993, 0.0
          %1995 = vadd.xlane.f32.xlu0 %v1994
          %v1996 = vpop.xlane.xlu0 %1995
          %v1997 = vrot.slane %v1996, 4
          %v1998 = vadd.f32 %v1996, %v1997
          %v1999 = vrot.slane %v1998, 2
          %v2000 = vadd.f32 %v1998, %v1999
          %v2001 = vrot.slane %v2000, 1
          %v2002 = vadd.f32 %v2000, %v2001
          %s2003 = vtos %v2002
          %v2004 = vstv %s2003
          %v2005 = vmul.f32 %v2004, %v1734
          %v2006 = vmul.f32 %v1900, %v1900
          %v2007 = vsel %vm1638, %v2006, 0.0
          %2008 = vadd.xlane.f32.xlu0 %v2007
          %v2009 = vpop.xlane.xlu0 %2008
          %v2010 = vrot.slane %v2009, 4
          %v2011 = vadd.f32 %v2009, %v2010
          %v2012 = vrot.slane %v2011, 2
          %v2013 = vadd.f32 %v2011, %v2012
          %v2014 = vrot.slane %v2013, 1
          %v2015 = vadd.f32 %v2013, %v2014
          %s2016 = vtos %v2015
          %v2017 = vstv %s2016
          %v2018 = vsub.f32 %v2005, %v2017
          %v2019 = vmul.f32 %v2018, %v1650
          %v2020 = vadd.f32 %v1651, %v1787
          %v2021 = vadd.f32 %v2020, %v1922
          %v2022 = vrcp.pop 3.0
          %v2023 = vmul.f32 %v2021, %v2022
          %v2024 = vadd.f32 %v1749, %v1884
          %v2025 = vadd.f32 %v2024, %v2019
          %v2026 = vmul.f32 %v2025, %v2022
          %v2027 = vsub.f32 %v1320, %v1464
          %v2028 = vmul.f32 %v2027, %v2027
          %2029 = vadd.xlane.f32.xlu0 %v2028
          %v2030 = vpop.xlane.xlu0 %2029
          %v2031 = vrot.slane %v2030, 4
          %v2032 = vadd.f32 %v2030, %v2031
          %v2033 = vrot.slane %v2032, 2
          %v2034 = vadd.f32 %v2032, %v2033
          %v2035 = vrot.slane %v2034, 1
          %v2036 = vadd.f32 %v2034, %v2035
          %s2037 = vtos %v2036
          %v2038 = vstv %s2037
          %v2039 = vrcp.pop 1024.0
          %v2040 = vmul.f32 %v2038, %v2039
          %vm2041 = vcmp.eq.s32.totalorder %v728, 0
          %2043 = vset.pattern.permute.xlu0 0
          %2044 = vperm.xlu0 %2043, %v845
          %v2045 = vpop.permute.xlu0 %2044
          %v2047 = vlaneseq
          %v2048 = vshrl.u32 %v2047, 7
          %v2049 = vsub.s32 0, %v2048
          %v2050 = vrot.slane %v2045, %v2049
          %v2051 = vsel %vm2041, %v2050, 0.0
          %vm2052 = vcmp.eq.s32.totalorder %v728, 1
          %v2053 = vsel %vm2052, %v1144, %v2051
          %vm2054 = vcmp.eq.s32.totalorder %v728, 2
          %v2055 = vsel %vm2054, %v904, %v2053
          %vm2056 = vcmp.eq.s32.totalorder %v728, 3
          %v2057 = vsel %vm2056, %v2023, %v2055
          %vm2058 = vcmp.eq.s32.totalorder %v728, 4
          %v2059 = vsel %vm2058, %v2040, %v2057
          %vm2060 = vcmp.eq.s32.totalorder %v728, 5
          %v2061 = vsel %vm2060, %v2026, %v2059
          %2062 = vst [vmem:[%s17] sm:$0x1] %v2061
        $region120: #{_forward_impl.1} parent=87 // pred_fallthru
          _
        // Predicated region
        $region121: #{_forward_impl.1} parent=87 // pred_check
          %p2063 = pneg %p425
        $region122: #{_forward_impl.1} parent=87 // pred_check_branch
          %2065 = sbr.rel (%p2063) target = $region124
        $region123: #{_forward_impl.1} parent=87 // pred_region
          _
        $region124: #{_forward_impl.1} parent=87 // pred_fallthru
          _
        // Predicated region
        $region125: #{_forward_impl.1} parent=87 // pred_check
          %p2066 = pneg %p425
        $region126: #{_forward_impl.1} parent=87 // pred_check_branch
          %2068 = sbr.rel (%p2066) target = $region128
        $region127: #{_forward_impl.1} parent=87 // pred_region
          _
        $region128: #{_forward_impl.1} parent=87 // pred_fallthru
          _
      $region88: #{_forward_impl.1} parent=5 // pred_fallthru
        _
      %p2069 = scmp.le.s32.totalorder 2, %s25
      // Predicated region
      $region129: #{_forward_impl.1} parent=5 // pred_check
        %p2070 = pneg %p2069
      $region130: #{_forward_impl.1} parent=5 // pred_check_branch
        %2072 = sbr.rel (%p2070) target = $region132
      $region131: #{_forward_impl.1} parent=5 // pred_region
        %s2073 = ssub.s32 %s25, 2
      $region132: #{_forward_impl.1} parent=5 // pred_fallthru
        _
    $region6: #{_forward_impl.1} parent=1 // loop_footer
      %s29 = sadd.s32 1, %s25
    $region7: #{_forward_impl.1} parent=1 // loop_footer_branch
      %24 = sbr.rel target = $region3
    $region8: #{_forward_impl.1} parent=1 // loop_exit
      _
    %2074 = vsyncpa [#allocation7], 1
    %s2075 = scalar_lea.sflag [#allocation7], 1
    %2076 = vsyncpa %s2075, 1
    %2077 = vsyncpa [#allocation9], 1

</llo_original>
